<compile_context>
chip_gen: v5e
topology: v5e:2x2
jax: 0.10.0
libtpu: 0.0.40
codegen_flags: <defaults>
</compile_context>

<pallas_src>
import functools

import jax
import jax.numpy as jnp
from jax.experimental import pallas as pl
from jax.experimental.pallas import tpu as pltpu


# ----------------------------------------------------------------------------
# Fused encoder kernel: 4 convs (+ReLU) + flatten + Linear for one image.
# ----------------------------------------------------------------------------
def _encoder_kernel(patches_ref, w1_ref, b1_ref, w2_ref, b2_ref, w3_ref, b3_ref,
                    w4_ref, b4_ref, lw_ref, lb_ref, out_ref,
                    a1_ref, a2_ref, a3_ref, a4_ref, *, W0):
    # ----- layer 1: im2col matmul, K = 27 (patches prebuilt in the wrapper) --
    acc1 = jnp.dot(patches_ref[0], w1_ref[...],
                   preferred_element_type=jnp.float32)          # (R1, 32) f32
    a1_ref[...] = jnp.maximum(acc1 + b1_ref[...], 0.0)

    # ----- layers 2..4: nine whole-canvas MXU matmuls each --------------------
    def conv3x3_relu(src_ref, w_ref, b_ref, dst_ref):
        rows, cout = dst_ref.shape
        acc = jnp.zeros((rows, cout), jnp.float32)
        for kh in range(3):
            for kw in range(3):
                # tap (kh, kw) == row offset kh*W0 + kw on the flat canvas
                sl = src_ref[pl.ds(kh * W0 + kw, rows), :].astype(jnp.bfloat16)
                acc = acc + jnp.dot(sl, w_ref[kh, kw],
                                    preferred_element_type=jnp.float32)
        dst_ref[...] = jnp.maximum(acc + b_ref[...], 0.0)

    conv3x3_relu(a1_ref, w2_ref, b2_ref, a2_ref)
    conv3x3_relu(a2_ref, w3_ref, b3_ref, a3_ref)
    conv3x3_relu(a3_ref, w4_ref, b4_ref, a4_ref)

    # ----- Linear: Frobenius inner product with per-output weight canvases ----
    # lw_ref[o] is the Linear weight for output o, laid out on the same flat
    # canvas as the code activation, with zeros at garbage canvas positions.
    code = a4_ref[...]                                          # (R4, 64) f32
    for o in range(3):
        w_o = lw_ref[o].astype(jnp.float32)                     # (R4, 64)
        s = jnp.sum(code * w_o, axis=1, keepdims=True)          # (R4, 1)
        s = jnp.sum(s, axis=0, keepdims=True)                   # (1, 1)
        out_ref[0, 0:1, o:o + 1] = s + lb_ref[0:1, o:o + 1]


def _round8(n):
    return ((n + 7) // 8) * 8


# ----------------------------------------------------------------------------
# Full Encoder forward (wrapper: one-time layout glue + single pallas_call).
# ----------------------------------------------------------------------------
def encoder_forward(params, x_nchw):
    B, Cin, H0, W0 = x_nchw.shape
    assert Cin == 3
    H4, W4 = H0 - 8, W0 - 8

    # Canvas row counts per layer.  Layer l+1 reads rows [i, i + 2*W0 + 2] of
    # layer l, so each input canvas extends 2*W0 + 2 rows past its consumer's.
    R4 = _round8(H4 * W0)
    R3 = _round8(R4 + 2 * W0 + 2)
    R2 = _round8(R3 + 2 * W0 + 2)
    R1 = _round8(R2 + 2 * W0 + 2)
    XROWS = _round8(R1 + 2 * W0 + 2)

    # --- glue on the tiny 3-channel input: NCHW -> flat NHWC canvas + im2col --
    x = jnp.transpose(x_nchw, (0, 2, 3, 1)).astype(jnp.float32)    # (B, H0, W0, 3)
    x_flat = x.reshape(B, H0 * W0, 3)
    x_flat = jnp.pad(x_flat, ((0, 0), (0, XROWS - H0 * W0), (0, 0)))
    patches = jnp.concatenate(
        [x_flat[:, kh * W0 + kw: kh * W0 + kw + R1, :]
         for kh in range(3) for kw in range(3)],
        axis=-1,
    ).astype(jnp.bfloat16)                                         # (B, R1, 27)

    # --- one-time weight re-layouts (preserve PyTorch semantics exactly) -----
    # conv weights are stored (kh, kw, cin, cout); layer-1 weight flattened to
    # (27, 32) with rows ordered (kh, kw, cin) -- matches the patch channels.
    w1 = params["c1_1_w"].reshape(27, 32).astype(jnp.bfloat16)
    w2 = params["c1_2_w"].astype(jnp.bfloat16)
    w3 = params["c2_1_w"].astype(jnp.bfloat16)
    w4 = params["c2_2_w"].astype(jnp.bfloat16)
    b1 = params["c1_1_b"].reshape(1, -1)
    b2 = params["c1_2_b"].reshape(1, -1)
    b3 = params["c2_1_b"].reshape(1, -1)
    b4 = params["c2_2_b"].reshape(1, -1)

    # Linear weight (3, C, H4, W4)  ==  PyTorch's (3, C*H4*W4) in NCHW flatten
    # order.  Re-lay it out ONCE onto the flat canvas (3, R4, C), zero at the
    # canvas positions that hold garbage columns/rows.  This removes the big
    # NHWC->NCHW activation transpose before the Linear.
    lw = jnp.transpose(params["lin_w"], (0, 2, 3, 1))              # (3, H4, W4, C)
    lw = jnp.pad(lw, ((0, 0), (0, 0), (0, W0 - W4), (0, 0)))       # pad W4 -> W0
    lw = lw.reshape(3, H4 * W0, 64)
    lw = jnp.pad(lw, ((0, 0), (0, R4 - H4 * W0), (0, 0)))
    lw = lw.astype(jnp.bfloat16)                                   # (3, R4, 64)
    lb = params["lin_b"].reshape(1, 3)

    kernel = functools.partial(_encoder_kernel, W0=W0)

    out = pl.pallas_call(
        kernel,
        out_shape=jax.ShapeDtypeStruct((B, 1, 3), jnp.float32),
        grid=(B,),
        in_specs=[
            pl.BlockSpec((1, R1, 27), lambda i: (i, 0, 0)),        # im2col patches
            pl.BlockSpec((27, 32), lambda i: (0, 0)),              # w1
            pl.BlockSpec((1, 32), lambda i: (0, 0)),               # b1
            pl.BlockSpec((3, 3, 32, 32), lambda i: (0, 0, 0, 0)),  # w2
            pl.BlockSpec((1, 32), lambda i: (0, 0)),               # b2
            pl.BlockSpec((3, 3, 32, 64), lambda i: (0, 0, 0, 0)),  # w3
            pl.BlockSpec((1, 64), lambda i: (0, 0)),               # b3
            pl.BlockSpec((3, 3, 64, 64), lambda i: (0, 0, 0, 0)),  # w4
            pl.BlockSpec((1, 64), lambda i: (0, 0)),               # b4
            pl.BlockSpec((3, R4, 64), lambda i: (0, 0, 0)),        # linear weight canvas
            pl.BlockSpec((1, 3), lambda i: (0, 0)),                # linear bias
        ],
        out_specs=pl.BlockSpec((1, 1, 3), lambda i: (i, 0, 0)),
        scratch_shapes=[                                           # VMEM-resident activations
            pltpu.VMEM((R1, 32), jnp.float32),
            pltpu.VMEM((R2, 32), jnp.float32),
            pltpu.VMEM((R3, 64), jnp.float32),
            pltpu.VMEM((R4, 64), jnp.float32),
        ],
        compiler_params=pltpu.CompilerParams(
            dimension_semantics=("parallel",),
        ),
    )(patches, w1, b1, w2, b2, w3, b3, w4, b4, lw, lb)

    return out.reshape(B, 3)


# ----------------------------------------------------------------------------
# Parameter init (deterministic, PyTorch-style uniform bounds).
# ----------------------------------------------------------------------------
def init_params(key, H0, W0):
    H4, W4 = H0 - 8, W0 - 8
    ks = jax.random.split(key, 10)

    def conv_wb(kw_, kb_, cin, cout):
        bound = 1.0 / jnp.sqrt(cin * 9.0)
        w = jax.random.uniform(kw_, (3, 3, cin, cout), jnp.float32, -bound, bound)
        b = jax.random.uniform(kb_, (cout,), jnp.float32, -bound, bound)
        return w, b

    p = {}
    p["c1_1_w"], p["c1_1_b"] = conv_wb(ks[0], ks[1], 3, 32)
    p["c1_2_w"], p["c1_2_b"] = conv_wb(ks[2], ks[3], 32, 32)
    p["c2_1_w"], p["c2_1_b"] = conv_wb(ks[4], ks[5], 32, 64)
    p["c2_2_w"], p["c2_2_b"] = conv_wb(ks[6], ks[7], 64, 64)

    flat_features = 64 * H4 * W4
    bound = 1.0 / jnp.sqrt(float(flat_features))
    # Stored as (3, C, H4, W4): same memory layout as PyTorch's linear1.weight
    # (3, C*H4*W4) under the NCHW flatten order used by `code.view(B, -1)`.
    p["lin_w"] = jax.random.uniform(ks[8], (3, 64, H4, W4), jnp.float32, -bound, bound)
    p["lin_b"] = jax.random.uniform(ks[9], (3,), jnp.float32, -bound, bound)
    return p


if __name__ == "__main__":
    key = jax.random.PRNGKey(0)
    kx, kp = jax.random.split(key)

    B, Cin, H, W = 2, 3, 16, 16          # small shapes (original module uses 500x500)
    x = jax.random.normal(kx, (B, Cin, H, W), dtype=jnp.float32)   # NCHW input
    params = init_params(kp, H, W)

    fwd = jax.jit(encoder_forward)
    out = jax.block_until_ready(fwd(params, x))

    assert out.shape == (B, 3), out.shape
    assert out.dtype == jnp.float32
    print("KERNEL_OK")
</pallas_src>

<mosaic_0001>
module attributes {stable_mosaic.version = 11 : i64} {
  func.func @_encoder_kernel(%arg0: i32, %arg1: memref<1x248x27xbf16, #tpu.memory_space<vmem>>, %arg2: memref<27x32xbf16, #tpu.memory_space<vmem>>, %arg3: memref<1x32xf32, #tpu.memory_space<vmem>>, %arg4: memref<3x3x32x32xbf16, #tpu.memory_space<vmem>>, %arg5: memref<1x32xf32, #tpu.memory_space<vmem>>, %arg6: memref<3x3x32x64xbf16, #tpu.memory_space<vmem>>, %arg7: memref<1x64xf32, #tpu.memory_space<vmem>>, %arg8: memref<3x3x64x64xbf16, #tpu.memory_space<vmem>>, %arg9: memref<1x64xf32, #tpu.memory_space<vmem>>, %arg10: memref<3x128x64xbf16, #tpu.memory_space<vmem>>, %arg11: memref<1x3xf32, #tpu.memory_space<vmem>>, %arg12: memref<1x1x3xf32, #tpu.memory_space<vmem>>, %arg13: memref<248x32xf32, #tpu.memory_space<vmem>>, %arg14: memref<208x32xf32, #tpu.memory_space<vmem>>, %arg15: memref<168x64xf32, #tpu.memory_space<vmem>>, %arg16: memref<128x64xf32, #tpu.memory_space<vmem>>) attributes {dimension_semantics = [#tpu.dimension_semantics<parallel>], iteration_bounds = array<i64: 2>, scalar_prefetch = 0 : i64, scratch_operands = 4 : i64, tpu.core_type = #tpu.core_type<tc>, window_params = [{transform_indices = @transform_0, window_bounds = array<i64: 1, 248, 27>}, {pipeline_mode = #tpu.pipeline_mode<synchronous>, transform_indices = @transform_1, window_bounds = array<i64: 27, 32>}, {pipeline_mode = #tpu.pipeline_mode<synchronous>, transform_indices = @transform_2, window_bounds = array<i64: 1, 32>}, {pipeline_mode = #tpu.pipeline_mode<synchronous>, transform_indices = @transform_3, window_bounds = array<i64: 3, 3, 32, 32>}, {pipeline_mode = #tpu.pipeline_mode<synchronous>, transform_indices = @transform_4, window_bounds = array<i64: 1, 32>}, {pipeline_mode = #tpu.pipeline_mode<synchronous>, transform_indices = @transform_5, window_bounds = array<i64: 3, 3, 32, 64>}, {pipeline_mode = #tpu.pipeline_mode<synchronous>, transform_indices = @transform_6, window_bounds = array<i64: 1, 64>}, {pipeline_mode = #tpu.pipeline_mode<synchronous>, transform_indices = @transform_7, window_bounds = array<i64: 3, 3, 64, 64>}, {pipeline_mode = #tpu.pipeline_mode<synchronous>, transform_indices = @transform_8, window_bounds = array<i64: 1, 64>}, {pipeline_mode = #tpu.pipeline_mode<synchronous>, transform_indices = @transform_9, window_bounds = array<i64: 3, 128, 64>}, {pipeline_mode = #tpu.pipeline_mode<synchronous>, transform_indices = @transform_10, window_bounds = array<i64: 1, 3>}, {transform_indices = @transform_11, window_bounds = array<i64: 1, 1, 3>}]} {
    %c0 = arith.constant 0 : index
    %c0_0 = arith.constant 0 : index
    %c0_1 = arith.constant 0 : index
    %0 = vector.load %arg1[%c0, %c0_0, %c0_1] : memref<1x248x27xbf16, #tpu.memory_space<vmem>>, vector<1x248x27xbf16>
    %1 = vector.shape_cast %0 : vector<1x248x27xbf16> to vector<248x27xbf16>
    %c0_2 = arith.constant 0 : index
    %c0_3 = arith.constant 0 : index
    %2 = vector.load %arg2[%c0_2, %c0_3] : memref<27x32xbf16, #tpu.memory_space<vmem>>, vector<27x32xbf16>
    %cst = arith.constant dense<0.000000e+00> : vector<248x32xf32>
    %3 = tpu.matmul %1, %2, %cst {dimension_numbers = #tpu.dot_dimension_numbers<[1], [0], [0], [1], [0, 0, 1, 1], [], []>} : vector<248x27xbf16>, vector<27x32xbf16>, vector<248x32xf32> -> vector<248x32xf32>
    %c0_4 = arith.constant 0 : index
    %c0_5 = arith.constant 0 : index
    %4 = vector.load %arg3[%c0_4, %c0_5] : memref<1x32xf32, #tpu.memory_space<vmem>>, vector<1x32xf32>
    %5 = vector.broadcast %4 : vector<1x32xf32> to vector<248x32xf32>
    %6 = arith.addf %3, %5 : vector<248x32xf32>
    %cst_6 = arith.constant 0.000000e+00 : f32
    %7 = vector.broadcast %cst_6 : f32 to vector<248x32xf32>
    %8 = arith.maximumf %6, %7 : vector<248x32xf32>
    %c0_7 = arith.constant 0 : index
    %c0_8 = arith.constant 0 : index
    %9 = vector.load %arg13[%c0_7, %c0_8] : memref<248x32xf32, #tpu.memory_space<vmem>>, vector<248x32xf32>
    tpu.vector_store %arg13[%c0_7, %c0_8], %8 {strides = array<i32>} : memref<248x32xf32, #tpu.memory_space<vmem>>, vector<248x32xf32>,
    %cst_9 = arith.constant 0.000000e+00 : f32
    %10 = vector.broadcast %cst_9 : f32 to vector<208x32xf32>
    %c0_10 = arith.constant 0 : index
    %c0_11 = arith.constant 0 : index
    %11 = vector.load %arg13[%c0_10, %c0_11] : memref<248x32xf32, #tpu.memory_space<vmem>>, vector<208x32xf32>
    %12 = arith.truncf %11 : vector<208x32xf32> to vector<208x32xbf16>
    %c0_12 = arith.constant 0 : index
    %c0_13 = arith.constant 0 : index
    %c0_14 = arith.constant 0 : index
    %c0_15 = arith.constant 0 : index
    %13 = vector.load %arg4[%c0_12, %c0_13, %c0_14, %c0_15] : memref<3x3x32x32xbf16, #tpu.memory_space<vmem>>, vector<1x1x32x32xbf16>
    %14 = vector.shape_cast %13 : vector<1x1x32x32xbf16> to vector<32x32xbf16>
    %cst_16 = arith.constant dense<0.000000e+00> : vector<208x32xf32>
    %15 = tpu.matmul %12, %14, %cst_16 {dimension_numbers = #tpu.dot_dimension_numbers<[1], [0], [0], [1], [0, 0, 1, 1], [], []>} : vector<208x32xbf16>, vector<32x32xbf16>, vector<208x32xf32> -> vector<208x32xf32>
    %16 = arith.addf %10, %15 : vector<208x32xf32>
    %c1 = arith.constant 1 : index
    %c0_17 = arith.constant 0 : index
    %17 = vector.load %arg13[%c1, %c0_17] : memref<248x32xf32, #tpu.memory_space<vmem>>, vector<208x32xf32>
    %18 = arith.truncf %17 : vector<208x32xf32> to vector<208x32xbf16>
    %c0_18 = arith.constant 0 : index
    %c1_19 = arith.constant 1 : index
    %c0_20 = arith.constant 0 : index
    %c0_21 = arith.constant 0 : index
    %19 = vector.load %arg4[%c0_18, %c1_19, %c0_20, %c0_21] : memref<3x3x32x32xbf16, #tpu.memory_space<vmem>>, vector<1x1x32x32xbf16>
    %20 = vector.shape_cast %19 : vector<1x1x32x32xbf16> to vector<32x32xbf16>
    %cst_22 = arith.constant dense<0.000000e+00> : vector<208x32xf32>
    %21 = tpu.matmul %18, %20, %cst_22 {dimension_numbers = #tpu.dot_dimension_numbers<[1], [0], [0], [1], [0, 0, 1, 1], [], []>} : vector<208x32xbf16>, vector<32x32xbf16>, vector<208x32xf32> -> vector<208x32xf32>
    %22 = arith.addf %16, %21 : vector<208x32xf32>
    %c2 = arith.constant 2 : index
    %c0_23 = arith.constant 0 : index
    %23 = vector.load %arg13[%c2, %c0_23] : memref<248x32xf32, #tpu.memory_space<vmem>>, vector<208x32xf32>
    %24 = arith.truncf %23 : vector<208x32xf32> to vector<208x32xbf16>
    %c0_24 = arith.constant 0 : index
    %c2_25 = arith.constant 2 : index
    %c0_26 = arith.constant 0 : index
    %c0_27 = arith.constant 0 : index
    %25 = vector.load %arg4[%c0_24, %c2_25, %c0_26, %c0_27] : memref<3x3x32x32xbf16, #tpu.memory_space<vmem>>, vector<1x1x32x32xbf16>
    %26 = vector.shape_cast %25 : vector<1x1x32x32xbf16> to vector<32x32xbf16>
    %cst_28 = arith.constant dense<0.000000e+00> : vector<208x32xf32>
    %27 = tpu.matmul %24, %26, %cst_28 {dimension_numbers = #tpu.dot_dimension_numbers<[1], [0], [0], [1], [0, 0, 1, 1], [], []>} : vector<208x32xbf16>, vector<32x32xbf16>, vector<208x32xf32> -> vector<208x32xf32>
    %28 = arith.addf %22, %27 : vector<208x32xf32>
    %c16 = arith.constant 16 : index
    %c0_29 = arith.constant 0 : index
    %29 = vector.load %arg13[%c16, %c0_29] : memref<248x32xf32, #tpu.memory_space<vmem>>, vector<208x32xf32>
    %30 = arith.truncf %29 : vector<208x32xf32> to vector<208x32xbf16>
    %c1_30 = arith.constant 1 : index
    %c0_31 = arith.constant 0 : index
    %c0_32 = arith.constant 0 : index
    %c0_33 = arith.constant 0 : index
    %31 = vector.load %arg4[%c1_30, %c0_31, %c0_32, %c0_33] : memref<3x3x32x32xbf16, #tpu.memory_space<vmem>>, vector<1x1x32x32xbf16>
    %32 = vector.shape_cast %31 : vector<1x1x32x32xbf16> to vector<32x32xbf16>
    %cst_34 = arith.constant dense<0.000000e+00> : vector<208x32xf32>
    %33 = tpu.matmul %30, %32, %cst_34 {dimension_numbers = #tpu.dot_dimension_numbers<[1], [0], [0], [1], [0, 0, 1, 1], [], []>} : vector<208x32xbf16>, vector<32x32xbf16>, vector<208x32xf32> -> vector<208x32xf32>
    %34 = arith.addf %28, %33 : vector<208x32xf32>
    %c17 = arith.constant 17 : index
    %c0_35 = arith.constant 0 : index
    %35 = vector.load %arg13[%c17, %c0_35] : memref<248x32xf32, #tpu.memory_space<vmem>>, vector<208x32xf32>
    %36 = arith.truncf %35 : vector<208x32xf32> to vector<208x32xbf16>
    %c1_36 = arith.constant 1 : index
    %c1_37 = arith.constant 1 : index
    %c0_38 = arith.constant 0 : index
    %c0_39 = arith.constant 0 : index
    %37 = vector.load %arg4[%c1_36, %c1_37, %c0_38, %c0_39] : memref<3x3x32x32xbf16, #tpu.memory_space<vmem>>, vector<1x1x32x32xbf16>
    %38 = vector.shape_cast %37 : vector<1x1x32x32xbf16> to vector<32x32xbf16>
    %cst_40 = arith.constant dense<0.000000e+00> : vector<208x32xf32>
    %39 = tpu.matmul %36, %38, %cst_40 {dimension_numbers = #tpu.dot_dimension_numbers<[1], [0], [0], [1], [0, 0, 1, 1], [], []>} : vector<208x32xbf16>, vector<32x32xbf16>, vector<208x32xf32> -> vector<208x32xf32>
    %40 = arith.addf %34, %39 : vector<208x32xf32>
    %c18 = arith.constant 18 : index
    %c0_41 = arith.constant 0 : index
    %41 = vector.load %arg13[%c18, %c0_41] : memref<248x32xf32, #tpu.memory_space<vmem>>, vector<208x32xf32>
    %42 = arith.truncf %41 : vector<208x32xf32> to vector<208x32xbf16>
    %c1_42 = arith.constant 1 : index
    %c2_43 = arith.constant 2 : index
    %c0_44 = arith.constant 0 : index
    %c0_45 = arith.constant 0 : index
    %43 = vector.load %arg4[%c1_42, %c2_43, %c0_44, %c0_45] : memref<3x3x32x32xbf16, #tpu.memory_space<vmem>>, vector<1x1x32x32xbf16>
    %44 = vector.shape_cast %43 : vector<1x1x32x32xbf16> to vector<32x32xbf16>
    %cst_46 = arith.constant dense<0.000000e+00> : vector<208x32xf32>
    %45 = tpu.matmul %42, %44, %cst_46 {dimension_numbers = #tpu.dot_dimension_numbers<[1], [0], [0], [1], [0, 0, 1, 1], [], []>} : vector<208x32xbf16>, vector<32x32xbf16>, vector<208x32xf32> -> vector<208x32xf32>
    %46 = arith.addf %40, %45 : vector<208x32xf32>
    %c32 = arith.constant 32 : index
    %c0_47 = arith.constant 0 : index
    %47 = vector.load %arg13[%c32, %c0_47] : memref<248x32xf32, #tpu.memory_space<vmem>>, vector<208x32xf32>
    %48 = arith.truncf %47 : vector<208x32xf32> to vector<208x32xbf16>
    %c2_48 = arith.constant 2 : index
    %c0_49 = arith.constant 0 : index
    %c0_50 = arith.constant 0 : index
    %c0_51 = arith.constant 0 : index
    %49 = vector.load %arg4[%c2_48, %c0_49, %c0_50, %c0_51] : memref<3x3x32x32xbf16, #tpu.memory_space<vmem>>, vector<1x1x32x32xbf16>
    %50 = vector.shape_cast %49 : vector<1x1x32x32xbf16> to vector<32x32xbf16>
    %cst_52 = arith.constant dense<0.000000e+00> : vector<208x32xf32>
    %51 = tpu.matmul %48, %50, %cst_52 {dimension_numbers = #tpu.dot_dimension_numbers<[1], [0], [0], [1], [0, 0, 1, 1], [], []>} : vector<208x32xbf16>, vector<32x32xbf16>, vector<208x32xf32> -> vector<208x32xf32>
    %52 = arith.addf %46, %51 : vector<208x32xf32>
    %c33 = arith.constant 33 : index
    %c0_53 = arith.constant 0 : index
    %53 = vector.load %arg13[%c33, %c0_53] : memref<248x32xf32, #tpu.memory_space<vmem>>, vector<208x32xf32>
    %54 = arith.truncf %53 : vector<208x32xf32> to vector<208x32xbf16>
    %c2_54 = arith.constant 2 : index
    %c1_55 = arith.constant 1 : index
    %c0_56 = arith.constant 0 : index
    %c0_57 = arith.constant 0 : index
    %55 = vector.load %arg4[%c2_54, %c1_55, %c0_56, %c0_57] : memref<3x3x32x32xbf16, #tpu.memory_space<vmem>>, vector<1x1x32x32xbf16>
    %56 = vector.shape_cast %55 : vector<1x1x32x32xbf16> to vector<32x32xbf16>
    %cst_58 = arith.constant dense<0.000000e+00> : vector<208x32xf32>
    %57 = tpu.matmul %54, %56, %cst_58 {dimension_numbers = #tpu.dot_dimension_numbers<[1], [0], [0], [1], [0, 0, 1, 1], [], []>} : vector<208x32xbf16>, vector<32x32xbf16>, vector<208x32xf32> -> vector<208x32xf32>
    %58 = arith.addf %52, %57 : vector<208x32xf32>
    %c34 = arith.constant 34 : index
    %c0_59 = arith.constant 0 : index
    %59 = vector.load %arg13[%c34, %c0_59] : memref<248x32xf32, #tpu.memory_space<vmem>>, vector<208x32xf32>
    %60 = arith.truncf %59 : vector<208x32xf32> to vector<208x32xbf16>
    %c2_60 = arith.constant 2 : index
    %c2_61 = arith.constant 2 : index
    %c0_62 = arith.constant 0 : index
    %c0_63 = arith.constant 0 : index
    %61 = vector.load %arg4[%c2_60, %c2_61, %c0_62, %c0_63] : memref<3x3x32x32xbf16, #tpu.memory_space<vmem>>, vector<1x1x32x32xbf16>
    %62 = vector.shape_cast %61 : vector<1x1x32x32xbf16> to vector<32x32xbf16>
    %cst_64 = arith.constant dense<0.000000e+00> : vector<208x32xf32>
    %63 = tpu.matmul %60, %62, %cst_64 {dimension_numbers = #tpu.dot_dimension_numbers<[1], [0], [0], [1], [0, 0, 1, 1], [], []>} : vector<208x32xbf16>, vector<32x32xbf16>, vector<208x32xf32> -> vector<208x32xf32>
    %64 = arith.addf %58, %63 : vector<208x32xf32>
    %c0_65 = arith.constant 0 : index
    %c0_66 = arith.constant 0 : index
    %65 = vector.load %arg5[%c0_65, %c0_66] : memref<1x32xf32, #tpu.memory_space<vmem>>, vector<1x32xf32>
    %66 = vector.broadcast %65 : vector<1x32xf32> to vector<208x32xf32>
    %67 = arith.addf %64, %66 : vector<208x32xf32>
    %cst_67 = arith.constant 0.000000e+00 : f32
    %68 = vector.broadcast %cst_67 : f32 to vector<208x32xf32>
    %69 = arith.maximumf %67, %68 : vector<208x32xf32>
    %c0_68 = arith.constant 0 : index
    %c0_69 = arith.constant 0 : index
    %70 = vector.load %arg14[%c0_68, %c0_69] : memref<208x32xf32, #tpu.memory_space<vmem>>, vector<208x32xf32>
    tpu.vector_store %arg14[%c0_68, %c0_69], %69 {strides = array<i32>} : memref<208x32xf32, #tpu.memory_space<vmem>>, vector<208x32xf32>,
    %cst_70 = arith.constant 0.000000e+00 : f32
    %71 = vector.broadcast %cst_70 : f32 to vector<168x64xf32>
    %c0_71 = arith.constant 0 : index
    %c0_72 = arith.constant 0 : index
    %72 = vector.load %arg14[%c0_71, %c0_72] : memref<208x32xf32, #tpu.memory_space<vmem>>, vector<168x32xf32>
    %73 = arith.truncf %72 : vector<168x32xf32> to vector<168x32xbf16>
    %c0_73 = arith.constant 0 : index
    %c0_74 = arith.constant 0 : index
    %c0_75 = arith.constant 0 : index
    %c0_76 = arith.constant 0 : index
    %74 = vector.load %arg6[%c0_73, %c0_74, %c0_75, %c0_76] : memref<3x3x32x64xbf16, #tpu.memory_space<vmem>>, vector<1x1x32x64xbf16>
    %75 = vector.shape_cast %74 : vector<1x1x32x64xbf16> to vector<32x64xbf16>
    %cst_77 = arith.constant dense<0.000000e+00> : vector<168x64xf32>
    %76 = tpu.matmul %73, %75, %cst_77 {dimension_numbers = #tpu.dot_dimension_numbers<[1], [0], [0], [1], [0, 0, 1, 1], [], []>} : vector<168x32xbf16>, vector<32x64xbf16>, vector<168x64xf32> -> vector<168x64xf32>
    %77 = arith.addf %71, %76 : vector<168x64xf32>
    %c1_78 = arith.constant 1 : index
    %c0_79 = arith.constant 0 : index
    %78 = vector.load %arg14[%c1_78, %c0_79] : memref<208x32xf32, #tpu.memory_space<vmem>>, vector<168x32xf32>
    %79 = arith.truncf %78 : vector<168x32xf32> to vector<168x32xbf16>
    %c0_80 = arith.constant 0 : index
    %c1_81 = arith.constant 1 : index
    %c0_82 = arith.constant 0 : index
    %c0_83 = arith.constant 0 : index
    %80 = vector.load %arg6[%c0_80, %c1_81, %c0_82, %c0_83] : memref<3x3x32x64xbf16, #tpu.memory_space<vmem>>, vector<1x1x32x64xbf16>
    %81 = vector.shape_cast %80 : vector<1x1x32x64xbf16> to vector<32x64xbf16>
    %cst_84 = arith.constant dense<0.000000e+00> : vector<168x64xf32>
    %82 = tpu.matmul %79, %81, %cst_84 {dimension_numbers = #tpu.dot_dimension_numbers<[1], [0], [0], [1], [0, 0, 1, 1], [], []>} : vector<168x32xbf16>, vector<32x64xbf16>, vector<168x64xf32> -> vector<168x64xf32>
    %83 = arith.addf %77, %82 : vector<168x64xf32>
    %c2_85 = arith.constant 2 : index
    %c0_86 = arith.constant 0 : index
    %84 = vector.load %arg14[%c2_85, %c0_86] : memref<208x32xf32, #tpu.memory_space<vmem>>, vector<168x32xf32>
    %85 = arith.truncf %84 : vector<168x32xf32> to vector<168x32xbf16>
    %c0_87 = arith.constant 0 : index
    %c2_88 = arith.constant 2 : index
    %c0_89 = arith.constant 0 : index
    %c0_90 = arith.constant 0 : index
    %86 = vector.load %arg6[%c0_87, %c2_88, %c0_89, %c0_90] : memref<3x3x32x64xbf16, #tpu.memory_space<vmem>>, vector<1x1x32x64xbf16>
    %87 = vector.shape_cast %86 : vector<1x1x32x64xbf16> to vector<32x64xbf16>
    %cst_91 = arith.constant dense<0.000000e+00> : vector<168x64xf32>
    %88 = tpu.matmul %85, %87, %cst_91 {dimension_numbers = #tpu.dot_dimension_numbers<[1], [0], [0], [1], [0, 0, 1, 1], [], []>} : vector<168x32xbf16>, vector<32x64xbf16>, vector<168x64xf32> -> vector<168x64xf32>
    %89 = arith.addf %83, %88 : vector<168x64xf32>
    %c16_92 = arith.constant 16 : index
    %c0_93 = arith.constant 0 : index
    %90 = vector.load %arg14[%c16_92, %c0_93] : memref<208x32xf32, #tpu.memory_space<vmem>>, vector<168x32xf32>
    %91 = arith.truncf %90 : vector<168x32xf32> to vector<168x32xbf16>
    %c1_94 = arith.constant 1 : index
    %c0_95 = arith.constant 0 : index
    %c0_96 = arith.constant 0 : index
    %c0_97 = arith.constant 0 : index
    %92 = vector.load %arg6[%c1_94, %c0_95, %c0_96, %c0_97] : memref<3x3x32x64xbf16, #tpu.memory_space<vmem>>, vector<1x1x32x64xbf16>
    %93 = vector.shape_cast %92 : vector<1x1x32x64xbf16> to vector<32x64xbf16>
    %cst_98 = arith.constant dense<0.000000e+00> : vector<168x64xf32>
    %94 = tpu.matmul %91, %93, %cst_98 {dimension_numbers = #tpu.dot_dimension_numbers<[1], [0], [0], [1], [0, 0, 1, 1], [], []>} : vector<168x32xbf16>, vector<32x64xbf16>, vector<168x64xf32> -> vector<168x64xf32>
    %95 = arith.addf %89, %94 : vector<168x64xf32>
    %c17_99 = arith.constant 17 : index
    %c0_100 = arith.constant 0 : index
    %96 = vector.load %arg14[%c17_99, %c0_100] : memref<208x32xf32, #tpu.memory_space<vmem>>, vector<168x32xf32>
    %97 = arith.truncf %96 : vector<168x32xf32> to vector<168x32xbf16>
    %c1_101 = arith.constant 1 : index
    %c1_102 = arith.constant 1 : index
    %c0_103 = arith.constant 0 : index
    %c0_104 = arith.constant 0 : index
    %98 = vector.load %arg6[%c1_101, %c1_102, %c0_103, %c0_104] : memref<3x3x32x64xbf16, #tpu.memory_space<vmem>>, vector<1x1x32x64xbf16>
    %99 = vector.shape_cast %98 : vector<1x1x32x64xbf16> to vector<32x64xbf16>
    %cst_105 = arith.constant dense<0.000000e+00> : vector<168x64xf32>
    %100 = tpu.matmul %97, %99, %cst_105 {dimension_numbers = #tpu.dot_dimension_numbers<[1], [0], [0], [1], [0, 0, 1, 1], [], []>} : vector<168x32xbf16>, vector<32x64xbf16>, vector<168x64xf32> -> vector<168x64xf32>
    %101 = arith.addf %95, %100 : vector<168x64xf32>
    %c18_106 = arith.constant 18 : index
    %c0_107 = arith.constant 0 : index
    %102 = vector.load %arg14[%c18_106, %c0_107] : memref<208x32xf32, #tpu.memory_space<vmem>>, vector<168x32xf32>
    %103 = arith.truncf %102 : vector<168x32xf32> to vector<168x32xbf16>
    %c1_108 = arith.constant 1 : index
    %c2_109 = arith.constant 2 : index
    %c0_110 = arith.constant 0 : index
    %c0_111 = arith.constant 0 : index
    %104 = vector.load %arg6[%c1_108, %c2_109, %c0_110, %c0_111] : memref<3x3x32x64xbf16, #tpu.memory_space<vmem>>, vector<1x1x32x64xbf16>
    %105 = vector.shape_cast %104 : vector<1x1x32x64xbf16> to vector<32x64xbf16>
    %cst_112 = arith.constant dense<0.000000e+00> : vector<168x64xf32>
    %106 = tpu.matmul %103, %105, %cst_112 {dimension_numbers = #tpu.dot_dimension_numbers<[1], [0], [0], [1], [0, 0, 1, 1], [], []>} : vector<168x32xbf16>, vector<32x64xbf16>, vector<168x64xf32> -> vector<168x64xf32>
    %107 = arith.addf %101, %106 : vector<168x64xf32>
    %c32_113 = arith.constant 32 : index
    %c0_114 = arith.constant 0 : index
    %108 = vector.load %arg14[%c32_113, %c0_114] : memref<208x32xf32, #tpu.memory_space<vmem>>, vector<168x32xf32>
    %109 = arith.truncf %108 : vector<168x32xf32> to vector<168x32xbf16>
    %c2_115 = arith.constant 2 : index
    %c0_116 = arith.constant 0 : index
    %c0_117 = arith.constant 0 : index
    %c0_118 = arith.constant 0 : index
    %110 = vector.load %arg6[%c2_115, %c0_116, %c0_117, %c0_118] : memref<3x3x32x64xbf16, #tpu.memory_space<vmem>>, vector<1x1x32x64xbf16>
    %111 = vector.shape_cast %110 : vector<1x1x32x64xbf16> to vector<32x64xbf16>
    %cst_119 = arith.constant dense<0.000000e+00> : vector<168x64xf32>
    %112 = tpu.matmul %109, %111, %cst_119 {dimension_numbers = #tpu.dot_dimension_numbers<[1], [0], [0], [1], [0, 0, 1, 1], [], []>} : vector<168x32xbf16>, vector<32x64xbf16>, vector<168x64xf32> -> vector<168x64xf32>
    %113 = arith.addf %107, %112 : vector<168x64xf32>
    %c33_120 = arith.constant 33 : index
    %c0_121 = arith.constant 0 : index
    %114 = vector.load %arg14[%c33_120, %c0_121] : memref<208x32xf32, #tpu.memory_space<vmem>>, vector<168x32xf32>
    %115 = arith.truncf %114 : vector<168x32xf32> to vector<168x32xbf16>
    %c2_122 = arith.constant 2 : index
    %c1_123 = arith.constant 1 : index
    %c0_124 = arith.constant 0 : index
    %c0_125 = arith.constant 0 : index
    %116 = vector.load %arg6[%c2_122, %c1_123, %c0_124, %c0_125] : memref<3x3x32x64xbf16, #tpu.memory_space<vmem>>, vector<1x1x32x64xbf16>
    %117 = vector.shape_cast %116 : vector<1x1x32x64xbf16> to vector<32x64xbf16>
    %cst_126 = arith.constant dense<0.000000e+00> : vector<168x64xf32>
    %118 = tpu.matmul %115, %117, %cst_126 {dimension_numbers = #tpu.dot_dimension_numbers<[1], [0], [0], [1], [0, 0, 1, 1], [], []>} : vector<168x32xbf16>, vector<32x64xbf16>, vector<168x64xf32> -> vector<168x64xf32>
    %119 = arith.addf %113, %118 : vector<168x64xf32>
    %c34_127 = arith.constant 34 : index
    %c0_128 = arith.constant 0 : index
    %120 = vector.load %arg14[%c34_127, %c0_128] : memref<208x32xf32, #tpu.memory_space<vmem>>, vector<168x32xf32>
    %121 = arith.truncf %120 : vector<168x32xf32> to vector<168x32xbf16>
    %c2_129 = arith.constant 2 : index
    %c2_130 = arith.constant 2 : index
    %c0_131 = arith.constant 0 : index
    %c0_132 = arith.constant 0 : index
    %122 = vector.load %arg6[%c2_129, %c2_130, %c0_131, %c0_132] : memref<3x3x32x64xbf16, #tpu.memory_space<vmem>>, vector<1x1x32x64xbf16>
    %123 = vector.shape_cast %122 : vector<1x1x32x64xbf16> to vector<32x64xbf16>
    %cst_133 = arith.constant dense<0.000000e+00> : vector<168x64xf32>
    %124 = tpu.matmul %121, %123, %cst_133 {dimension_numbers = #tpu.dot_dimension_numbers<[1], [0], [0], [1], [0, 0, 1, 1], [], []>} : vector<168x32xbf16>, vector<32x64xbf16>, vector<168x64xf32> -> vector<168x64xf32>
    %125 = arith.addf %119, %124 : vector<168x64xf32>
    %c0_134 = arith.constant 0 : index
    %c0_135 = arith.constant 0 : index
    %126 = vector.load %arg7[%c0_134, %c0_135] : memref<1x64xf32, #tpu.memory_space<vmem>>, vector<1x64xf32>
    %127 = vector.broadcast %126 : vector<1x64xf32> to vector<168x64xf32>
    %128 = arith.addf %125, %127 : vector<168x64xf32>
    %cst_136 = arith.constant 0.000000e+00 : f32
    %129 = vector.broadcast %cst_136 : f32 to vector<168x64xf32>
    %130 = arith.maximumf %128, %129 : vector<168x64xf32>
    %c0_137 = arith.constant 0 : index
    %c0_138 = arith.constant 0 : index
    %131 = vector.load %arg15[%c0_137, %c0_138] : memref<168x64xf32, #tpu.memory_space<vmem>>, vector<168x64xf32>
    tpu.vector_store %arg15[%c0_137, %c0_138], %130 {strides = array<i32>} : memref<168x64xf32, #tpu.memory_space<vmem>>, vector<168x64xf32>,
    %cst_139 = arith.constant 0.000000e+00 : f32
    %132 = vector.broadcast %cst_139 : f32 to vector<128x64xf32>
    %c0_140 = arith.constant 0 : index
    %c0_141 = arith.constant 0 : index
    %133 = vector.load %arg15[%c0_140, %c0_141] : memref<168x64xf32, #tpu.memory_space<vmem>>, vector<128x64xf32>
    %134 = arith.truncf %133 : vector<128x64xf32> to vector<128x64xbf16>
    %c0_142 = arith.constant 0 : index
    %c0_143 = arith.constant 0 : index
    %c0_144 = arith.constant 0 : index
    %c0_145 = arith.constant 0 : index
    %135 = vector.load %arg8[%c0_142, %c0_143, %c0_144, %c0_145] : memref<3x3x64x64xbf16, #tpu.memory_space<vmem>>, vector<1x1x64x64xbf16>
    %136 = vector.shape_cast %135 : vector<1x1x64x64xbf16> to vector<64x64xbf16>
    %cst_146 = arith.constant dense<0.000000e+00> : vector<128x64xf32>
    %137 = tpu.matmul %134, %136, %cst_146 {dimension_numbers = #tpu.dot_dimension_numbers<[1], [0], [0], [1], [0, 0, 1, 1], [], []>} : vector<128x64xbf16>, vector<64x64xbf16>, vector<128x64xf32> -> vector<128x64xf32>
    %138 = arith.addf %132, %137 : vector<128x64xf32>
    %c1_147 = arith.constant 1 : index
    %c0_148 = arith.constant 0 : index
    %139 = vector.load %arg15[%c1_147, %c0_148] : memref<168x64xf32, #tpu.memory_space<vmem>>, vector<128x64xf32>
    %140 = arith.truncf %139 : vector<128x64xf32> to vector<128x64xbf16>
    %c0_149 = arith.constant 0 : index
    %c1_150 = arith.constant 1 : index
    %c0_151 = arith.constant 0 : index
    %c0_152 = arith.constant 0 : index
    %141 = vector.load %arg8[%c0_149, %c1_150, %c0_151, %c0_152] : memref<3x3x64x64xbf16, #tpu.memory_space<vmem>>, vector<1x1x64x64xbf16>
    %142 = vector.shape_cast %141 : vector<1x1x64x64xbf16> to vector<64x64xbf16>
    %cst_153 = arith.constant dense<0.000000e+00> : vector<128x64xf32>
    %143 = tpu.matmul %140, %142, %cst_153 {dimension_numbers = #tpu.dot_dimension_numbers<[1], [0], [0], [1], [0, 0, 1, 1], [], []>} : vector<128x64xbf16>, vector<64x64xbf16>, vector<128x64xf32> -> vector<128x64xf32>
    %144 = arith.addf %138, %143 : vector<128x64xf32>
    %c2_154 = arith.constant 2 : index
    %c0_155 = arith.constant 0 : index
    %145 = vector.load %arg15[%c2_154, %c0_155] : memref<168x64xf32, #tpu.memory_space<vmem>>, vector<128x64xf32>
    %146 = arith.truncf %145 : vector<128x64xf32> to vector<128x64xbf16>
    %c0_156 = arith.constant 0 : index
    %c2_157 = arith.constant 2 : index
    %c0_158 = arith.constant 0 : index
    %c0_159 = arith.constant 0 : index
    %147 = vector.load %arg8[%c0_156, %c2_157, %c0_158, %c0_159] : memref<3x3x64x64xbf16, #tpu.memory_space<vmem>>, vector<1x1x64x64xbf16>
    %148 = vector.shape_cast %147 : vector<1x1x64x64xbf16> to vector<64x64xbf16>
    %cst_160 = arith.constant dense<0.000000e+00> : vector<128x64xf32>
    %149 = tpu.matmul %146, %148, %cst_160 {dimension_numbers = #tpu.dot_dimension_numbers<[1], [0], [0], [1], [0, 0, 1, 1], [], []>} : vector<128x64xbf16>, vector<64x64xbf16>, vector<128x64xf32> -> vector<128x64xf32>
    %150 = arith.addf %144, %149 : vector<128x64xf32>
    %c16_161 = arith.constant 16 : index
    %c0_162 = arith.constant 0 : index
    %151 = vector.load %arg15[%c16_161, %c0_162] : memref<168x64xf32, #tpu.memory_space<vmem>>, vector<128x64xf32>
    %152 = arith.truncf %151 : vector<128x64xf32> to vector<128x64xbf16>
    %c1_163 = arith.constant 1 : index
    %c0_164 = arith.constant 0 : index
    %c0_165 = arith.constant 0 : index
    %c0_166 = arith.constant 0 : index
    %153 = vector.load %arg8[%c1_163, %c0_164, %c0_165, %c0_166] : memref<3x3x64x64xbf16, #tpu.memory_space<vmem>>, vector<1x1x64x64xbf16>
    %154 = vector.shape_cast %153 : vector<1x1x64x64xbf16> to vector<64x64xbf16>
    %cst_167 = arith.constant dense<0.000000e+00> : vector<128x64xf32>
    %155 = tpu.matmul %152, %154, %cst_167 {dimension_numbers = #tpu.dot_dimension_numbers<[1], [0], [0], [1], [0, 0, 1, 1], [], []>} : vector<128x64xbf16>, vector<64x64xbf16>, vector<128x64xf32> -> vector<128x64xf32>
    %156 = arith.addf %150, %155 : vector<128x64xf32>
    %c17_168 = arith.constant 17 : index
    %c0_169 = arith.constant 0 : index
    %157 = vector.load %arg15[%c17_168, %c0_169] : memref<168x64xf32, #tpu.memory_space<vmem>>, vector<128x64xf32>
    %158 = arith.truncf %157 : vector<128x64xf32> to vector<128x64xbf16>
    %c1_170 = arith.constant 1 : index
    %c1_171 = arith.constant 1 : index
    %c0_172 = arith.constant 0 : index
    %c0_173 = arith.constant 0 : index
    %159 = vector.load %arg8[%c1_170, %c1_171, %c0_172, %c0_173] : memref<3x3x64x64xbf16, #tpu.memory_space<vmem>>, vector<1x1x64x64xbf16>
    %160 = vector.shape_cast %159 : vector<1x1x64x64xbf16> to vector<64x64xbf16>
    %cst_174 = arith.constant dense<0.000000e+00> : vector<128x64xf32>
    %161 = tpu.matmul %158, %160, %cst_174 {dimension_numbers = #tpu.dot_dimension_numbers<[1], [0], [0], [1], [0, 0, 1, 1], [], []>} : vector<128x64xbf16>, vector<64x64xbf16>, vector<128x64xf32> -> vector<128x64xf32>
    %162 = arith.addf %156, %161 : vector<128x64xf32>
    %c18_175 = arith.constant 18 : index
    %c0_176 = arith.constant 0 : index
    %163 = vector.load %arg15[%c18_175, %c0_176] : memref<168x64xf32, #tpu.memory_space<vmem>>, vector<128x64xf32>
    %164 = arith.truncf %163 : vector<128x64xf32> to vector<128x64xbf16>
    %c1_177 = arith.constant 1 : index
    %c2_178 = arith.constant 2 : index
    %c0_179 = arith.constant 0 : index
    %c0_180 = arith.constant 0 : index
    %165 = vector.load %arg8[%c1_177, %c2_178, %c0_179, %c0_180] : memref<3x3x64x64xbf16, #tpu.memory_space<vmem>>, vector<1x1x64x64xbf16>
    %166 = vector.shape_cast %165 : vector<1x1x64x64xbf16> to vector<64x64xbf16>
    %cst_181 = arith.constant dense<0.000000e+00> : vector<128x64xf32>
    %167 = tpu.matmul %164, %166, %cst_181 {dimension_numbers = #tpu.dot_dimension_numbers<[1], [0], [0], [1], [0, 0, 1, 1], [], []>} : vector<128x64xbf16>, vector<64x64xbf16>, vector<128x64xf32> -> vector<128x64xf32>
    %168 = arith.addf %162, %167 : vector<128x64xf32>
    %c32_182 = arith.constant 32 : index
    %c0_183 = arith.constant 0 : index
    %169 = vector.load %arg15[%c32_182, %c0_183] : memref<168x64xf32, #tpu.memory_space<vmem>>, vector<128x64xf32>
    %170 = arith.truncf %169 : vector<128x64xf32> to vector<128x64xbf16>
    %c2_184 = arith.constant 2 : index
    %c0_185 = arith.constant 0 : index
    %c0_186 = arith.constant 0 : index
    %c0_187 = arith.constant 0 : index
    %171 = vector.load %arg8[%c2_184, %c0_185, %c0_186, %c0_187] : memref<3x3x64x64xbf16, #tpu.memory_space<vmem>>, vector<1x1x64x64xbf16>
    %172 = vector.shape_cast %171 : vector<1x1x64x64xbf16> to vector<64x64xbf16>
    %cst_188 = arith.constant dense<0.000000e+00> : vector<128x64xf32>
    %173 = tpu.matmul %170, %172, %cst_188 {dimension_numbers = #tpu.dot_dimension_numbers<[1], [0], [0], [1], [0, 0, 1, 1], [], []>} : vector<128x64xbf16>, vector<64x64xbf16>, vector<128x64xf32> -> vector<128x64xf32>
    %174 = arith.addf %168, %173 : vector<128x64xf32>
    %c33_189 = arith.constant 33 : index
    %c0_190 = arith.constant 0 : index
    %175 = vector.load %arg15[%c33_189, %c0_190] : memref<168x64xf32, #tpu.memory_space<vmem>>, vector<128x64xf32>
    %176 = arith.truncf %175 : vector<128x64xf32> to vector<128x64xbf16>
    %c2_191 = arith.constant 2 : index
    %c1_192 = arith.constant 1 : index
    %c0_193 = arith.constant 0 : index
    %c0_194 = arith.constant 0 : index
    %177 = vector.load %arg8[%c2_191, %c1_192, %c0_193, %c0_194] : memref<3x3x64x64xbf16, #tpu.memory_space<vmem>>, vector<1x1x64x64xbf16>
    %178 = vector.shape_cast %177 : vector<1x1x64x64xbf16> to vector<64x64xbf16>
    %cst_195 = arith.constant dense<0.000000e+00> : vector<128x64xf32>
    %179 = tpu.matmul %176, %178, %cst_195 {dimension_numbers = #tpu.dot_dimension_numbers<[1], [0], [0], [1], [0, 0, 1, 1], [], []>} : vector<128x64xbf16>, vector<64x64xbf16>, vector<128x64xf32> -> vector<128x64xf32>
    %180 = arith.addf %174, %179 : vector<128x64xf32>
    %c34_196 = arith.constant 34 : index
    %c0_197 = arith.constant 0 : index
    %181 = vector.load %arg15[%c34_196, %c0_197] : memref<168x64xf32, #tpu.memory_space<vmem>>, vector<128x64xf32>
    %182 = arith.truncf %181 : vector<128x64xf32> to vector<128x64xbf16>
    %c2_198 = arith.constant 2 : index
    %c2_199 = arith.constant 2 : index
    %c0_200 = arith.constant 0 : index
    %c0_201 = arith.constant 0 : index
    %183 = vector.load %arg8[%c2_198, %c2_199, %c0_200, %c0_201] : memref<3x3x64x64xbf16, #tpu.memory_space<vmem>>, vector<1x1x64x64xbf16>
    %184 = vector.shape_cast %183 : vector<1x1x64x64xbf16> to vector<64x64xbf16>
    %cst_202 = arith.constant dense<0.000000e+00> : vector<128x64xf32>
    %185 = tpu.matmul %182, %184, %cst_202 {dimension_numbers = #tpu.dot_dimension_numbers<[1], [0], [0], [1], [0, 0, 1, 1], [], []>} : vector<128x64xbf16>, vector<64x64xbf16>, vector<128x64xf32> -> vector<128x64xf32>
    %186 = arith.addf %180, %185 : vector<128x64xf32>
    %c0_203 = arith.constant 0 : index
    %c0_204 = arith.constant 0 : index
    %187 = vector.load %arg9[%c0_203, %c0_204] : memref<1x64xf32, #tpu.memory_space<vmem>>, vector<1x64xf32>
    %188 = vector.broadcast %187 : vector<1x64xf32> to vector<128x64xf32>
    %189 = arith.addf %186, %188 : vector<128x64xf32>
    %cst_205 = arith.constant 0.000000e+00 : f32
    %190 = vector.broadcast %cst_205 : f32 to vector<128x64xf32>
    %191 = arith.maximumf %189, %190 : vector<128x64xf32>
    %c0_206 = arith.constant 0 : index
    %c0_207 = arith.constant 0 : index
    %192 = vector.load %arg16[%c0_206, %c0_207] : memref<128x64xf32, #tpu.memory_space<vmem>>, vector<128x64xf32>
    tpu.vector_store %arg16[%c0_206, %c0_207], %191 {strides = array<i32>} : memref<128x64xf32, #tpu.memory_space<vmem>>, vector<128x64xf32>,
    %c0_208 = arith.constant 0 : index
    %c0_209 = arith.constant 0 : index
    %193 = vector.load %arg16[%c0_208, %c0_209] : memref<128x64xf32, #tpu.memory_space<vmem>>, vector<128x64xf32>
    %c0_210 = arith.constant 0 : index
    %c0_211 = arith.constant 0 : index
    %c0_212 = arith.constant 0 : index
    %194 = vector.load %arg10[%c0_210, %c0_211, %c0_212] : memref<3x128x64xbf16, #tpu.memory_space<vmem>>, vector<1x128x64xbf16>
    %195 = vector.shape_cast %194 : vector<1x128x64xbf16> to vector<128x64xbf16>
    %196 = arith.extf %195 : vector<128x64xbf16> to vector<128x64xf32>
    %197 = arith.mulf %193, %196 : vector<128x64xf32>
    %cst_213 = arith.constant dense<0.000000e+00> : vector<128xf32>
    %198 = vector.multi_reduction <add>, %197, %cst_213 [1] : vector<128x64xf32> to vector<128xf32>
    %199 = vector.shape_cast %198 : vector<128xf32> to vector<128x1xf32>
    %cst_214 = arith.constant dense<0.000000e+00> : vector<1xf32>
    %200 = vector.multi_reduction <add>, %199, %cst_214 [0] : vector<128x1xf32> to vector<1xf32>
    %201 = vector.shape_cast %200 : vector<1xf32> to vector<1x1xf32>
    %c0_215 = arith.constant 0 : index
    %c0_216 = arith.constant 0 : index
    %202 = vector.load %arg11[%c0_215, %c0_216] : memref<1x3xf32, #tpu.memory_space<vmem>>, vector<1x1xf32>
    %203 = arith.addf %201, %202 : vector<1x1xf32>
    %c0_217 = arith.constant 0 : index
    %c0_218 = arith.constant 0 : index
    %c0_219 = arith.constant 0 : index
    %204 = vector.load %arg12[%c0_217, %c0_218, %c0_219] : memref<1x1x3xf32, #tpu.memory_space<vmem>>, vector<1x1x1xf32>
    %205 = vector.shape_cast %204 : vector<1x1x1xf32> to vector<1x1xf32>
    %206 = vector.shape_cast %203 : vector<1x1xf32> to vector<1x1x1xf32>
    tpu.vector_store %arg12[%c0_217, %c0_218, %c0_219], %206 {strides = array<i32>} : memref<1x1x3xf32, #tpu.memory_space<vmem>>, vector<1x1x1xf32>,
    %c1_220 = arith.constant 1 : index
    %c0_221 = arith.constant 0 : index
    %c0_222 = arith.constant 0 : index
    %207 = vector.load %arg10[%c1_220, %c0_221, %c0_222] : memref<3x128x64xbf16, #tpu.memory_space<vmem>>, vector<1x128x64xbf16>
    %208 = vector.shape_cast %207 : vector<1x128x64xbf16> to vector<128x64xbf16>
    %209 = arith.extf %208 : vector<128x64xbf16> to vector<128x64xf32>
    %210 = arith.mulf %193, %209 : vector<128x64xf32>
    %cst_223 = arith.constant dense<0.000000e+00> : vector<128xf32>
    %211 = vector.multi_reduction <add>, %210, %cst_223 [1] : vector<128x64xf32> to vector<128xf32>
    %212 = vector.shape_cast %211 : vector<128xf32> to vector<128x1xf32>
    %cst_224 = arith.constant dense<0.000000e+00> : vector<1xf32>
    %213 = vector.multi_reduction <add>, %212, %cst_224 [0] : vector<128x1xf32> to vector<1xf32>
    %214 = vector.shape_cast %213 : vector<1xf32> to vector<1x1xf32>
    %c0_225 = arith.constant 0 : index
    %c1_226 = arith.constant 1 : index
    %215 = vector.load %arg11[%c0_225, %c1_226] : memref<1x3xf32, #tpu.memory_space<vmem>>, vector<1x1xf32>
    %216 = arith.addf %214, %215 : vector<1x1xf32>
    %c0_227 = arith.constant 0 : index
    %c0_228 = arith.constant 0 : index
    %c1_229 = arith.constant 1 : index
    %217 = vector.load %arg12[%c0_227, %c0_228, %c1_229] : memref<1x1x3xf32, #tpu.memory_space<vmem>>, vector<1x1x1xf32>
    %218 = vector.shape_cast %217 : vector<1x1x1xf32> to vector<1x1xf32>
    %219 = vector.shape_cast %216 : vector<1x1xf32> to vector<1x1x1xf32>
    tpu.vector_store %arg12[%c0_227, %c0_228, %c1_229], %219 {strides = array<i32>} : memref<1x1x3xf32, #tpu.memory_space<vmem>>, vector<1x1x1xf32>,
    %c2_230 = arith.constant 2 : index
    %c0_231 = arith.constant 0 : index
    %c0_232 = arith.constant 0 : index
    %220 = vector.load %arg10[%c2_230, %c0_231, %c0_232] : memref<3x128x64xbf16, #tpu.memory_space<vmem>>, vector<1x128x64xbf16>
    %221 = vector.shape_cast %220 : vector<1x128x64xbf16> to vector<128x64xbf16>
    %222 = arith.extf %221 : vector<128x64xbf16> to vector<128x64xf32>
    %223 = arith.mulf %193, %222 : vector<128x64xf32>
    %cst_233 = arith.constant dense<0.000000e+00> : vector<128xf32>
    %224 = vector.multi_reduction <add>, %223, %cst_233 [1] : vector<128x64xf32> to vector<128xf32>
    %225 = vector.shape_cast %224 : vector<128xf32> to vector<128x1xf32>
    %cst_234 = arith.constant dense<0.000000e+00> : vector<1xf32>
    %226 = vector.multi_reduction <add>, %225, %cst_234 [0] : vector<128x1xf32> to vector<1xf32>
    %227 = vector.shape_cast %226 : vector<1xf32> to vector<1x1xf32>
    %c0_235 = arith.constant 0 : index
    %c2_236 = arith.constant 2 : index
    %228 = vector.load %arg11[%c0_235, %c2_236] : memref<1x3xf32, #tpu.memory_space<vmem>>, vector<1x1xf32>
    %229 = arith.addf %227, %228 : vector<1x1xf32>
    %c0_237 = arith.constant 0 : index
    %c0_238 = arith.constant 0 : index
    %c2_239 = arith.constant 2 : index
    %230 = vector.load %arg12[%c0_237, %c0_238, %c2_239] : memref<1x1x3xf32, #tpu.memory_space<vmem>>, vector<1x1x1xf32>
    %231 = vector.shape_cast %230 : vector<1x1x1xf32> to vector<1x1xf32>
    %232 = vector.shape_cast %229 : vector<1x1xf32> to vector<1x1x1xf32>
    tpu.vector_store %arg12[%c0_237, %c0_238, %c2_239], %232 {strides = array<i32>} : memref<1x1x3xf32, #tpu.memory_space<vmem>>, vector<1x1x1xf32>,
    return
  }
  func.func @transform_0(%arg0: i32) -> (i32, i32, i32) {
    %c0_i32 = arith.constant 0 : i32
    %c0_i32_0 = arith.constant 0 : i32
    %c0_i32_1 = arith.constant 0 : i32
    return %arg0, %c0_i32, %c0_i32_0 : i32, i32, i32
  }
  func.func @transform_1(%arg0: i32) -> (i32, i32) {
    %c0_i32 = arith.constant 0 : i32
    %c0_i32_0 = arith.constant 0 : i32
    %c0_i32_1 = arith.constant 0 : i32
    return %c0_i32, %c0_i32_0 : i32, i32
  }
  func.func @transform_2(%arg0: i32) -> (i32, i32) {
    %c0_i32 = arith.constant 0 : i32
    %c0_i32_0 = arith.constant 0 : i32
    %c0_i32_1 = arith.constant 0 : i32
    return %c0_i32, %c0_i32_0 : i32, i32
  }
  func.func @transform_3(%arg0: i32) -> (i32, i32, i32, i32) {
    %c0_i32 = arith.constant 0 : i32
    %c0_i32_0 = arith.constant 0 : i32
    %c0_i32_1 = arith.constant 0 : i32
    %c0_i32_2 = arith.constant 0 : i32
    %c0_i32_3 = arith.constant 0 : i32
    return %c0_i32, %c0_i32_0, %c0_i32_1, %c0_i32_2 : i32, i32, i32, i32
  }
  func.func @transform_4(%arg0: i32) -> (i32, i32) {
    %c0_i32 = arith.constant 0 : i32
    %c0_i32_0 = arith.constant 0 : i32
    %c0_i32_1 = arith.constant 0 : i32
    return %c0_i32, %c0_i32_0 : i32, i32
  }
  func.func @transform_5(%arg0: i32) -> (i32, i32, i32, i32) {
    %c0_i32 = arith.constant 0 : i32
    %c0_i32_0 = arith.constant 0 : i32
    %c0_i32_1 = arith.constant 0 : i32
    %c0_i32_2 = arith.constant 0 : i32
    %c0_i32_3 = arith.constant 0 : i32
    return %c0_i32, %c0_i32_0, %c0_i32_1, %c0_i32_2 : i32, i32, i32, i32
  }
  func.func @transform_6(%arg0: i32) -> (i32, i32) {
    %c0_i32 = arith.constant 0 : i32
    %c0_i32_0 = arith.constant 0 : i32
    %c0_i32_1 = arith.constant 0 : i32
    return %c0_i32, %c0_i32_0 : i32, i32
  }
  func.func @transform_7(%arg0: i32) -> (i32, i32, i32, i32) {
    %c0_i32 = arith.constant 0 : i32
    %c0_i32_0 = arith.constant 0 : i32
    %c0_i32_1 = arith.constant 0 : i32
    %c0_i32_2 = arith.constant 0 : i32
    %c0_i32_3 = arith.constant 0 : i32
    return %c0_i32, %c0_i32_0, %c0_i32_1, %c0_i32_2 : i32, i32, i32, i32
  }
  func.func @transform_8(%arg0: i32) -> (i32, i32) {
    %c0_i32 = arith.constant 0 : i32
    %c0_i32_0 = arith.constant 0 : i32
    %c0_i32_1 = arith.constant 0 : i32
    return %c0_i32, %c0_i32_0 : i32, i32
  }
  func.func @transform_9(%arg0: i32) -> (i32, i32, i32) {
    %c0_i32 = arith.constant 0 : i32
    %c0_i32_0 = arith.constant 0 : i32
    %c0_i32_1 = arith.constant 0 : i32
    %c0_i32_2 = arith.constant 0 : i32
    return %c0_i32, %c0_i32_0, %c0_i32_1 : i32, i32, i32
  }
  func.func @transform_10(%arg0: i32) -> (i32, i32) {
    %c0_i32 = arith.constant 0 : i32
    %c0_i32_0 = arith.constant 0 : i32
    %c0_i32_1 = arith.constant 0 : i32
    return %c0_i32, %c0_i32_0 : i32, i32
  }
  func.func @transform_11(%arg0: i32) -> (i32, i32, i32) {
    %c0_i32 = arith.constant 0 : i32
    %c0_i32_0 = arith.constant 0 : i32
    %c0_i32_1 = arith.constant 0 : i32
    return %arg0, %c0_i32, %c0_i32_0 : i32, i32, i32
  }
}

</mosaic_0001>

<llo_original>
// kernel: encoder_forward.1
$region0: #{encoder_forward.1}
  #allocation0 [shape = 'u32[]', space=smem, size = 0x4, offset = 0x4, fixed_abs, tag = 'smem constant byte address 0x4 - core index']
  #allocation1 [shape = 'u32[72,128]{1,0:T(1,128)}', space=vmem, size = 0x9000, scoped, tag = 'internal scratch']
  #allocation2 [shape = 'f32[248,32]{1,0:T(8,128)}', space=vmem, size = 0x1f000, scoped, tag = 'scratch operand']
  #allocation3 [shape = 'f32[208,32]{1,0:T(8,128)}', space=vmem, size = 0x1a000, scoped, tag = 'scratch operand']
  #allocation4 [shape = 'f32[168,64]{1,0:T(8,128)}', space=vmem, size = 0x15000, scoped, tag = 'scratch operand']
  #allocation5 [shape = 'f32[128,64]{1,0:T(8,128)}', space=vmem, size = 0x10000, scoped, tag = 'scratch operand']
  %s0 = inlined_call_operand.vmem [shape: bf16[2,248,27], index: 0, kind: input, shape index: {}]
  %s1 = inlined_call_operand.vmem [shape: bf16[27,32], index: 1, kind: input, shape index: {}]
  %s2 = inlined_call_operand.vmem [shape: f32[1,32], index: 2, kind: input, shape index: {}]
  %s3 = inlined_call_operand.vmem [shape: bf16[3,3,32,32], index: 3, kind: input, shape index: {}]
  %s4 = inlined_call_operand.vmem [shape: f32[1,32], index: 4, kind: input, shape index: {}]
  %s5 = inlined_call_operand.vmem [shape: bf16[3,3,32,64], index: 5, kind: input, shape index: {}]
  %s6 = inlined_call_operand.vmem [shape: f32[1,64], index: 6, kind: input, shape index: {}]
  %s7 = inlined_call_operand.vmem [shape: bf16[3,3,64,64], index: 7, kind: input, shape index: {}]
  %s8 = inlined_call_operand.vmem [shape: f32[1,64], index: 8, kind: input, shape index: {}]
  %s9 = inlined_call_operand.vmem [shape: bf16[3,128,64], index: 9, kind: input, shape index: {}]
  %s10 = inlined_call_operand.vmem [shape: f32[1,3], index: 10, kind: input, shape index: {}]
  %s11 = inlined_call_operand.hbm [shape: f32[2,1,3], index: 11, kind: output, shape index: {}]
  %s12 = sld [smem:[#allocation0]]
  $region77: #{encoder_forward.1} parent=0
    _
  %s14 = ssub.s32 1, %s12
  %s15 = scalar_select 0, %s14, %s12
  $region1: #{encoder_forward.1} parent=0
    #allocation6 [shape = 'u8[1024]{0}', space=vmem, size = 0x400, scoped, tag = 'output window, operand 0']
    #allocation7 [shape = 's32[2]{0}', space=sflag, size = 0x8, scoped, tag = 'scoped memory for encoder_forward.1']
    %16 = vsyncpa [#allocation7], 0
    %s17 = scalar_lea.sflag [#allocation7], 1
    %18 = vsyncpa %s17, 0
    loop: start=0, step=1, limit=4
    $region2: #{encoder_forward.1} parent=1 // loop_pre_header
      _
    $region3: #{encoder_forward.1} parent=1 // loop_header
      %s20 = sphi 0, %s24
      %p21 = scmp.ge.s32.totalorder %s20, 4
      %s30 = sphi 0, %s32
      %s33 = sphi 0, %s30
      %s34 = sphi 0, %s33
      %s50 = sphi 0, %s34
      %s54 = sphi 0, %s54
      %s56 = sphi 0, %s54
      %s57 = sphi 0, %s56
      %s71 = sphi 0, %s57
      %s75 = sphi 0, %s75
      %s77 = sphi 0, %s75
      %s78 = sphi 0, %s77
      %s92 = sphi 0, %s78
      %s96 = sphi 0, %s96
      %s98 = sphi 0, %s96
      %s99 = sphi 0, %s98
      %s113 = sphi 0, %s99
      %s117 = sphi 0, %s117
      %s119 = sphi 0, %s117
      %s120 = sphi 0, %s119
      %s134 = sphi 0, %s120
      %s138 = sphi 0, %s138
      %s140 = sphi 0, %s138
      %s141 = sphi 0, %s140
      %s155 = sphi 0, %s141
      %s159 = sphi 0, %s159
      %s161 = sphi 0, %s159
      %s162 = sphi 0, %s161
      %s176 = sphi 0, %s162
      %s180 = sphi 0, %s180
      %s182 = sphi 0, %s180
      %s183 = sphi 0, %s182
      %s197 = sphi 0, %s183
      %s201 = sphi 0, %s201
      %s203 = sphi 0, %s201
      %s204 = sphi 0, %s203
      %s218 = sphi 0, %s204
      %s222 = sphi 0, %s222
      %s224 = sphi 0, %s222
      %s225 = sphi 0, %s224
      %s239 = sphi 0, %s225
      %s243 = sphi 0, %s243
      %s245 = sphi 0, %s243
      %s246 = sphi 0, %s245
      %s260 = sphi 0, %s246
      %s266 = sphi 0, %s268
      %s269 = sphi 0, %s266
      %s270 = sphi 0, %s269
      %s286 = sphi 0, %s270
    $region4: #{encoder_forward.1} parent=1 // loop_header_branch
      %23 = sbr.rel (%p21) target = $region8
    $region5: #{encoder_forward.1} parent=1 // loop_body
      %s25 = ssub.s32 %s20, 1
      %s26 = ssub.s32 %s20, 2
      %s27 = sadd.s32 %s20, 1
      %s28 = ssub.s32 %s20, %s27
      %p29 = scmp.eq.s32.totalorder %s28, 0
      %s31 = sadd.s32 %s30, 1
      %s32 = scalar_select %p29, %s30, %s31
      %p35 = pneg %p29
      %p36 = scmp.eq.s32.totalorder %s20, 1
      %p37 = por %p35, %p36
      %p38 = scmp.ne.s32.totalorder %s30, %s33
      %p39 = scmp.eq.s32.totalorder %s20, 0
      %p40 = por %p38, %p39
      %p41 = scmp.ne.s32.totalorder %s30, %s33
      %p42 = scmp.eq.s32.totalorder %s25, 1
      %p43 = por %p41, %p42
      %p44 = scmp.ne.s32.totalorder %s33, %s34
      %p45 = scmp.eq.s32.totalorder %s25, 0
      %p46 = por %p44, %p45
      %p47 = scmp.ne.s32.totalorder %s33, %s34
      %p48 = scmp.eq.s32.totalorder %s26, 1
      %p49 = por %p47, %p48
      %p51 = scmp.ne.s32.totalorder %s34, %s50
      %p52 = scmp.eq.s32.totalorder %s26, 0
      %p53 = por %p51, %p52
      %s55 = sadd.s32 %s54, 1
      %p58 = scmp.eq.s32.totalorder %s20, 1
      %p59 = scmp.ne.s32.totalorder %s54, %s56
      %p60 = scmp.eq.s32.totalorder %s20, 0
      %p61 = por %p59, %p60
      %p62 = scmp.ne.s32.totalorder %s54, %s56
      %p63 = scmp.eq.s32.totalorder %s25, 1
      %p64 = por %p62, %p63
      %p65 = scmp.ne.s32.totalorder %s56, %s57
      %p66 = scmp.eq.s32.totalorder %s25, 0
      %p67 = por %p65, %p66
      %p68 = scmp.ne.s32.totalorder %s56, %s57
      %p69 = scmp.eq.s32.totalorder %s26, 1
      %p70 = por %p68, %p69
      %p72 = scmp.ne.s32.totalorder %s57, %s71
      %p73 = scmp.eq.s32.totalorder %s26, 0
      %p74 = por %p72, %p73
      %s76 = sadd.s32 %s75, 1
      %p79 = scmp.eq.s32.totalorder %s20, 1
      %p80 = scmp.ne.s32.totalorder %s75, %s77
      %p81 = scmp.eq.s32.totalorder %s20, 0
      %p82 = por %p80, %p81
      %p83 = scmp.ne.s32.totalorder %s75, %s77
      %p84 = scmp.eq.s32.totalorder %s25, 1
      %p85 = por %p83, %p84
      %p86 = scmp.ne.s32.totalorder %s77, %s78
      %p87 = scmp.eq.s32.totalorder %s25, 0
      %p88 = por %p86, %p87
      %p89 = scmp.ne.s32.totalorder %s77, %s78
      %p90 = scmp.eq.s32.totalorder %s26, 1
      %p91 = por %p89, %p90
      %p93 = scmp.ne.s32.totalorder %s78, %s92
      %p94 = scmp.eq.s32.totalorder %s26, 0
      %p95 = por %p93, %p94
      %s97 = sadd.s32 %s96, 1
      %p100 = scmp.eq.s32.totalorder %s20, 1
      %p101 = scmp.ne.s32.totalorder %s96, %s98
      %p102 = scmp.eq.s32.totalorder %s20, 0
      %p103 = por %p101, %p102
      %p104 = scmp.ne.s32.totalorder %s96, %s98
      %p105 = scmp.eq.s32.totalorder %s25, 1
      %p106 = por %p104, %p105
      %p107 = scmp.ne.s32.totalorder %s98, %s99
      %p108 = scmp.eq.s32.totalorder %s25, 0
      %p109 = por %p107, %p108
      %p110 = scmp.ne.s32.totalorder %s98, %s99
      %p111 = scmp.eq.s32.totalorder %s26, 1
      %p112 = por %p110, %p111
      %p114 = scmp.ne.s32.totalorder %s99, %s113
      %p115 = scmp.eq.s32.totalorder %s26, 0
      %p116 = por %p114, %p115
      %s118 = sadd.s32 %s117, 1
      %p121 = scmp.eq.s32.totalorder %s20, 1
      %p122 = scmp.ne.s32.totalorder %s117, %s119
      %p123 = scmp.eq.s32.totalorder %s20, 0
      %p124 = por %p122, %p123
      %p125 = scmp.ne.s32.totalorder %s117, %s119
      %p126 = scmp.eq.s32.totalorder %s25, 1
      %p127 = por %p125, %p126
      %p128 = scmp.ne.s32.totalorder %s119, %s120
      %p129 = scmp.eq.s32.totalorder %s25, 0
      %p130 = por %p128, %p129
      %p131 = scmp.ne.s32.totalorder %s119, %s120
      %p132 = scmp.eq.s32.totalorder %s26, 1
      %p133 = por %p131, %p132
      %p135 = scmp.ne.s32.totalorder %s120, %s134
      %p136 = scmp.eq.s32.totalorder %s26, 0
      %p137 = por %p135, %p136
      %s139 = sadd.s32 %s138, 1
      %p142 = scmp.eq.s32.totalorder %s20, 1
      %p143 = scmp.ne.s32.totalorder %s138, %s140
      %p144 = scmp.eq.s32.totalorder %s20, 0
      %p145 = por %p143, %p144
      %p146 = scmp.ne.s32.totalorder %s138, %s140
      %p147 = scmp.eq.s32.totalorder %s25, 1
      %p148 = por %p146, %p147
      %p149 = scmp.ne.s32.totalorder %s140, %s141
      %p150 = scmp.eq.s32.totalorder %s25, 0
      %p151 = por %p149, %p150
      %p152 = scmp.ne.s32.totalorder %s140, %s141
      %p153 = scmp.eq.s32.totalorder %s26, 1
      %p154 = por %p152, %p153
      %p156 = scmp.ne.s32.totalorder %s141, %s155
      %p157 = scmp.eq.s32.totalorder %s26, 0
      %p158 = por %p156, %p157
      %s160 = sadd.s32 %s159, 1
      %p163 = scmp.eq.s32.totalorder %s20, 1
      %p164 = scmp.ne.s32.totalorder %s159, %s161
      %p165 = scmp.eq.s32.totalorder %s20, 0
      %p166 = por %p164, %p165
      %p167 = scmp.ne.s32.totalorder %s159, %s161
      %p168 = scmp.eq.s32.totalorder %s25, 1
      %p169 = por %p167, %p168
      %p170 = scmp.ne.s32.totalorder %s161, %s162
      %p171 = scmp.eq.s32.totalorder %s25, 0
      %p172 = por %p170, %p171
      %p173 = scmp.ne.s32.totalorder %s161, %s162
      %p174 = scmp.eq.s32.totalorder %s26, 1
      %p175 = por %p173, %p174
      %p177 = scmp.ne.s32.totalorder %s162, %s176
      %p178 = scmp.eq.s32.totalorder %s26, 0
      %p179 = por %p177, %p178
      %s181 = sadd.s32 %s180, 1
      %p184 = scmp.eq.s32.totalorder %s20, 1
      %p185 = scmp.ne.s32.totalorder %s180, %s182
      %p186 = scmp.eq.s32.totalorder %s20, 0
      %p187 = por %p185, %p186
      %p188 = scmp.ne.s32.totalorder %s180, %s182
      %p189 = scmp.eq.s32.totalorder %s25, 1
      %p190 = por %p188, %p189
      %p191 = scmp.ne.s32.totalorder %s182, %s183
      %p192 = scmp.eq.s32.totalorder %s25, 0
      %p193 = por %p191, %p192
      %p194 = scmp.ne.s32.totalorder %s182, %s183
      %p195 = scmp.eq.s32.totalorder %s26, 1
      %p196 = por %p194, %p195
      %p198 = scmp.ne.s32.totalorder %s183, %s197
      %p199 = scmp.eq.s32.totalorder %s26, 0
      %p200 = por %p198, %p199
      %s202 = sadd.s32 %s201, 1
      %p205 = scmp.eq.s32.totalorder %s20, 1
      %p206 = scmp.ne.s32.totalorder %s201, %s203
      %p207 = scmp.eq.s32.totalorder %s20, 0
      %p208 = por %p206, %p207
      %p209 = scmp.ne.s32.totalorder %s201, %s203
      %p210 = scmp.eq.s32.totalorder %s25, 1
      %p211 = por %p209, %p210
      %p212 = scmp.ne.s32.totalorder %s203, %s204
      %p213 = scmp.eq.s32.totalorder %s25, 0
      %p214 = por %p212, %p213
      %p215 = scmp.ne.s32.totalorder %s203, %s204
      %p216 = scmp.eq.s32.totalorder %s26, 1
      %p217 = por %p215, %p216
      %p219 = scmp.ne.s32.totalorder %s204, %s218
      %p220 = scmp.eq.s32.totalorder %s26, 0
      %p221 = por %p219, %p220
      %s223 = sadd.s32 %s222, 1
      %p226 = scmp.eq.s32.totalorder %s20, 1
      %p227 = scmp.ne.s32.totalorder %s222, %s224
      %p228 = scmp.eq.s32.totalorder %s20, 0
      %p229 = por %p227, %p228
      %p230 = scmp.ne.s32.totalorder %s222, %s224
      %p231 = scmp.eq.s32.totalorder %s25, 1
      %p232 = por %p230, %p231
      %p233 = scmp.ne.s32.totalorder %s224, %s225
      %p234 = scmp.eq.s32.totalorder %s25, 0
      %p235 = por %p233, %p234
      %p236 = scmp.ne.s32.totalorder %s224, %s225
      %p237 = scmp.eq.s32.totalorder %s26, 1
      %p238 = por %p236, %p237
      %p240 = scmp.ne.s32.totalorder %s225, %s239
      %p241 = scmp.eq.s32.totalorder %s26, 0
      %p242 = por %p240, %p241
      %s244 = sadd.s32 %s243, 1
      %p247 = scmp.eq.s32.totalorder %s20, 1
      %p248 = scmp.ne.s32.totalorder %s243, %s245
      %p249 = scmp.eq.s32.totalorder %s20, 0
      %p250 = por %p248, %p249
      %p251 = scmp.ne.s32.totalorder %s243, %s245
      %p252 = scmp.eq.s32.totalorder %s25, 1
      %p253 = por %p251, %p252
      %p254 = scmp.ne.s32.totalorder %s245, %s246
      %p255 = scmp.eq.s32.totalorder %s25, 0
      %p256 = por %p254, %p255
      %p257 = scmp.ne.s32.totalorder %s245, %s246
      %p258 = scmp.eq.s32.totalorder %s26, 1
      %p259 = por %p257, %p258
      %p261 = scmp.ne.s32.totalorder %s246, %s260
      %p262 = scmp.eq.s32.totalorder %s26, 0
      %p263 = por %p261, %p262
      %s264 = ssub.s32 %s20, %s27
      %p265 = scmp.eq.s32.totalorder %s264, 0
      %s267 = sadd.s32 %s266, 1
      %s268 = scalar_select %p265, %s266, %s267
      %p271 = pneg %p265
      %p272 = scmp.eq.s32.totalorder %s20, 1
      %p273 = por %p271, %p272
      %p274 = scmp.ne.s32.totalorder %s266, %s269
      %p275 = scmp.eq.s32.totalorder %s20, 0
      %p276 = por %p274, %p275
      %p277 = scmp.ne.s32.totalorder %s266, %s269
      %p278 = scmp.eq.s32.totalorder %s25, 1
      %p279 = por %p277, %p278
      %p280 = scmp.ne.s32.totalorder %s269, %s270
      %p281 = scmp.eq.s32.totalorder %s25, 0
      %p282 = por %p280, %p281
      %p283 = scmp.ne.s32.totalorder %s269, %s270
      %p284 = scmp.eq.s32.totalorder %s26, 1
      %p285 = por %p283, %p284
      %p287 = scmp.ne.s32.totalorder %s270, %s286
      %p288 = scmp.eq.s32.totalorder %s26, 0
      %p289 = por %p287, %p288
      %p290 = scmp.le.s32.totalorder 1, %s20
      %p291 = scmp.lt.s32.totalorder %s20, 3
      %p292 = pnand %p290, %p291
      %p293 = pneg %p292
      // Predicated region
      $region9: #{encoder_forward.1} parent=5 // pred_check
        _
      $region10: #{encoder_forward.1} parent=5 // pred_check_branch
        %295 = sbr.rel (%p292) target = $region12
      $region11: #{encoder_forward.1} parent=5 // pred_region
        %s296 = ssub.s32 %s20, 1
        // Predicated region
        $region13: #{encoder_forward.1} parent=11 // pred_check
          %p297 = pneg %p67
        $region14: #{encoder_forward.1} parent=11 // pred_check_branch
          %299 = sbr.rel (%p297) target = $region16
        $region15: #{encoder_forward.1} parent=11 // pred_region
          _
        $region16: #{encoder_forward.1} parent=11 // pred_fallthru
          _
        // Predicated region
        $region17: #{encoder_forward.1} parent=11 // pred_check
          %p300 = pneg %p88
        $region18: #{encoder_forward.1} parent=11 // pred_check_branch
          %302 = sbr.rel (%p300) target = $region20
        $region19: #{encoder_forward.1} parent=11 // pred_region
          _
        $region20: #{encoder_forward.1} parent=11 // pred_fallthru
          _
        // Predicated region
        $region21: #{encoder_forward.1} parent=11 // pred_check
          %p303 = pneg %p109
        $region22: #{encoder_forward.1} parent=11 // pred_check_branch
          %305 = sbr.rel (%p303) target = $region24
        $region23: #{encoder_forward.1} parent=11 // pred_region
          _
        $region24: #{encoder_forward.1} parent=11 // pred_fallthru
          _
        // Predicated region
        $region25: #{encoder_forward.1} parent=11 // pred_check
          %p306 = pneg %p130
        $region26: #{encoder_forward.1} parent=11 // pred_check_branch
          %308 = sbr.rel (%p306) target = $region28
        $region27: #{encoder_forward.1} parent=11 // pred_region
          _
        $region28: #{encoder_forward.1} parent=11 // pred_fallthru
          _
        // Predicated region
        $region29: #{encoder_forward.1} parent=11 // pred_check
          %p309 = pneg %p151
        $region30: #{encoder_forward.1} parent=11 // pred_check_branch
          %311 = sbr.rel (%p309) target = $region32
        $region31: #{encoder_forward.1} parent=11 // pred_region
          _
        $region32: #{encoder_forward.1} parent=11 // pred_fallthru
          _
        // Predicated region
        $region33: #{encoder_forward.1} parent=11 // pred_check
          %p312 = pneg %p172
        $region34: #{encoder_forward.1} parent=11 // pred_check_branch
          %314 = sbr.rel (%p312) target = $region36
        $region35: #{encoder_forward.1} parent=11 // pred_region
          _
        $region36: #{encoder_forward.1} parent=11 // pred_fallthru
          _
        // Predicated region
        $region37: #{encoder_forward.1} parent=11 // pred_check
          %p315 = pneg %p193
        $region38: #{encoder_forward.1} parent=11 // pred_check_branch
          %317 = sbr.rel (%p315) target = $region40
        $region39: #{encoder_forward.1} parent=11 // pred_region
          _
        $region40: #{encoder_forward.1} parent=11 // pred_fallthru
          _
        // Predicated region
        $region41: #{encoder_forward.1} parent=11 // pred_check
          %p318 = pneg %p214
        $region42: #{encoder_forward.1} parent=11 // pred_check_branch
          %320 = sbr.rel (%p318) target = $region44
        $region43: #{encoder_forward.1} parent=11 // pred_region
          _
        $region44: #{encoder_forward.1} parent=11 // pred_fallthru
          _
        // Predicated region
        $region45: #{encoder_forward.1} parent=11 // pred_check
          %p321 = pneg %p235
        $region46: #{encoder_forward.1} parent=11 // pred_check_branch
          %323 = sbr.rel (%p321) target = $region48
        $region47: #{encoder_forward.1} parent=11 // pred_region
          _
        $region48: #{encoder_forward.1} parent=11 // pred_fallthru
          _
        // Predicated region
        $region49: #{encoder_forward.1} parent=11 // pred_check
          %p324 = pneg %p256
        $region50: #{encoder_forward.1} parent=11 // pred_check_branch
          %326 = sbr.rel (%p324) target = $region52
        $region51: #{encoder_forward.1} parent=11 // pred_region
          _
        $region52: #{encoder_forward.1} parent=11 // pred_fallthru
          _
      $region12: #{encoder_forward.1} parent=5 // pred_fallthru
        _
      %p327 = scmp.lt.s32.totalorder %s20, 2
      // Predicated region
      $region53: #{encoder_forward.1} parent=5 // pred_check
        %p328 = pneg %p327
      $region54: #{encoder_forward.1} parent=5 // pred_check_branch
        %330 = sbr.rel (%p328) target = $region56
      $region55: #{encoder_forward.1} parent=5 // pred_region
        // Predicated region
        $region57: #{encoder_forward.1} parent=55 // pred_check
          %p331 = pneg %p40
        $region58: #{encoder_forward.1} parent=55 // pred_check_branch
          %333 = sbr.rel (%p331) target = $region60
        $region59: #{encoder_forward.1} parent=55 // pred_region
          %p334 = scmp.lt.s32.totalorder %s20, 1
          %s335 = scalar_select %p334, %s20, 1
          %s336 = smul.addr %s335, 31
          %s337 = smul.addr %s336, 4
          %s338 = scalar_lea.vmem %s0, %s337
        $region60: #{encoder_forward.1} parent=55 // pred_fallthru
          _
      $region56: #{encoder_forward.1} parent=5 // pred_fallthru
        _
      %p339 = scmp.le.s32.totalorder 1, %s20
      %p340 = scmp.lt.s32.totalorder %s20, 3
      %p341 = pnand %p339, %p340
      %p342 = pneg %p341
      // Predicated region
      $region61: #{encoder_forward.1} parent=5 // pred_check
        _
      $region62: #{encoder_forward.1} parent=5 // pred_check_branch
        %344 = sbr.rel (%p341) target = $region64
      $region63: #{encoder_forward.1} parent=5 // pred_region
        %s345 = ssub.s32 %s20, 1
        %p346 = scmp.lt.s32.totalorder %s25, 1
        %s347 = scalar_select %p346, %s25, 1
        %s348 = smul.addr %s347, 31
        %s349 = smul.addr %s348, 4
        %s350 = scalar_lea.vmem %s0, %s349
        %p351 = pneg %p46
        %p352 = pneg %p43
        %p353 = pneg %p67
        %p354 = pneg %p64
        %p355 = pneg %p88
        %p356 = pneg %p85
        %p357 = pneg %p109
        %p358 = pneg %p106
        %p359 = pneg %p130
        %p360 = pneg %p127
        %p361 = pneg %p151
        %p362 = pneg %p148
        %p363 = pneg %p172
        %p364 = pneg %p169
        %p365 = pneg %p193
        %p366 = pneg %p190
        %p367 = pneg %p214
        %p368 = pneg %p211
        %p369 = pneg %p235
        %p370 = pneg %p232
        %p371 = pneg %p256
        %p372 = pneg %p253
        %p373 = pneg %p282
        %p374 = pneg %p279
        %s375 = sand.u32 %s269, 1
        %s376 = scalar_lea.sflag [#allocation7], %s375
        %s377 = sand.u32 %s269, 1
        %s378 = scalar_lea.vmem [#allocation6], %s377
        %p379 = scmp.lt.s32.totalorder %s25, 1
        %s380 = scalar_select %p379, %s25, 1
        %s381 = smul.addr %s380, 31
        %s382 = smul.addr %s381, 4
        %s383 = scalar_lea.vmem %s0, %s382
        %v385 = vld [vmem:[%s383] sm:$0xf]
        %v386 = vld [vmem:[%s383 + $0x4] sm:$0xf]
        %v387 = vld [vmem:[%s383 + $0x8] sm:$0xf]
        %v388 = vld [vmem:[%s383 + $0xc] sm:$0xf]
        %v389 = vld [vmem:[%s383 + $0x10] sm:$0xf]
        %v390 = vld [vmem:[%s383 + $0x14] sm:$0xf]
        %v391 = vld [vmem:[%s383 + $0x18] sm:$0xf]
        %v392 = vld [vmem:[%s383 + $0x1c] sm:$0xf]
        %v393 = vld [vmem:[%s383 + $0x20] sm:$0xf]
        %v394 = vld [vmem:[%s383 + $0x24] sm:$0xf]
        %v395 = vld [vmem:[%s383 + $0x28] sm:$0xf]
        %v396 = vld [vmem:[%s383 + $0x2c] sm:$0xf]
        %v397 = vld [vmem:[%s383 + $0x30] sm:$0xf]
        %v398 = vld [vmem:[%s383 + $0x34] sm:$0xf]
        %v399 = vld [vmem:[%s383 + $0x38] sm:$0xf]
        %v400 = vld [vmem:[%s383 + $0x3c] sm:$0xf]
        %v401 = vld [vmem:[%s383 + $0x40] sm:$0xf]
        %v402 = vld [vmem:[%s383 + $0x44] sm:$0xf]
        %v403 = vld [vmem:[%s383 + $0x48] sm:$0xf]
        %v404 = vld [vmem:[%s383 + $0x4c] sm:$0xf]
        %v405 = vld [vmem:[%s383 + $0x50] sm:$0xf]
        %v406 = vld [vmem:[%s383 + $0x54] sm:$0xf]
        %v407 = vld [vmem:[%s383 + $0x58] sm:$0xf]
        %v408 = vld [vmem:[%s383 + $0x5c] sm:$0xf]
        %v409 = vld [vmem:[%s383 + $0x60] sm:$0xf]
        %v410 = vld [vmem:[%s383 + $0x64] sm:$0xf]
        %v411 = vld [vmem:[%s383 + $0x68] sm:$0xf]
        %v412 = vld [vmem:[%s383 + $0x6c] sm:$0xf]
        %v413 = vld [vmem:[%s383 + $0x70] sm:$0xf]
        %v414 = vld [vmem:[%s383 + $0x74] sm:$0xf]
        %v415 = vld [vmem:[%s383 + $0x78] sm:$0xf]
        %v416 = vld [vmem:[%s1] sm:$0xf]
        %v417 = vld [vmem:[%s1 + $0x4] sm:$0xf]
        %v418 = vld [vmem:[%s1 + $0x8] sm:$0xf]
        %v419 = vld [vmem:[%s1 + $0xc] sm:$0x3]
        %v420 = vld [vmem:[%s2] sm:$0x1]
        %v422 = vperm.slane %v420, 0
        %v455 = vunpack.c.l.b16 %v385
        %v456 = vunpack.c.l.b16 %v386
        %v457 = vunpack.c.l.b16 %v387
        %v458 = vunpack.c.l.b16 %v388
        %v459 = vunpack.c.l.b16 %v389
        %v460 = vunpack.c.l.b16 %v390
        %v461 = vunpack.c.l.b16 %v391
        %v462 = vunpack.c.l.b16 %v392
        %v463 = vunpack.c.l.b16 %v393
        %v464 = vunpack.c.l.b16 %v394
        %v465 = vunpack.c.l.b16 %v395
        %v466 = vunpack.c.l.b16 %v396
        %v467 = vunpack.c.l.b16 %v397
        %v468 = vunpack.c.l.b16 %v398
        %v469 = vunpack.c.l.b16 %v399
        %v470 = vunpack.c.l.b16 %v400
        %v471 = vunpack.c.l.b16 %v401
        %v472 = vunpack.c.l.b16 %v402
        %v473 = vunpack.c.l.b16 %v403
        %v474 = vunpack.c.l.b16 %v404
        %v475 = vunpack.c.l.b16 %v405
        %v476 = vunpack.c.l.b16 %v406
        %v477 = vunpack.c.l.b16 %v407
        %v478 = vunpack.c.l.b16 %v408
        %v479 = vunpack.c.l.b16 %v409
        %v480 = vunpack.c.l.b16 %v410
        %v481 = vunpack.c.l.b16 %v411
        %v482 = vunpack.c.l.b16 %v412
        %v483 = vunpack.c.l.b16 %v413
        %v484 = vunpack.c.l.b16 %v414
        %v485 = vunpack.c.l.b16 %v415
        %v486 = vpack.c.b16 %v456, %v455
        %v487 = vpack.c.b16 %v458, %v457
        %v488 = vpack.c.b16 %v460, %v459
        %v489 = vpack.c.b16 %v462, %v461
        %v490 = vpack.c.b16 %v464, %v463
        %v491 = vpack.c.b16 %v466, %v465
        %v492 = vpack.c.b16 %v468, %v467
        %v493 = vpack.c.b16 %v470, %v469
        %v494 = vpack.c.b16 %v472, %v471
        %v495 = vpack.c.b16 %v474, %v473
        %v496 = vpack.c.b16 %v476, %v475
        %v497 = vpack.c.b16 %v478, %v477
        %v498 = vpack.c.b16 %v480, %v479
        %v499 = vpack.c.b16 %v482, %v481
        %v500 = vpack.c.b16 %v484, %v483
        %v501 = vpack.c.b16 %v485, %v485
        %v506 = vunpack.c.l.b16 %v416
        %v507 = vunpack.c.l.b16 %v417
        %v508 = vunpack.c.l.b16 %v418
        %v509 = vunpack.c.l.b16 %v419
        %v510 = vpack.c.b16 %v507, %v506
        %v511 = vpack.c.b16 %v509, %v508
        %vm513 = vcmask 220160
        %v515 = vsel %vm513, %v486, 0
        %v518 = vsel %vm513, %v487, 0
        %v521 = vsel %vm513, %v488, 0
        %v524 = vsel %vm513, %v489, 0
        %v527 = vsel %vm513, %v490, 0
        %v530 = vsel %vm513, %v491, 0
        %v533 = vsel %vm513, %v492, 0
        %v536 = vsel %vm513, %v493, 0
        %v539 = vsel %vm513, %v494, 0
        %v542 = vsel %vm513, %v495, 0
        %v545 = vsel %vm513, %v496, 0
        %v548 = vsel %vm513, %v497, 0
        %v551 = vsel %vm513, %v498, 0
        %v554 = vsel %vm513, %v499, 0
        %v557 = vsel %vm513, %v500, 0
        %v560 = vsel %vm513, %v501, 0
        %vm562 = vcmask 1044480
        %vm563 = vcmask 1045504
        %v564 = vsel %vm562, 4294967295, 65535
        %v565 = vsel %vm563, %v564, 0
        %v567 = vand.u32 %v511, %v565
        %569 = vmatpush.bf16.msra.mxu0 0
        %570 = vmatpush.bf16.msra.mxu0 0
        %571 = vmatpush.bf16.msra.mxu0 0
        %572 = vmatpush.bf16.msra.mxu0 0
        %573 = vmatpush.bf16.msra.mxu0 0
        %574 = vmatpush.bf16.msra.mxu0 0
        %575 = vmatpush.bf16.msra.mxu0 %v567
        %576 = vmatpush.bf16.msra.mxu0 %v510
        %577 = vmatmul.bf16.gmra.mxu0 %v515
        %v578 = vpop.f32.mrf.mxu0
        %v579 = vadd.f32 %v422, %v578
        %v580 = vpop.f32.mrf.mxu0
        %v581 = vadd.f32 %v422, %v580
        %582 = vmatmul.bf16.gmra.mxu0 %v518
        %v583 = vpop.f32.mrf.mxu0
        %v584 = vadd.f32 %v422, %v583
        %v585 = vpop.f32.mrf.mxu0
        %v586 = vadd.f32 %v422, %v585
        %587 = vmatmul.bf16.gmra.mxu0 %v521
        %v588 = vpop.f32.mrf.mxu0
        %v589 = vadd.f32 %v422, %v588
        %v590 = vpop.f32.mrf.mxu0
        %v591 = vadd.f32 %v422, %v590
        %592 = vmatmul.bf16.gmra.mxu0 %v524
        %v593 = vpop.f32.mrf.mxu0
        %v594 = vadd.f32 %v422, %v593
        %v595 = vpop.f32.mrf.mxu0
        %v596 = vadd.f32 %v422, %v595
        %597 = vmatmul.bf16.gmra.mxu0 %v527
        %v598 = vpop.f32.mrf.mxu0
        %v599 = vadd.f32 %v422, %v598
        %v600 = vpop.f32.mrf.mxu0
        %v601 = vadd.f32 %v422, %v600
        %602 = vmatmul.bf16.gmra.mxu0 %v530
        %v603 = vpop.f32.mrf.mxu0
        %v604 = vadd.f32 %v422, %v603
        %v605 = vpop.f32.mrf.mxu0
        %v606 = vadd.f32 %v422, %v605
        %607 = vmatmul.bf16.gmra.mxu0 %v533
        %v608 = vpop.f32.mrf.mxu0
        %v609 = vadd.f32 %v422, %v608
        %v610 = vpop.f32.mrf.mxu0
        %v611 = vadd.f32 %v422, %v610
        %612 = vmatmul.bf16.gmra.mxu0 %v536
        %v613 = vpop.f32.mrf.mxu0
        %v614 = vadd.f32 %v422, %v613
        %v615 = vpop.f32.mrf.mxu0
        %v616 = vadd.f32 %v422, %v615
        %617 = vmatmul.bf16.gmra.mxu0 %v539
        %v618 = vpop.f32.mrf.mxu0
        %v619 = vadd.f32 %v422, %v618
        %v620 = vpop.f32.mrf.mxu0
        %v621 = vadd.f32 %v422, %v620
        %622 = vmatmul.bf16.gmra.mxu0 %v542
        %v623 = vpop.f32.mrf.mxu0
        %v624 = vadd.f32 %v422, %v623
        %v625 = vpop.f32.mrf.mxu0
        %v626 = vadd.f32 %v422, %v625
        %627 = vmatmul.bf16.gmra.mxu0 %v545
        %v628 = vpop.f32.mrf.mxu0
        %v629 = vadd.f32 %v422, %v628
        %v630 = vpop.f32.mrf.mxu0
        %v631 = vadd.f32 %v422, %v630
        %632 = vmatmul.bf16.gmra.mxu0 %v548
        %v633 = vpop.f32.mrf.mxu0
        %v634 = vadd.f32 %v422, %v633
        %v635 = vpop.f32.mrf.mxu0
        %v636 = vadd.f32 %v422, %v635
        %637 = vmatmul.bf16.gmra.mxu0 %v551
        %v638 = vpop.f32.mrf.mxu0
        %v639 = vadd.f32 %v422, %v638
        %v640 = vpop.f32.mrf.mxu0
        %v641 = vadd.f32 %v422, %v640
        %642 = vmatmul.bf16.gmra.mxu0 %v554
        %v643 = vpop.f32.mrf.mxu0
        %v644 = vadd.f32 %v422, %v643
        %v645 = vpop.f32.mrf.mxu0
        %v646 = vadd.f32 %v422, %v645
        %647 = vmatmul.bf16.gmra.mxu0 %v557
        %v648 = vpop.f32.mrf.mxu0
        %v649 = vadd.f32 %v422, %v648
        %v650 = vpop.f32.mrf.mxu0
        %v651 = vadd.f32 %v422, %v650
        %652 = vmatmul.bf16.gmra.mxu0 %v560
        %v653 = vpop.f32.mrf.mxu0
        %v654 = vadd.f32 %v422, %v653
        %v655 = vpop.f32.mrf.mxu0
        %656 = vdwg.mxu0
        %v657 = vmax.f32 %v579, 0.0
        %v658 = vmax.f32 %v581, 0.0
        %v659 = vmax.f32 %v584, 0.0
        %v660 = vmax.f32 %v586, 0.0
        %v661 = vmax.f32 %v589, 0.0
        %v662 = vmax.f32 %v591, 0.0
        %v663 = vmax.f32 %v594, 0.0
        %v664 = vmax.f32 %v596, 0.0
        %v665 = vmax.f32 %v599, 0.0
        %v666 = vmax.f32 %v601, 0.0
        %v667 = vmax.f32 %v604, 0.0
        %v668 = vmax.f32 %v606, 0.0
        %v669 = vmax.f32 %v609, 0.0
        %v670 = vmax.f32 %v611, 0.0
        %v671 = vmax.f32 %v614, 0.0
        %v672 = vmax.f32 %v616, 0.0
        %v673 = vmax.f32 %v619, 0.0
        %v674 = vmax.f32 %v621, 0.0
        %v675 = vmax.f32 %v624, 0.0
        %v676 = vmax.f32 %v626, 0.0
        %v677 = vmax.f32 %v629, 0.0
        %v678 = vmax.f32 %v631, 0.0
        %v679 = vmax.f32 %v634, 0.0
        %v680 = vmax.f32 %v636, 0.0
        %v681 = vmax.f32 %v639, 0.0
        %v682 = vmax.f32 %v641, 0.0
        %v683 = vmax.f32 %v644, 0.0
        %v684 = vmax.f32 %v646, 0.0
        %v685 = vmax.f32 %v649, 0.0
        %v686 = vmax.f32 %v651, 0.0
        %v687 = vmax.f32 %v654, 0.0
        %vm688 = vcmask 261120
        %689 = vst.msk [vmem:[#allocation2] sm:$0xff] %vm688, %v657
        %690 = vst.msk [vmem:[#allocation2 + $0x8] sm:$0xff] %vm688, %v658
        %691 = vst.msk [vmem:[#allocation2 + $0x10] sm:$0xff] %vm688, %v659
        %692 = vst.msk [vmem:[#allocation2 + $0x18] sm:$0xff] %vm688, %v660
        %693 = vst.msk [vmem:[#allocation2 + $0x20] sm:$0xff] %vm688, %v661
        %694 = vst.msk [vmem:[#allocation2 + $0x28] sm:$0xff] %vm688, %v662
        %695 = vst.msk [vmem:[#allocation2 + $0x30] sm:$0xff] %vm688, %v663
        %696 = vst.msk [vmem:[#allocation2 + $0x38] sm:$0xff] %vm688, %v664
        %697 = vst.msk [vmem:[#allocation2 + $0x40] sm:$0xff] %vm688, %v665
        %698 = vst.msk [vmem:[#allocation2 + $0x48] sm:$0xff] %vm688, %v666
        %699 = vst.msk [vmem:[#allocation2 + $0x50] sm:$0xff] %vm688, %v667
        %700 = vst.msk [vmem:[#allocation2 + $0x58] sm:$0xff] %vm688, %v668
        %701 = vst.msk [vmem:[#allocation2 + $0x60] sm:$0xff] %vm688, %v669
        %702 = vst.msk [vmem:[#allocation2 + $0x68] sm:$0xff] %vm688, %v670
        %703 = vst.msk [vmem:[#allocation2 + $0x70] sm:$0xff] %vm688, %v671
        %704 = vst.msk [vmem:[#allocation2 + $0x78] sm:$0xff] %vm688, %v672
        %705 = vst.msk [vmem:[#allocation2 + $0x80] sm:$0xff] %vm688, %v673
        %706 = vst.msk [vmem:[#allocation2 + $0x88] sm:$0xff] %vm688, %v674
        %707 = vst.msk [vmem:[#allocation2 + $0x90] sm:$0xff] %vm688, %v675
        %708 = vst.msk [vmem:[#allocation2 + $0x98] sm:$0xff] %vm688, %v676
        %709 = vst.msk [vmem:[#allocation2 + $0xa0] sm:$0xff] %vm688, %v677
        %710 = vst.msk [vmem:[#allocation2 + $0xa8] sm:$0xff] %vm688, %v678
        %711 = vst.msk [vmem:[#allocation2 + $0xb0] sm:$0xff] %vm688, %v679
        %712 = vst.msk [vmem:[#allocation2 + $0xb8] sm:$0xff] %vm688, %v680
        %713 = vst.msk [vmem:[#allocation2 + $0xc0] sm:$0xff] %vm688, %v681
        %714 = vst.msk [vmem:[#allocation2 + $0xc8] sm:$0xff] %vm688, %v682
        %715 = vst.msk [vmem:[#allocation2 + $0xd0] sm:$0xff] %vm688, %v683
        %716 = vst.msk [vmem:[#allocation2 + $0xd8] sm:$0xff] %vm688, %v684
        %717 = vst.msk [vmem:[#allocation2 + $0xe0] sm:$0xff] %vm688, %v685
        %718 = vst.msk [vmem:[#allocation2 + $0xe8] sm:$0xff] %vm688, %v686
        %719 = vst.msk [vmem:[#allocation2 + $0xf0] sm:$0xff] %vm688, %v687
        %v720 = vld [vmem:[#allocation2] sm:$0xff]
        %v721 = vld [vmem:[#allocation2 + $0x8] sm:$0xff]
        %v722 = vld [vmem:[#allocation2 + $0x10] sm:$0xff]
        %v723 = vld [vmem:[#allocation2 + $0x18] sm:$0xff]
        %v724 = vld [vmem:[#allocation2 + $0x20] sm:$0xff]
        %v725 = vld [vmem:[#allocation2 + $0x28] sm:$0xff]
        %v726 = vld [vmem:[#allocation2 + $0x30] sm:$0xff]
        %v727 = vld [vmem:[#allocation2 + $0x38] sm:$0xff]
        %v728 = vld [vmem:[#allocation2 + $0x40] sm:$0xff]
        %v729 = vld [vmem:[#allocation2 + $0x48] sm:$0xff]
        %v730 = vld [vmem:[#allocation2 + $0x50] sm:$0xff]
        %v731 = vld [vmem:[#allocation2 + $0x58] sm:$0xff]
        %v732 = vld [vmem:[#allocation2 + $0x60] sm:$0xff]
        %v733 = vld [vmem:[#allocation2 + $0x68] sm:$0xff]
        %v734 = vld [vmem:[#allocation2 + $0x70] sm:$0xff]
        %v735 = vld [vmem:[#allocation2 + $0x78] sm:$0xff]
        %v736 = vld [vmem:[#allocation2 + $0x80] sm:$0xff]
        %v737 = vld [vmem:[#allocation2 + $0x88] sm:$0xff]
        %v738 = vld [vmem:[#allocation2 + $0x90] sm:$0xff]
        %v739 = vld [vmem:[#allocation2 + $0x98] sm:$0xff]
        %v740 = vld [vmem:[#allocation2 + $0xa0] sm:$0xff]
        %v741 = vld [vmem:[#allocation2 + $0xa8] sm:$0xff]
        %v742 = vld [vmem:[#allocation2 + $0xb0] sm:$0xff]
        %v743 = vld [vmem:[#allocation2 + $0xb8] sm:$0xff]
        %v744 = vld [vmem:[#allocation2 + $0xc0] sm:$0xff]
        %v745 = vld [vmem:[#allocation2 + $0xc8] sm:$0xff]
        %v746 = vpack.c.bf16 %v721, %v720
        %v747 = vpack.c.bf16 %v723, %v722
        %v748 = vpack.c.bf16 %v725, %v724
        %v749 = vpack.c.bf16 %v727, %v726
        %v750 = vpack.c.bf16 %v729, %v728
        %v751 = vpack.c.bf16 %v731, %v730
        %v752 = vpack.c.bf16 %v733, %v732
        %v753 = vpack.c.bf16 %v735, %v734
        %v754 = vpack.c.bf16 %v737, %v736
        %v755 = vpack.c.bf16 %v739, %v738
        %v756 = vpack.c.bf16 %v741, %v740
        %v757 = vpack.c.bf16 %v743, %v742
        %v758 = vpack.c.bf16 %v745, %v744
        %v759 = vld [vmem:[%s3] sm:$0xf]
        %v760 = vld [vmem:[%s3 + $0x4] sm:$0xf]
        %v761 = vld [vmem:[%s3 + $0x8] sm:$0xf]
        %v762 = vld [vmem:[%s3 + $0xc] sm:$0xf]
        %v763 = vld [vmem:[#allocation2 + $0x1] sm:$0xff]
        %v764 = vld [vmem:[#allocation2 + $0x9] sm:$0xff]
        %v765 = vld [vmem:[#allocation2 + $0x11] sm:$0xff]
        %v766 = vld [vmem:[#allocation2 + $0x19] sm:$0xff]
        %v767 = vld [vmem:[#allocation2 + $0x21] sm:$0xff]
        %v768 = vld [vmem:[#allocation2 + $0x29] sm:$0xff]
        %v769 = vld [vmem:[#allocation2 + $0x31] sm:$0xff]
        %v770 = vld [vmem:[#allocation2 + $0x39] sm:$0xff]
        %v771 = vld [vmem:[#allocation2 + $0x41] sm:$0xff]
        %v772 = vld [vmem:[#allocation2 + $0x49] sm:$0xff]
        %v773 = vld [vmem:[#allocation2 + $0x51] sm:$0xff]
        %v774 = vld [vmem:[#allocation2 + $0x59] sm:$0xff]
        %v775 = vld [vmem:[#allocation2 + $0x61] sm:$0xff]
        %v776 = vld [vmem:[#allocation2 + $0x69] sm:$0xff]
        %v777 = vld [vmem:[#allocation2 + $0x71] sm:$0xff]
        %v778 = vld [vmem:[#allocation2 + $0x79] sm:$0xff]
        %v779 = vld [vmem:[#allocation2 + $0x81] sm:$0xff]
        %v780 = vld [vmem:[#allocation2 + $0x89] sm:$0xff]
        %v781 = vld [vmem:[#allocation2 + $0x91] sm:$0xff]
        %v782 = vld [vmem:[#allocation2 + $0x99] sm:$0xff]
        %v783 = vld [vmem:[#allocation2 + $0xa1] sm:$0xff]
        %v784 = vld [vmem:[#allocation2 + $0xa9] sm:$0xff]
        %v785 = vld [vmem:[#allocation2 + $0xb1] sm:$0xff]
        %v786 = vld [vmem:[#allocation2 + $0xb9] sm:$0xff]
        %v787 = vld [vmem:[#allocation2 + $0xc1] sm:$0xff]
        %v788 = vld [vmem:[#allocation2 + $0xc9] sm:$0xff]
        %v789 = vpack.c.bf16 %v764, %v763
        %v790 = vpack.c.bf16 %v766, %v765
        %v791 = vpack.c.bf16 %v768, %v767
        %v792 = vpack.c.bf16 %v770, %v769
        %v793 = vpack.c.bf16 %v772, %v771
        %v794 = vpack.c.bf16 %v774, %v773
        %v795 = vpack.c.bf16 %v776, %v775
        %v796 = vpack.c.bf16 %v778, %v777
        %v797 = vpack.c.bf16 %v780, %v779
        %v798 = vpack.c.bf16 %v782, %v781
        %v799 = vpack.c.bf16 %v784, %v783
        %v800 = vpack.c.bf16 %v786, %v785
        %v801 = vpack.c.bf16 %v788, %v787
        %s802 = scalar_lea.vmem %s3, 16
        %v803 = vld [vmem:[%s802] sm:$0xf]
        %v804 = vld [vmem:[%s802 + $0x4] sm:$0xf]
        %v805 = vld [vmem:[%s802 + $0x8] sm:$0xf]
        %v806 = vld [vmem:[%s802 + $0xc] sm:$0xf]
        %v811 = vunpack.c.l.b16 %v803
        %v812 = vunpack.c.l.b16 %v804
        %v813 = vunpack.c.l.b16 %v805
        %v814 = vunpack.c.l.b16 %v806
        %v815 = vpack.c.b16 %v812, %v811
        %v816 = vpack.c.b16 %v814, %v813
        %v820 = vsel %vm688, %v789, 0
        %v823 = vsel %vm688, %v790, 0
        %v826 = vsel %vm688, %v791, 0
        %v829 = vsel %vm688, %v792, 0
        %v832 = vsel %vm688, %v793, 0
        %v835 = vsel %vm688, %v794, 0
        %v838 = vsel %vm688, %v795, 0
        %v841 = vsel %vm688, %v796, 0
        %v844 = vsel %vm688, %v797, 0
        %v847 = vsel %vm688, %v798, 0
        %v850 = vsel %vm688, %v799, 0
        %v853 = vsel %vm688, %v800, 0
        %v856 = vsel %vm688, %v801, 0
        %858 = vmatpush.bf16.msra.mxu0 0
        %859 = vmatpush.bf16.msra.mxu0 0
        %860 = vmatpush.bf16.msra.mxu0 0
        %861 = vmatpush.bf16.msra.mxu0 0
        %862 = vmatpush.bf16.msra.mxu0 0
        %863 = vmatpush.bf16.msra.mxu0 0
        %864 = vmatpush.bf16.msra.mxu0 %v816
        %865 = vmatpush.bf16.msra.mxu0 %v815
        %866 = vmatmul.bf16.gmra.mxu0 %v820
        %v867 = vpop.f32.mrf.mxu0
        %v868 = vadd.f32 0.0, %v867
        %v869 = vpop.f32.mrf.mxu0
        %v870 = vadd.f32 0.0, %v869
        %871 = vmatmul.bf16.gmra.mxu0 %v823
        %v872 = vpop.f32.mrf.mxu0
        %v873 = vadd.f32 0.0, %v872
        %v874 = vpop.f32.mrf.mxu0
        %v875 = vadd.f32 0.0, %v874
        %876 = vmatmul.bf16.gmra.mxu0 %v826
        %v877 = vpop.f32.mrf.mxu0
        %v878 = vadd.f32 0.0, %v877
        %v879 = vpop.f32.mrf.mxu0
        %v880 = vadd.f32 0.0, %v879
        %881 = vmatmul.bf16.gmra.mxu0 %v829
        %v882 = vpop.f32.mrf.mxu0
        %v883 = vadd.f32 0.0, %v882
        %v884 = vpop.f32.mrf.mxu0
        %v885 = vadd.f32 0.0, %v884
        %886 = vmatmul.bf16.gmra.mxu0 %v832
        %v887 = vpop.f32.mrf.mxu0
        %v888 = vadd.f32 0.0, %v887
        %v889 = vpop.f32.mrf.mxu0
        %v890 = vadd.f32 0.0, %v889
        %891 = vmatmul.bf16.gmra.mxu0 %v835
        %v892 = vpop.f32.mrf.mxu0
        %v893 = vadd.f32 0.0, %v892
        %v894 = vpop.f32.mrf.mxu0
        %v895 = vadd.f32 0.0, %v894
        %896 = vmatmul.bf16.gmra.mxu0 %v838
        %v897 = vpop.f32.mrf.mxu0
        %v898 = vadd.f32 0.0, %v897
        %v899 = vpop.f32.mrf.mxu0
        %v900 = vadd.f32 0.0, %v899
        %901 = vmatmul.bf16.gmra.mxu0 %v841
        %v902 = vpop.f32.mrf.mxu0
        %v903 = vadd.f32 0.0, %v902
        %v904 = vpop.f32.mrf.mxu0
        %v905 = vadd.f32 0.0, %v904
        %906 = vmatmul.bf16.gmra.mxu0 %v844
        %v907 = vpop.f32.mrf.mxu0
        %v908 = vadd.f32 0.0, %v907
        %v909 = vpop.f32.mrf.mxu0
        %v910 = vadd.f32 0.0, %v909
        %911 = vmatmul.bf16.gmra.mxu0 %v847
        %v912 = vpop.f32.mrf.mxu0
        %v913 = vadd.f32 0.0, %v912
        %v914 = vpop.f32.mrf.mxu0
        %v915 = vadd.f32 0.0, %v914
        %916 = vmatmul.bf16.gmra.mxu0 %v850
        %v917 = vpop.f32.mrf.mxu0
        %v918 = vadd.f32 0.0, %v917
        %v919 = vpop.f32.mrf.mxu0
        %v920 = vadd.f32 0.0, %v919
        %921 = vmatmul.bf16.gmra.mxu0 %v853
        %v922 = vpop.f32.mrf.mxu0
        %v923 = vadd.f32 0.0, %v922
        %v924 = vpop.f32.mrf.mxu0
        %v925 = vadd.f32 0.0, %v924
        %926 = vmatmul.bf16.gmra.mxu0 %v856
        %v927 = vpop.f32.mrf.mxu0
        %v928 = vadd.f32 0.0, %v927
        %v929 = vpop.f32.mrf.mxu0
        %v930 = vadd.f32 0.0, %v929
        %931 = vdwg.mxu0
        %v936 = vunpack.c.l.b16 %v759
        %v937 = vunpack.c.l.b16 %v760
        %v938 = vunpack.c.l.b16 %v761
        %v939 = vunpack.c.l.b16 %v762
        %v940 = vpack.c.b16 %v937, %v936
        %v941 = vpack.c.b16 %v939, %v938
        %v945 = vsel %vm688, %v746, 0
        %v948 = vsel %vm688, %v747, 0
        %v951 = vsel %vm688, %v748, 0
        %v954 = vsel %vm688, %v749, 0
        %v957 = vsel %vm688, %v750, 0
        %v960 = vsel %vm688, %v751, 0
        %v963 = vsel %vm688, %v752, 0
        %v966 = vsel %vm688, %v753, 0
        %v969 = vsel %vm688, %v754, 0
        %v972 = vsel %vm688, %v755, 0
        %v975 = vsel %vm688, %v756, 0
        %v978 = vsel %vm688, %v757, 0
        %v981 = vsel %vm688, %v758, 0
        %983 = vmatpush.bf16.msra.mxu0 0
        %984 = vmatpush.bf16.msra.mxu0 0
        %985 = vmatpush.bf16.msra.mxu0 0
        %986 = vmatpush.bf16.msra.mxu0 0
        %987 = vmatpush.bf16.msra.mxu0 0
        %988 = vmatpush.bf16.msra.mxu0 0
        %989 = vmatpush.bf16.msra.mxu0 %v941
        %990 = vmatpush.bf16.msra.mxu0 %v940
        %991 = vmatmul.bf16.gmra.mxu0 %v945
        %v992 = vpop.f32.mrf.mxu0
        %v993 = vadd.f32 %v868, %v992
        %v994 = vpop.f32.mrf.mxu0
        %v995 = vadd.f32 %v870, %v994
        %996 = vmatmul.bf16.gmra.mxu0 %v948
        %v997 = vpop.f32.mrf.mxu0
        %v998 = vadd.f32 %v873, %v997
        %v999 = vpop.f32.mrf.mxu0
        %v1000 = vadd.f32 %v875, %v999
        %1001 = vmatmul.bf16.gmra.mxu0 %v951
        %v1002 = vpop.f32.mrf.mxu0
        %v1003 = vadd.f32 %v878, %v1002
        %v1004 = vpop.f32.mrf.mxu0
        %v1005 = vadd.f32 %v880, %v1004
        %1006 = vmatmul.bf16.gmra.mxu0 %v954
        %v1007 = vpop.f32.mrf.mxu0
        %v1008 = vadd.f32 %v883, %v1007
        %v1009 = vpop.f32.mrf.mxu0
        %v1010 = vadd.f32 %v885, %v1009
        %1011 = vmatmul.bf16.gmra.mxu0 %v957
        %v1012 = vpop.f32.mrf.mxu0
        %v1013 = vadd.f32 %v888, %v1012
        %v1014 = vpop.f32.mrf.mxu0
        %v1015 = vadd.f32 %v890, %v1014
        %1016 = vmatmul.bf16.gmra.mxu0 %v960
        %v1017 = vpop.f32.mrf.mxu0
        %v1018 = vadd.f32 %v893, %v1017
        %v1019 = vpop.f32.mrf.mxu0
        %v1020 = vadd.f32 %v895, %v1019
        %1021 = vmatmul.bf16.gmra.mxu0 %v963
        %v1022 = vpop.f32.mrf.mxu0
        %v1023 = vadd.f32 %v898, %v1022
        %v1024 = vpop.f32.mrf.mxu0
        %v1025 = vadd.f32 %v900, %v1024
        %1026 = vmatmul.bf16.gmra.mxu0 %v966
        %v1027 = vpop.f32.mrf.mxu0
        %v1028 = vadd.f32 %v903, %v1027
        %v1029 = vpop.f32.mrf.mxu0
        %v1030 = vadd.f32 %v905, %v1029
        %1031 = vmatmul.bf16.gmra.mxu0 %v969
        %v1032 = vpop.f32.mrf.mxu0
        %v1033 = vadd.f32 %v908, %v1032
        %v1034 = vpop.f32.mrf.mxu0
        %v1035 = vadd.f32 %v910, %v1034
        %1036 = vmatmul.bf16.gmra.mxu0 %v972
        %v1037 = vpop.f32.mrf.mxu0
        %v1038 = vadd.f32 %v913, %v1037
        %v1039 = vpop.f32.mrf.mxu0
        %v1040 = vadd.f32 %v915, %v1039
        %1041 = vmatmul.bf16.gmra.mxu0 %v975
        %v1042 = vpop.f32.mrf.mxu0
        %v1043 = vadd.f32 %v918, %v1042
        %v1044 = vpop.f32.mrf.mxu0
        %v1045 = vadd.f32 %v920, %v1044
        %1046 = vmatmul.bf16.gmra.mxu0 %v978
        %v1047 = vpop.f32.mrf.mxu0
        %v1048 = vadd.f32 %v923, %v1047
        %v1049 = vpop.f32.mrf.mxu0
        %v1050 = vadd.f32 %v925, %v1049
        %1051 = vmatmul.bf16.gmra.mxu0 %v981
        %v1052 = vpop.f32.mrf.mxu0
        %v1053 = vadd.f32 %v928, %v1052
        %v1054 = vpop.f32.mrf.mxu0
        %v1055 = vadd.f32 %v930, %v1054
        %1056 = vdwg.mxu0
        %v1057 = vld [vmem:[#allocation2 + $0x2] sm:$0xff]
        %v1058 = vld [vmem:[#allocation2 + $0xa] sm:$0xff]
        %v1059 = vld [vmem:[#allocation2 + $0x12] sm:$0xff]
        %v1060 = vld [vmem:[#allocation2 + $0x1a] sm:$0xff]
        %v1061 = vld [vmem:[#allocation2 + $0x22] sm:$0xff]
        %v1062 = vld [vmem:[#allocation2 + $0x2a] sm:$0xff]
        %v1063 = vld [vmem:[#allocation2 + $0x32] sm:$0xff]
        %v1064 = vld [vmem:[#allocation2 + $0x3a] sm:$0xff]
        %v1065 = vld [vmem:[#allocation2 + $0x42] sm:$0xff]
        %v1066 = vld [vmem:[#allocation2 + $0x4a] sm:$0xff]
        %v1067 = vld [vmem:[#allocation2 + $0x52] sm:$0xff]
        %v1068 = vld [vmem:[#allocation2 + $0x5a] sm:$0xff]
        %v1069 = vld [vmem:[#allocation2 + $0x62] sm:$0xff]
        %v1070 = vld [vmem:[#allocation2 + $0x6a] sm:$0xff]
        %v1071 = vld [vmem:[#allocation2 + $0x72] sm:$0xff]
        %v1072 = vld [vmem:[#allocation2 + $0x7a] sm:$0xff]
        %v1073 = vld [vmem:[#allocation2 + $0x82] sm:$0xff]
        %v1074 = vld [vmem:[#allocation2 + $0x8a] sm:$0xff]
        %v1075 = vld [vmem:[#allocation2 + $0x92] sm:$0xff]
        %v1076 = vld [vmem:[#allocation2 + $0x9a] sm:$0xff]
        %v1077 = vld [vmem:[#allocation2 + $0xa2] sm:$0xff]
        %v1078 = vld [vmem:[#allocation2 + $0xaa] sm:$0xff]
        %v1079 = vld [vmem:[#allocation2 + $0xb2] sm:$0xff]
        %v1080 = vld [vmem:[#allocation2 + $0xba] sm:$0xff]
        %v1081 = vld [vmem:[#allocation2 + $0xc2] sm:$0xff]
        %v1082 = vld [vmem:[#allocation2 + $0xca] sm:$0xff]
        %v1083 = vpack.c.bf16 %v1058, %v1057
        %v1084 = vpack.c.bf16 %v1060, %v1059
        %v1085 = vpack.c.bf16 %v1062, %v1061
        %v1086 = vpack.c.bf16 %v1064, %v1063
        %v1087 = vpack.c.bf16 %v1066, %v1065
        %v1088 = vpack.c.bf16 %v1068, %v1067
        %v1089 = vpack.c.bf16 %v1070, %v1069
        %v1090 = vpack.c.bf16 %v1072, %v1071
        %v1091 = vpack.c.bf16 %v1074, %v1073
        %v1092 = vpack.c.bf16 %v1076, %v1075
        %v1093 = vpack.c.bf16 %v1078, %v1077
        %v1094 = vpack.c.bf16 %v1080, %v1079
        %v1095 = vpack.c.bf16 %v1082, %v1081
        %s1096 = scalar_lea.vmem %s3, 32
        %v1097 = vld [vmem:[%s1096] sm:$0xf]
        %v1098 = vld [vmem:[%s1096 + $0x4] sm:$0xf]
        %v1099 = vld [vmem:[%s1096 + $0x8] sm:$0xf]
        %v1100 = vld [vmem:[%s1096 + $0xc] sm:$0xf]
        %v1105 = vunpack.c.l.b16 %v1097
        %v1106 = vunpack.c.l.b16 %v1098
        %v1107 = vunpack.c.l.b16 %v1099
        %v1108 = vunpack.c.l.b16 %v1100
        %v1109 = vpack.c.b16 %v1106, %v1105
        %v1110 = vpack.c.b16 %v1108, %v1107
        %v1114 = vsel %vm688, %v1083, 0
        %v1117 = vsel %vm688, %v1084, 0
        %v1120 = vsel %vm688, %v1085, 0
        %v1123 = vsel %vm688, %v1086, 0
        %v1126 = vsel %vm688, %v1087, 0
        %v1129 = vsel %vm688, %v1088, 0
        %v1132 = vsel %vm688, %v1089, 0
        %v1135 = vsel %vm688, %v1090, 0
        %v1138 = vsel %vm688, %v1091, 0
        %v1141 = vsel %vm688, %v1092, 0
        %v1144 = vsel %vm688, %v1093, 0
        %v1147 = vsel %vm688, %v1094, 0
        %v1150 = vsel %vm688, %v1095, 0
        %1152 = vmatpush.bf16.msra.mxu0 0
        %1153 = vmatpush.bf16.msra.mxu0 0
        %1154 = vmatpush.bf16.msra.mxu0 0
        %1155 = vmatpush.bf16.msra.mxu0 0
        %1156 = vmatpush.bf16.msra.mxu0 0
        %1157 = vmatpush.bf16.msra.mxu0 0
        %1158 = vmatpush.bf16.msra.mxu0 %v1110
        %1159 = vmatpush.bf16.msra.mxu0 %v1109
        %1160 = vmatmul.bf16.gmra.mxu0 %v1114
        %v1161 = vpop.f32.mrf.mxu0
        %v1162 = vadd.f32 0.0, %v1161
        %v1163 = vpop.f32.mrf.mxu0
        %v1164 = vadd.f32 0.0, %v1163
        %1165 = vmatmul.bf16.gmra.mxu0 %v1117
        %v1166 = vpop.f32.mrf.mxu0
        %v1167 = vadd.f32 0.0, %v1166
        %v1168 = vpop.f32.mrf.mxu0
        %v1169 = vadd.f32 0.0, %v1168
        %1170 = vmatmul.bf16.gmra.mxu0 %v1120
        %v1171 = vpop.f32.mrf.mxu0
        %v1172 = vadd.f32 0.0, %v1171
        %v1173 = vpop.f32.mrf.mxu0
        %v1174 = vadd.f32 0.0, %v1173
        %1175 = vmatmul.bf16.gmra.mxu0 %v1123
        %v1176 = vpop.f32.mrf.mxu0
        %v1177 = vadd.f32 0.0, %v1176
        %v1178 = vpop.f32.mrf.mxu0
        %v1179 = vadd.f32 0.0, %v1178
        %1180 = vmatmul.bf16.gmra.mxu0 %v1126
        %v1181 = vpop.f32.mrf.mxu0
        %v1182 = vadd.f32 0.0, %v1181
        %v1183 = vpop.f32.mrf.mxu0
        %v1184 = vadd.f32 0.0, %v1183
        %1185 = vmatmul.bf16.gmra.mxu0 %v1129
        %v1186 = vpop.f32.mrf.mxu0
        %v1187 = vadd.f32 0.0, %v1186
        %v1188 = vpop.f32.mrf.mxu0
        %v1189 = vadd.f32 0.0, %v1188
        %1190 = vmatmul.bf16.gmra.mxu0 %v1132
        %v1191 = vpop.f32.mrf.mxu0
        %v1192 = vadd.f32 0.0, %v1191
        %v1193 = vpop.f32.mrf.mxu0
        %v1194 = vadd.f32 0.0, %v1193
        %1195 = vmatmul.bf16.gmra.mxu0 %v1135
        %v1196 = vpop.f32.mrf.mxu0
        %v1197 = vadd.f32 0.0, %v1196
        %v1198 = vpop.f32.mrf.mxu0
        %v1199 = vadd.f32 0.0, %v1198
        %1200 = vmatmul.bf16.gmra.mxu0 %v1138
        %v1201 = vpop.f32.mrf.mxu0
        %v1202 = vadd.f32 0.0, %v1201
        %v1203 = vpop.f32.mrf.mxu0
        %v1204 = vadd.f32 0.0, %v1203
        %1205 = vmatmul.bf16.gmra.mxu0 %v1141
        %v1206 = vpop.f32.mrf.mxu0
        %v1207 = vadd.f32 0.0, %v1206
        %v1208 = vpop.f32.mrf.mxu0
        %v1209 = vadd.f32 0.0, %v1208
        %1210 = vmatmul.bf16.gmra.mxu0 %v1144
        %v1211 = vpop.f32.mrf.mxu0
        %v1212 = vadd.f32 0.0, %v1211
        %v1213 = vpop.f32.mrf.mxu0
        %v1214 = vadd.f32 0.0, %v1213
        %1215 = vmatmul.bf16.gmra.mxu0 %v1147
        %v1216 = vpop.f32.mrf.mxu0
        %v1217 = vadd.f32 0.0, %v1216
        %v1218 = vpop.f32.mrf.mxu0
        %v1219 = vadd.f32 0.0, %v1218
        %1220 = vmatmul.bf16.gmra.mxu0 %v1150
        %v1221 = vpop.f32.mrf.mxu0
        %v1222 = vadd.f32 0.0, %v1221
        %v1223 = vpop.f32.mrf.mxu0
        %v1224 = vadd.f32 0.0, %v1223
        %1225 = vdwg.mxu0
        %v1226 = vadd.f32 %v993, %v1162
        %v1227 = vadd.f32 %v995, %v1164
        %v1228 = vadd.f32 %v998, %v1167
        %v1229 = vadd.f32 %v1000, %v1169
        %v1230 = vadd.f32 %v1003, %v1172
        %v1231 = vadd.f32 %v1005, %v1174
        %v1232 = vadd.f32 %v1008, %v1177
        %v1233 = vadd.f32 %v1010, %v1179
        %v1234 = vadd.f32 %v1013, %v1182
        %v1235 = vadd.f32 %v1015, %v1184
        %v1236 = vadd.f32 %v1018, %v1187
        %v1237 = vadd.f32 %v1020, %v1189
        %v1238 = vadd.f32 %v1023, %v1192
        %v1239 = vadd.f32 %v1025, %v1194
        %v1240 = vadd.f32 %v1028, %v1197
        %v1241 = vadd.f32 %v1030, %v1199
        %v1242 = vadd.f32 %v1033, %v1202
        %v1243 = vadd.f32 %v1035, %v1204
        %v1244 = vadd.f32 %v1038, %v1207
        %v1245 = vadd.f32 %v1040, %v1209
        %v1246 = vadd.f32 %v1043, %v1212
        %v1247 = vadd.f32 %v1045, %v1214
        %v1248 = vadd.f32 %v1048, %v1217
        %v1249 = vadd.f32 %v1050, %v1219
        %v1250 = vadd.f32 %v1053, %v1222
        %v1251 = vadd.f32 %v1055, %v1224
        %v1252 = vld [vmem:[#allocation2 + $0x10] sm:$0xff]
        %v1253 = vld [vmem:[#allocation2 + $0x18] sm:$0xff]
        %v1254 = vld [vmem:[#allocation2 + $0x20] sm:$0xff]
        %v1255 = vld [vmem:[#allocation2 + $0x28] sm:$0xff]
        %v1256 = vld [vmem:[#allocation2 + $0x30] sm:$0xff]
        %v1257 = vld [vmem:[#allocation2 + $0x38] sm:$0xff]
        %v1258 = vld [vmem:[#allocation2 + $0x40] sm:$0xff]
        %v1259 = vld [vmem:[#allocation2 + $0x48] sm:$0xff]
        %v1260 = vld [vmem:[#allocation2 + $0x50] sm:$0xff]
        %v1261 = vld [vmem:[#allocation2 + $0x58] sm:$0xff]
        %v1262 = vld [vmem:[#allocation2 + $0x60] sm:$0xff]
        %v1263 = vld [vmem:[#allocation2 + $0x68] sm:$0xff]
        %v1264 = vld [vmem:[#allocation2 + $0x70] sm:$0xff]
        %v1265 = vld [vmem:[#allocation2 + $0x78] sm:$0xff]
        %v1266 = vld [vmem:[#allocation2 + $0x80] sm:$0xff]
        %v1267 = vld [vmem:[#allocation2 + $0x88] sm:$0xff]
        %v1268 = vld [vmem:[#allocation2 + $0x90] sm:$0xff]
        %v1269 = vld [vmem:[#allocation2 + $0x98] sm:$0xff]
        %v1270 = vld [vmem:[#allocation2 + $0xa0] sm:$0xff]
        %v1271 = vld [vmem:[#allocation2 + $0xa8] sm:$0xff]
        %v1272 = vld [vmem:[#allocation2 + $0xb0] sm:$0xff]
        %v1273 = vld [vmem:[#allocation2 + $0xb8] sm:$0xff]
        %v1274 = vld [vmem:[#allocation2 + $0xc0] sm:$0xff]
        %v1275 = vld [vmem:[#allocation2 + $0xc8] sm:$0xff]
        %v1276 = vld [vmem:[#allocation2 + $0xd0] sm:$0xff]
        %v1277 = vld [vmem:[#allocation2 + $0xd8] sm:$0xff]
        %v1278 = vpack.c.bf16 %v1253, %v1252
        %v1279 = vpack.c.bf16 %v1255, %v1254
        %v1280 = vpack.c.bf16 %v1257, %v1256
        %v1281 = vpack.c.bf16 %v1259, %v1258
        %v1282 = vpack.c.bf16 %v1261, %v1260
        %v1283 = vpack.c.bf16 %v1263, %v1262
        %v1284 = vpack.c.bf16 %v1265, %v1264
        %v1285 = vpack.c.bf16 %v1267, %v1266
        %v1286 = vpack.c.bf16 %v1269, %v1268
        %v1287 = vpack.c.bf16 %v1271, %v1270
        %v1288 = vpack.c.bf16 %v1273, %v1272
        %v1289 = vpack.c.bf16 %v1275, %v1274
        %v1290 = vpack.c.bf16 %v1277, %v1276
        %s1291 = scalar_lea.vmem %s3, 48
        %v1292 = vld [vmem:[%s1291] sm:$0xf]
        %v1293 = vld [vmem:[%s1291 + $0x4] sm:$0xf]
        %v1294 = vld [vmem:[%s1291 + $0x8] sm:$0xf]
        %v1295 = vld [vmem:[%s1291 + $0xc] sm:$0xf]
        %v1300 = vunpack.c.l.b16 %v1292
        %v1301 = vunpack.c.l.b16 %v1293
        %v1302 = vunpack.c.l.b16 %v1294
        %v1303 = vunpack.c.l.b16 %v1295
        %v1304 = vpack.c.b16 %v1301, %v1300
        %v1305 = vpack.c.b16 %v1303, %v1302
        %v1309 = vsel %vm688, %v1278, 0
        %v1312 = vsel %vm688, %v1279, 0
        %v1315 = vsel %vm688, %v1280, 0
        %v1318 = vsel %vm688, %v1281, 0
        %v1321 = vsel %vm688, %v1282, 0
        %v1324 = vsel %vm688, %v1283, 0
        %v1327 = vsel %vm688, %v1284, 0
        %v1330 = vsel %vm688, %v1285, 0
        %v1333 = vsel %vm688, %v1286, 0
        %v1336 = vsel %vm688, %v1287, 0
        %v1339 = vsel %vm688, %v1288, 0
        %v1342 = vsel %vm688, %v1289, 0
        %v1345 = vsel %vm688, %v1290, 0
        %1347 = vmatpush.bf16.msra.mxu0 0
        %1348 = vmatpush.bf16.msra.mxu0 0
        %1349 = vmatpush.bf16.msra.mxu0 0
        %1350 = vmatpush.bf16.msra.mxu0 0
        %1351 = vmatpush.bf16.msra.mxu0 0
        %1352 = vmatpush.bf16.msra.mxu0 0
        %1353 = vmatpush.bf16.msra.mxu0 %v1305
        %1354 = vmatpush.bf16.msra.mxu0 %v1304
        %1355 = vmatmul.bf16.gmra.mxu0 %v1309
        %v1356 = vpop.f32.mrf.mxu0
        %v1357 = vadd.f32 0.0, %v1356
        %v1358 = vpop.f32.mrf.mxu0
        %v1359 = vadd.f32 0.0, %v1358
        %1360 = vmatmul.bf16.gmra.mxu0 %v1312
        %v1361 = vpop.f32.mrf.mxu0
        %v1362 = vadd.f32 0.0, %v1361
        %v1363 = vpop.f32.mrf.mxu0
        %v1364 = vadd.f32 0.0, %v1363
        %1365 = vmatmul.bf16.gmra.mxu0 %v1315
        %v1366 = vpop.f32.mrf.mxu0
        %v1367 = vadd.f32 0.0, %v1366
        %v1368 = vpop.f32.mrf.mxu0
        %v1369 = vadd.f32 0.0, %v1368
        %1370 = vmatmul.bf16.gmra.mxu0 %v1318
        %v1371 = vpop.f32.mrf.mxu0
        %v1372 = vadd.f32 0.0, %v1371
        %v1373 = vpop.f32.mrf.mxu0
        %v1374 = vadd.f32 0.0, %v1373
        %1375 = vmatmul.bf16.gmra.mxu0 %v1321
        %v1376 = vpop.f32.mrf.mxu0
        %v1377 = vadd.f32 0.0, %v1376
        %v1378 = vpop.f32.mrf.mxu0
        %v1379 = vadd.f32 0.0, %v1378
        %1380 = vmatmul.bf16.gmra.mxu0 %v1324
        %v1381 = vpop.f32.mrf.mxu0
        %v1382 = vadd.f32 0.0, %v1381
        %v1383 = vpop.f32.mrf.mxu0
        %v1384 = vadd.f32 0.0, %v1383
        %1385 = vmatmul.bf16.gmra.mxu0 %v1327
        %v1386 = vpop.f32.mrf.mxu0
        %v1387 = vadd.f32 0.0, %v1386
        %v1388 = vpop.f32.mrf.mxu0
        %v1389 = vadd.f32 0.0, %v1388
        %1390 = vmatmul.bf16.gmra.mxu0 %v1330
        %v1391 = vpop.f32.mrf.mxu0
        %v1392 = vadd.f32 0.0, %v1391
        %v1393 = vpop.f32.mrf.mxu0
        %v1394 = vadd.f32 0.0, %v1393
        %1395 = vmatmul.bf16.gmra.mxu0 %v1333
        %v1396 = vpop.f32.mrf.mxu0
        %v1397 = vadd.f32 0.0, %v1396
        %v1398 = vpop.f32.mrf.mxu0
        %v1399 = vadd.f32 0.0, %v1398
        %1400 = vmatmul.bf16.gmra.mxu0 %v1336
        %v1401 = vpop.f32.mrf.mxu0
        %v1402 = vadd.f32 0.0, %v1401
        %v1403 = vpop.f32.mrf.mxu0
        %v1404 = vadd.f32 0.0, %v1403
        %1405 = vmatmul.bf16.gmra.mxu0 %v1339
        %v1406 = vpop.f32.mrf.mxu0
        %v1407 = vadd.f32 0.0, %v1406
        %v1408 = vpop.f32.mrf.mxu0
        %v1409 = vadd.f32 0.0, %v1408
        %1410 = vmatmul.bf16.gmra.mxu0 %v1342
        %v1411 = vpop.f32.mrf.mxu0
        %v1412 = vadd.f32 0.0, %v1411
        %v1413 = vpop.f32.mrf.mxu0
        %v1414 = vadd.f32 0.0, %v1413
        %1415 = vmatmul.bf16.gmra.mxu0 %v1345
        %v1416 = vpop.f32.mrf.mxu0
        %v1417 = vadd.f32 0.0, %v1416
        %v1418 = vpop.f32.mrf.mxu0
        %v1419 = vadd.f32 0.0, %v1418
        %1420 = vdwg.mxu0
        %v1421 = vadd.f32 %v1226, %v1357
        %v1422 = vadd.f32 %v1227, %v1359
        %v1423 = vadd.f32 %v1228, %v1362
        %v1424 = vadd.f32 %v1229, %v1364
        %v1425 = vadd.f32 %v1230, %v1367
        %v1426 = vadd.f32 %v1231, %v1369
        %v1427 = vadd.f32 %v1232, %v1372
        %v1428 = vadd.f32 %v1233, %v1374
        %v1429 = vadd.f32 %v1234, %v1377
        %v1430 = vadd.f32 %v1235, %v1379
        %v1431 = vadd.f32 %v1236, %v1382
        %v1432 = vadd.f32 %v1237, %v1384
        %v1433 = vadd.f32 %v1238, %v1387
        %v1434 = vadd.f32 %v1239, %v1389
        %v1435 = vadd.f32 %v1240, %v1392
        %v1436 = vadd.f32 %v1241, %v1394
        %v1437 = vadd.f32 %v1242, %v1397
        %v1438 = vadd.f32 %v1243, %v1399
        %v1439 = vadd.f32 %v1244, %v1402
        %v1440 = vadd.f32 %v1245, %v1404
        %v1441 = vadd.f32 %v1246, %v1407
        %v1442 = vadd.f32 %v1247, %v1409
        %v1443 = vadd.f32 %v1248, %v1412
        %v1444 = vadd.f32 %v1249, %v1414
        %v1445 = vadd.f32 %v1250, %v1417
        %v1446 = vadd.f32 %v1251, %v1419
        %v1447 = vld [vmem:[#allocation2 + $0x11] sm:$0xff]
        %v1448 = vld [vmem:[#allocation2 + $0x19] sm:$0xff]
        %v1449 = vld [vmem:[#allocation2 + $0x21] sm:$0xff]
        %v1450 = vld [vmem:[#allocation2 + $0x29] sm:$0xff]
        %v1451 = vld [vmem:[#allocation2 + $0x31] sm:$0xff]
        %v1452 = vld [vmem:[#allocation2 + $0x39] sm:$0xff]
        %v1453 = vld [vmem:[#allocation2 + $0x41] sm:$0xff]
        %v1454 = vld [vmem:[#allocation2 + $0x49] sm:$0xff]
        %v1455 = vld [vmem:[#allocation2 + $0x51] sm:$0xff]
        %v1456 = vld [vmem:[#allocation2 + $0x59] sm:$0xff]
        %v1457 = vld [vmem:[#allocation2 + $0x61] sm:$0xff]
        %v1458 = vld [vmem:[#allocation2 + $0x69] sm:$0xff]
        %v1459 = vld [vmem:[#allocation2 + $0x71] sm:$0xff]
        %v1460 = vld [vmem:[#allocation2 + $0x79] sm:$0xff]
        %v1461 = vld [vmem:[#allocation2 + $0x81] sm:$0xff]
        %v1462 = vld [vmem:[#allocation2 + $0x89] sm:$0xff]
        %v1463 = vld [vmem:[#allocation2 + $0x91] sm:$0xff]
        %v1464 = vld [vmem:[#allocation2 + $0x99] sm:$0xff]
        %v1465 = vld [vmem:[#allocation2 + $0xa1] sm:$0xff]
        %v1466 = vld [vmem:[#allocation2 + $0xa9] sm:$0xff]
        %v1467 = vld [vmem:[#allocation2 + $0xb1] sm:$0xff]
        %v1468 = vld [vmem:[#allocation2 + $0xb9] sm:$0xff]
        %v1469 = vld [vmem:[#allocation2 + $0xc1] sm:$0xff]
        %v1470 = vld [vmem:[#allocation2 + $0xc9] sm:$0xff]
        %v1471 = vld [vmem:[#allocation2 + $0xd1] sm:$0xff]
        %v1472 = vld [vmem:[#allocation2 + $0xd9] sm:$0xff]
        %v1473 = vpack.c.bf16 %v1448, %v1447
        %v1474 = vpack.c.bf16 %v1450, %v1449
        %v1475 = vpack.c.bf16 %v1452, %v1451
        %v1476 = vpack.c.bf16 %v1454, %v1453
        %v1477 = vpack.c.bf16 %v1456, %v1455
        %v1478 = vpack.c.bf16 %v1458, %v1457
        %v1479 = vpack.c.bf16 %v1460, %v1459
        %v1480 = vpack.c.bf16 %v1462, %v1461
        %v1481 = vpack.c.bf16 %v1464, %v1463
        %v1482 = vpack.c.bf16 %v1466, %v1465
        %v1483 = vpack.c.bf16 %v1468, %v1467
        %v1484 = vpack.c.bf16 %v1470, %v1469
        %v1485 = vpack.c.bf16 %v1472, %v1471
        %s1486 = scalar_lea.vmem %s3, 64
        %v1487 = vld [vmem:[%s1486] sm:$0xf]
        %v1488 = vld [vmem:[%s1486 + $0x4] sm:$0xf]
        %v1489 = vld [vmem:[%s1486 + $0x8] sm:$0xf]
        %v1490 = vld [vmem:[%s1486 + $0xc] sm:$0xf]
        %v1495 = vunpack.c.l.b16 %v1487
        %v1496 = vunpack.c.l.b16 %v1488
        %v1497 = vunpack.c.l.b16 %v1489
        %v1498 = vunpack.c.l.b16 %v1490
        %v1499 = vpack.c.b16 %v1496, %v1495
        %v1500 = vpack.c.b16 %v1498, %v1497
        %v1504 = vsel %vm688, %v1473, 0
        %v1507 = vsel %vm688, %v1474, 0
        %v1510 = vsel %vm688, %v1475, 0
        %v1513 = vsel %vm688, %v1476, 0
        %v1516 = vsel %vm688, %v1477, 0
        %v1519 = vsel %vm688, %v1478, 0
        %v1522 = vsel %vm688, %v1479, 0
        %v1525 = vsel %vm688, %v1480, 0
        %v1528 = vsel %vm688, %v1481, 0
        %v1531 = vsel %vm688, %v1482, 0
        %v1534 = vsel %vm688, %v1483, 0
        %v1537 = vsel %vm688, %v1484, 0
        %v1540 = vsel %vm688, %v1485, 0
        %1542 = vmatpush.bf16.msra.mxu0 0
        %1543 = vmatpush.bf16.msra.mxu0 0
        %1544 = vmatpush.bf16.msra.mxu0 0
        %1545 = vmatpush.bf16.msra.mxu0 0
        %1546 = vmatpush.bf16.msra.mxu0 0
        %1547 = vmatpush.bf16.msra.mxu0 0
        %1548 = vmatpush.bf16.msra.mxu0 %v1500
        %1549 = vmatpush.bf16.msra.mxu0 %v1499
        %1550 = vmatmul.bf16.gmra.mxu0 %v1504
        %v1551 = vpop.f32.mrf.mxu0
        %v1552 = vadd.f32 0.0, %v1551
        %v1553 = vpop.f32.mrf.mxu0
        %v1554 = vadd.f32 0.0, %v1553
        %1555 = vmatmul.bf16.gmra.mxu0 %v1507
        %v1556 = vpop.f32.mrf.mxu0
        %v1557 = vadd.f32 0.0, %v1556
        %v1558 = vpop.f32.mrf.mxu0
        %v1559 = vadd.f32 0.0, %v1558
        %1560 = vmatmul.bf16.gmra.mxu0 %v1510
        %v1561 = vpop.f32.mrf.mxu0
        %v1562 = vadd.f32 0.0, %v1561
        %v1563 = vpop.f32.mrf.mxu0
        %v1564 = vadd.f32 0.0, %v1563
        %1565 = vmatmul.bf16.gmra.mxu0 %v1513
        %v1566 = vpop.f32.mrf.mxu0
        %v1567 = vadd.f32 0.0, %v1566
        %v1568 = vpop.f32.mrf.mxu0
        %v1569 = vadd.f32 0.0, %v1568
        %1570 = vmatmul.bf16.gmra.mxu0 %v1516
        %v1571 = vpop.f32.mrf.mxu0
        %v1572 = vadd.f32 0.0, %v1571
        %v1573 = vpop.f32.mrf.mxu0
        %v1574 = vadd.f32 0.0, %v1573
        %1575 = vmatmul.bf16.gmra.mxu0 %v1519
        %v1576 = vpop.f32.mrf.mxu0
        %v1577 = vadd.f32 0.0, %v1576
        %v1578 = vpop.f32.mrf.mxu0
        %v1579 = vadd.f32 0.0, %v1578
        %1580 = vmatmul.bf16.gmra.mxu0 %v1522
        %v1581 = vpop.f32.mrf.mxu0
        %v1582 = vadd.f32 0.0, %v1581
        %v1583 = vpop.f32.mrf.mxu0
        %v1584 = vadd.f32 0.0, %v1583
        %1585 = vmatmul.bf16.gmra.mxu0 %v1525
        %v1586 = vpop.f32.mrf.mxu0
        %v1587 = vadd.f32 0.0, %v1586
        %v1588 = vpop.f32.mrf.mxu0
        %v1589 = vadd.f32 0.0, %v1588
        %1590 = vmatmul.bf16.gmra.mxu0 %v1528
        %v1591 = vpop.f32.mrf.mxu0
        %v1592 = vadd.f32 0.0, %v1591
        %v1593 = vpop.f32.mrf.mxu0
        %v1594 = vadd.f32 0.0, %v1593
        %1595 = vmatmul.bf16.gmra.mxu0 %v1531
        %v1596 = vpop.f32.mrf.mxu0
        %v1597 = vadd.f32 0.0, %v1596
        %v1598 = vpop.f32.mrf.mxu0
        %v1599 = vadd.f32 0.0, %v1598
        %1600 = vmatmul.bf16.gmra.mxu0 %v1534
        %v1601 = vpop.f32.mrf.mxu0
        %v1602 = vadd.f32 0.0, %v1601
        %v1603 = vpop.f32.mrf.mxu0
        %v1604 = vadd.f32 0.0, %v1603
        %1605 = vmatmul.bf16.gmra.mxu0 %v1537
        %v1606 = vpop.f32.mrf.mxu0
        %v1607 = vadd.f32 0.0, %v1606
        %v1608 = vpop.f32.mrf.mxu0
        %v1609 = vadd.f32 0.0, %v1608
        %1610 = vmatmul.bf16.gmra.mxu0 %v1540
        %v1611 = vpop.f32.mrf.mxu0
        %v1612 = vadd.f32 0.0, %v1611
        %v1613 = vpop.f32.mrf.mxu0
        %v1614 = vadd.f32 0.0, %v1613
        %1615 = vdwg.mxu0
        %v1616 = vadd.f32 %v1421, %v1552
        %v1617 = vadd.f32 %v1422, %v1554
        %v1618 = vadd.f32 %v1423, %v1557
        %v1619 = vadd.f32 %v1424, %v1559
        %v1620 = vadd.f32 %v1425, %v1562
        %v1621 = vadd.f32 %v1426, %v1564
        %v1622 = vadd.f32 %v1427, %v1567
        %v1623 = vadd.f32 %v1428, %v1569
        %v1624 = vadd.f32 %v1429, %v1572
        %v1625 = vadd.f32 %v1430, %v1574
        %v1626 = vadd.f32 %v1431, %v1577
        %v1627 = vadd.f32 %v1432, %v1579
        %v1628 = vadd.f32 %v1433, %v1582
        %v1629 = vadd.f32 %v1434, %v1584
        %v1630 = vadd.f32 %v1435, %v1587
        %v1631 = vadd.f32 %v1436, %v1589
        %v1632 = vadd.f32 %v1437, %v1592
        %v1633 = vadd.f32 %v1438, %v1594
        %v1634 = vadd.f32 %v1439, %v1597
        %v1635 = vadd.f32 %v1440, %v1599
        %v1636 = vadd.f32 %v1441, %v1602
        %v1637 = vadd.f32 %v1442, %v1604
        %v1638 = vadd.f32 %v1443, %v1607
        %v1639 = vadd.f32 %v1444, %v1609
        %v1640 = vadd.f32 %v1445, %v1612
        %v1641 = vadd.f32 %v1446, %v1614
        %v1642 = vld [vmem:[#allocation2 + $0x12] sm:$0xff]
        %v1643 = vld [vmem:[#allocation2 + $0x1a] sm:$0xff]
        %v1644 = vld [vmem:[#allocation2 + $0x22] sm:$0xff]
        %v1645 = vld [vmem:[#allocation2 + $0x2a] sm:$0xff]
        %v1646 = vld [vmem:[#allocation2 + $0x32] sm:$0xff]
        %v1647 = vld [vmem:[#allocation2 + $0x3a] sm:$0xff]
        %v1648 = vld [vmem:[#allocation2 + $0x42] sm:$0xff]
        %v1649 = vld [vmem:[#allocation2 + $0x4a] sm:$0xff]
        %v1650 = vld [vmem:[#allocation2 + $0x52] sm:$0xff]
        %v1651 = vld [vmem:[#allocation2 + $0x5a] sm:$0xff]
        %v1652 = vld [vmem:[#allocation2 + $0x62] sm:$0xff]
        %v1653 = vld [vmem:[#allocation2 + $0x6a] sm:$0xff]
        %v1654 = vld [vmem:[#allocation2 + $0x72] sm:$0xff]
        %v1655 = vld [vmem:[#allocation2 + $0x7a] sm:$0xff]
        %v1656 = vld [vmem:[#allocation2 + $0x82] sm:$0xff]
        %v1657 = vld [vmem:[#allocation2 + $0x8a] sm:$0xff]
        %v1658 = vld [vmem:[#allocation2 + $0x92] sm:$0xff]
        %v1659 = vld [vmem:[#allocation2 + $0x9a] sm:$0xff]
        %v1660 = vld [vmem:[#allocation2 + $0xa2] sm:$0xff]
        %v1661 = vld [vmem:[#allocation2 + $0xaa] sm:$0xff]
        %v1662 = vld [vmem:[#allocation2 + $0xb2] sm:$0xff]
        %v1663 = vld [vmem:[#allocation2 + $0xba] sm:$0xff]
        %v1664 = vld [vmem:[#allocation2 + $0xc2] sm:$0xff]
        %v1665 = vld [vmem:[#allocation2 + $0xca] sm:$0xff]
        %v1666 = vld [vmem:[#allocation2 + $0xd2] sm:$0xff]
        %v1667 = vld [vmem:[#allocation2 + $0xda] sm:$0xff]
        %v1668 = vpack.c.bf16 %v1643, %v1642
        %v1669 = vpack.c.bf16 %v1645, %v1644
        %v1670 = vpack.c.bf16 %v1647, %v1646
        %v1671 = vpack.c.bf16 %v1649, %v1648
        %v1672 = vpack.c.bf16 %v1651, %v1650
        %v1673 = vpack.c.bf16 %v1653, %v1652
        %v1674 = vpack.c.bf16 %v1655, %v1654
        %v1675 = vpack.c.bf16 %v1657, %v1656
        %v1676 = vpack.c.bf16 %v1659, %v1658
        %v1677 = vpack.c.bf16 %v1661, %v1660
        %v1678 = vpack.c.bf16 %v1663, %v1662
        %v1679 = vpack.c.bf16 %v1665, %v1664
        %v1680 = vpack.c.bf16 %v1667, %v1666
        %s1681 = scalar_lea.vmem %s3, 80
        %v1682 = vld [vmem:[%s1681] sm:$0xf]
        %v1683 = vld [vmem:[%s1681 + $0x4] sm:$0xf]
        %v1684 = vld [vmem:[%s1681 + $0x8] sm:$0xf]
        %v1685 = vld [vmem:[%s1681 + $0xc] sm:$0xf]
        %v1690 = vunpack.c.l.b16 %v1682
        %v1691 = vunpack.c.l.b16 %v1683
        %v1692 = vunpack.c.l.b16 %v1684
        %v1693 = vunpack.c.l.b16 %v1685
        %v1694 = vpack.c.b16 %v1691, %v1690
        %v1695 = vpack.c.b16 %v1693, %v1692
        %v1699 = vsel %vm688, %v1668, 0
        %v1702 = vsel %vm688, %v1669, 0
        %v1705 = vsel %vm688, %v1670, 0
        %v1708 = vsel %vm688, %v1671, 0
        %v1711 = vsel %vm688, %v1672, 0
        %v1714 = vsel %vm688, %v1673, 0
        %v1717 = vsel %vm688, %v1674, 0
        %v1720 = vsel %vm688, %v1675, 0
        %v1723 = vsel %vm688, %v1676, 0
        %v1726 = vsel %vm688, %v1677, 0
        %v1729 = vsel %vm688, %v1678, 0
        %v1732 = vsel %vm688, %v1679, 0
        %v1735 = vsel %vm688, %v1680, 0
        %1737 = vmatpush.bf16.msra.mxu0 0
        %1738 = vmatpush.bf16.msra.mxu0 0
        %1739 = vmatpush.bf16.msra.mxu0 0
        %1740 = vmatpush.bf16.msra.mxu0 0
        %1741 = vmatpush.bf16.msra.mxu0 0
        %1742 = vmatpush.bf16.msra.mxu0 0
        %1743 = vmatpush.bf16.msra.mxu0 %v1695
        %1744 = vmatpush.bf16.msra.mxu0 %v1694
        %1745 = vmatmul.bf16.gmra.mxu0 %v1699
        %v1746 = vpop.f32.mrf.mxu0
        %v1747 = vadd.f32 0.0, %v1746
        %v1748 = vpop.f32.mrf.mxu0
        %v1749 = vadd.f32 0.0, %v1748
        %1750 = vmatmul.bf16.gmra.mxu0 %v1702
        %v1751 = vpop.f32.mrf.mxu0
        %v1752 = vadd.f32 0.0, %v1751
        %v1753 = vpop.f32.mrf.mxu0
        %v1754 = vadd.f32 0.0, %v1753
        %1755 = vmatmul.bf16.gmra.mxu0 %v1705
        %v1756 = vpop.f32.mrf.mxu0
        %v1757 = vadd.f32 0.0, %v1756
        %v1758 = vpop.f32.mrf.mxu0
        %v1759 = vadd.f32 0.0, %v1758
        %1760 = vmatmul.bf16.gmra.mxu0 %v1708
        %v1761 = vpop.f32.mrf.mxu0
        %v1762 = vadd.f32 0.0, %v1761
        %v1763 = vpop.f32.mrf.mxu0
        %v1764 = vadd.f32 0.0, %v1763
        %1765 = vmatmul.bf16.gmra.mxu0 %v1711
        %v1766 = vpop.f32.mrf.mxu0
        %v1767 = vadd.f32 0.0, %v1766
        %v1768 = vpop.f32.mrf.mxu0
        %v1769 = vadd.f32 0.0, %v1768
        %1770 = vmatmul.bf16.gmra.mxu0 %v1714
        %v1771 = vpop.f32.mrf.mxu0
        %v1772 = vadd.f32 0.0, %v1771
        %v1773 = vpop.f32.mrf.mxu0
        %v1774 = vadd.f32 0.0, %v1773
        %1775 = vmatmul.bf16.gmra.mxu0 %v1717
        %v1776 = vpop.f32.mrf.mxu0
        %v1777 = vadd.f32 0.0, %v1776
        %v1778 = vpop.f32.mrf.mxu0
        %v1779 = vadd.f32 0.0, %v1778
        %1780 = vmatmul.bf16.gmra.mxu0 %v1720
        %v1781 = vpop.f32.mrf.mxu0
        %v1782 = vadd.f32 0.0, %v1781
        %v1783 = vpop.f32.mrf.mxu0
        %v1784 = vadd.f32 0.0, %v1783
        %1785 = vmatmul.bf16.gmra.mxu0 %v1723
        %v1786 = vpop.f32.mrf.mxu0
        %v1787 = vadd.f32 0.0, %v1786
        %v1788 = vpop.f32.mrf.mxu0
        %v1789 = vadd.f32 0.0, %v1788
        %1790 = vmatmul.bf16.gmra.mxu0 %v1726
        %v1791 = vpop.f32.mrf.mxu0
        %v1792 = vadd.f32 0.0, %v1791
        %v1793 = vpop.f32.mrf.mxu0
        %v1794 = vadd.f32 0.0, %v1793
        %1795 = vmatmul.bf16.gmra.mxu0 %v1729
        %v1796 = vpop.f32.mrf.mxu0
        %v1797 = vadd.f32 0.0, %v1796
        %v1798 = vpop.f32.mrf.mxu0
        %v1799 = vadd.f32 0.0, %v1798
        %1800 = vmatmul.bf16.gmra.mxu0 %v1732
        %v1801 = vpop.f32.mrf.mxu0
        %v1802 = vadd.f32 0.0, %v1801
        %v1803 = vpop.f32.mrf.mxu0
        %v1804 = vadd.f32 0.0, %v1803
        %1805 = vmatmul.bf16.gmra.mxu0 %v1735
        %v1806 = vpop.f32.mrf.mxu0
        %v1807 = vadd.f32 0.0, %v1806
        %v1808 = vpop.f32.mrf.mxu0
        %v1809 = vadd.f32 0.0, %v1808
        %1810 = vdwg.mxu0
        %v1811 = vadd.f32 %v1616, %v1747
        %v1812 = vadd.f32 %v1617, %v1749
        %v1813 = vadd.f32 %v1618, %v1752
        %v1814 = vadd.f32 %v1619, %v1754
        %v1815 = vadd.f32 %v1620, %v1757
        %v1816 = vadd.f32 %v1621, %v1759
        %v1817 = vadd.f32 %v1622, %v1762
        %v1818 = vadd.f32 %v1623, %v1764
        %v1819 = vadd.f32 %v1624, %v1767
        %v1820 = vadd.f32 %v1625, %v1769
        %v1821 = vadd.f32 %v1626, %v1772
        %v1822 = vadd.f32 %v1627, %v1774
        %v1823 = vadd.f32 %v1628, %v1777
        %v1824 = vadd.f32 %v1629, %v1779
        %v1825 = vadd.f32 %v1630, %v1782
        %v1826 = vadd.f32 %v1631, %v1784
        %v1827 = vadd.f32 %v1632, %v1787
        %v1828 = vadd.f32 %v1633, %v1789
        %v1829 = vadd.f32 %v1634, %v1792
        %v1830 = vadd.f32 %v1635, %v1794
        %v1831 = vadd.f32 %v1636, %v1797
        %v1832 = vadd.f32 %v1637, %v1799
        %v1833 = vadd.f32 %v1638, %v1802
        %v1834 = vadd.f32 %v1639, %v1804
        %v1835 = vadd.f32 %v1640, %v1807
        %v1836 = vadd.f32 %v1641, %v1809
        %v1837 = vld [vmem:[#allocation2 + $0x20] sm:$0xff]
        %v1838 = vld [vmem:[#allocation2 + $0x28] sm:$0xff]
        %v1839 = vld [vmem:[#allocation2 + $0x30] sm:$0xff]
        %v1840 = vld [vmem:[#allocation2 + $0x38] sm:$0xff]
        %v1841 = vld [vmem:[#allocation2 + $0x40] sm:$0xff]
        %v1842 = vld [vmem:[#allocation2 + $0x48] sm:$0xff]
        %v1843 = vld [vmem:[#allocation2 + $0x50] sm:$0xff]
        %v1844 = vld [vmem:[#allocation2 + $0x58] sm:$0xff]
        %v1845 = vld [vmem:[#allocation2 + $0x60] sm:$0xff]
        %v1846 = vld [vmem:[#allocation2 + $0x68] sm:$0xff]
        %v1847 = vld [vmem:[#allocation2 + $0x70] sm:$0xff]
        %v1848 = vld [vmem:[#allocation2 + $0x78] sm:$0xff]
        %v1849 = vld [vmem:[#allocation2 + $0x80] sm:$0xff]
        %v1850 = vld [vmem:[#allocation2 + $0x88] sm:$0xff]
        %v1851 = vld [vmem:[#allocation2 + $0x90] sm:$0xff]
        %v1852 = vld [vmem:[#allocation2 + $0x98] sm:$0xff]
        %v1853 = vld [vmem:[#allocation2 + $0xa0] sm:$0xff]
        %v1854 = vld [vmem:[#allocation2 + $0xa8] sm:$0xff]
        %v1855 = vld [vmem:[#allocation2 + $0xb0] sm:$0xff]
        %v1856 = vld [vmem:[#allocation2 + $0xb8] sm:$0xff]
        %v1857 = vld [vmem:[#allocation2 + $0xc0] sm:$0xff]
        %v1858 = vld [vmem:[#allocation2 + $0xc8] sm:$0xff]
        %v1859 = vld [vmem:[#allocation2 + $0xd0] sm:$0xff]
        %v1860 = vld [vmem:[#allocation2 + $0xd8] sm:$0xff]
        %v1861 = vld [vmem:[#allocation2 + $0xe0] sm:$0xff]
        %v1862 = vld [vmem:[#allocation2 + $0xe8] sm:$0xff]
        %v1863 = vpack.c.bf16 %v1838, %v1837
        %v1864 = vpack.c.bf16 %v1840, %v1839
        %v1865 = vpack.c.bf16 %v1842, %v1841
        %v1866 = vpack.c.bf16 %v1844, %v1843
        %v1867 = vpack.c.bf16 %v1846, %v1845
        %v1868 = vpack.c.bf16 %v1848, %v1847
        %v1869 = vpack.c.bf16 %v1850, %v1849
        %v1870 = vpack.c.bf16 %v1852, %v1851
        %v1871 = vpack.c.bf16 %v1854, %v1853
        %v1872 = vpack.c.bf16 %v1856, %v1855
        %v1873 = vpack.c.bf16 %v1858, %v1857
        %v1874 = vpack.c.bf16 %v1860, %v1859
        %v1875 = vpack.c.bf16 %v1862, %v1861
        %s1876 = scalar_lea.vmem %s3, 96
        %v1877 = vld [vmem:[%s1876] sm:$0xf]
        %v1878 = vld [vmem:[%s1876 + $0x4] sm:$0xf]
        %v1879 = vld [vmem:[%s1876 + $0x8] sm:$0xf]
        %v1880 = vld [vmem:[%s1876 + $0xc] sm:$0xf]
        %v1885 = vunpack.c.l.b16 %v1877
        %v1886 = vunpack.c.l.b16 %v1878
        %v1887 = vunpack.c.l.b16 %v1879
        %v1888 = vunpack.c.l.b16 %v1880
        %v1889 = vpack.c.b16 %v1886, %v1885
        %v1890 = vpack.c.b16 %v1888, %v1887
        %v1894 = vsel %vm688, %v1863, 0
        %v1897 = vsel %vm688, %v1864, 0
        %v1900 = vsel %vm688, %v1865, 0
        %v1903 = vsel %vm688, %v1866, 0
        %v1906 = vsel %vm688, %v1867, 0
        %v1909 = vsel %vm688, %v1868, 0
        %v1912 = vsel %vm688, %v1869, 0
        %v1915 = vsel %vm688, %v1870, 0
        %v1918 = vsel %vm688, %v1871, 0
        %v1921 = vsel %vm688, %v1872, 0
        %v1924 = vsel %vm688, %v1873, 0
        %v1927 = vsel %vm688, %v1874, 0
        %v1930 = vsel %vm688, %v1875, 0
        %1932 = vmatpush.bf16.msra.mxu0 0
        %1933 = vmatpush.bf16.msra.mxu0 0
        %1934 = vmatpush.bf16.msra.mxu0 0
        %1935 = vmatpush.bf16.msra.mxu0 0
        %1936 = vmatpush.bf16.msra.mxu0 0
        %1937 = vmatpush.bf16.msra.mxu0 0
        %1938 = vmatpush.bf16.msra.mxu0 %v1890
        %1939 = vmatpush.bf16.msra.mxu0 %v1889
        %1940 = vmatmul.bf16.gmra.mxu0 %v1894
        %v1941 = vpop.f32.mrf.mxu0
        %v1942 = vadd.f32 0.0, %v1941
        %v1943 = vpop.f32.mrf.mxu0
        %v1944 = vadd.f32 0.0, %v1943
        %1945 = vmatmul.bf16.gmra.mxu0 %v1897
        %v1946 = vpop.f32.mrf.mxu0
        %v1947 = vadd.f32 0.0, %v1946
        %v1948 = vpop.f32.mrf.mxu0
        %v1949 = vadd.f32 0.0, %v1948
        %1950 = vmatmul.bf16.gmra.mxu0 %v1900
        %v1951 = vpop.f32.mrf.mxu0
        %v1952 = vadd.f32 0.0, %v1951
        %v1953 = vpop.f32.mrf.mxu0
        %v1954 = vadd.f32 0.0, %v1953
        %1955 = vmatmul.bf16.gmra.mxu0 %v1903
        %v1956 = vpop.f32.mrf.mxu0
        %v1957 = vadd.f32 0.0, %v1956
        %v1958 = vpop.f32.mrf.mxu0
        %v1959 = vadd.f32 0.0, %v1958
        %1960 = vmatmul.bf16.gmra.mxu0 %v1906
        %v1961 = vpop.f32.mrf.mxu0
        %v1962 = vadd.f32 0.0, %v1961
        %v1963 = vpop.f32.mrf.mxu0
        %v1964 = vadd.f32 0.0, %v1963
        %1965 = vmatmul.bf16.gmra.mxu0 %v1909
        %v1966 = vpop.f32.mrf.mxu0
        %v1967 = vadd.f32 0.0, %v1966
        %v1968 = vpop.f32.mrf.mxu0
        %v1969 = vadd.f32 0.0, %v1968
        %1970 = vmatmul.bf16.gmra.mxu0 %v1912
        %v1971 = vpop.f32.mrf.mxu0
        %v1972 = vadd.f32 0.0, %v1971
        %v1973 = vpop.f32.mrf.mxu0
        %v1974 = vadd.f32 0.0, %v1973
        %1975 = vmatmul.bf16.gmra.mxu0 %v1915
        %v1976 = vpop.f32.mrf.mxu0
        %v1977 = vadd.f32 0.0, %v1976
        %v1978 = vpop.f32.mrf.mxu0
        %v1979 = vadd.f32 0.0, %v1978
        %1980 = vmatmul.bf16.gmra.mxu0 %v1918
        %v1981 = vpop.f32.mrf.mxu0
        %v1982 = vadd.f32 0.0, %v1981
        %v1983 = vpop.f32.mrf.mxu0
        %v1984 = vadd.f32 0.0, %v1983
        %1985 = vmatmul.bf16.gmra.mxu0 %v1921
        %v1986 = vpop.f32.mrf.mxu0
        %v1987 = vadd.f32 0.0, %v1986
        %v1988 = vpop.f32.mrf.mxu0
        %v1989 = vadd.f32 0.0, %v1988
        %1990 = vmatmul.bf16.gmra.mxu0 %v1924
        %v1991 = vpop.f32.mrf.mxu0
        %v1992 = vadd.f32 0.0, %v1991
        %v1993 = vpop.f32.mrf.mxu0
        %v1994 = vadd.f32 0.0, %v1993
        %1995 = vmatmul.bf16.gmra.mxu0 %v1927
        %v1996 = vpop.f32.mrf.mxu0
        %v1997 = vadd.f32 0.0, %v1996
        %v1998 = vpop.f32.mrf.mxu0
        %v1999 = vadd.f32 0.0, %v1998
        %2000 = vmatmul.bf16.gmra.mxu0 %v1930
        %v2001 = vpop.f32.mrf.mxu0
        %v2002 = vadd.f32 0.0, %v2001
        %v2003 = vpop.f32.mrf.mxu0
        %v2004 = vadd.f32 0.0, %v2003
        %2005 = vdwg.mxu0
        %v2006 = vadd.f32 %v1811, %v1942
        %v2007 = vadd.f32 %v1812, %v1944
        %v2008 = vadd.f32 %v1813, %v1947
        %v2009 = vadd.f32 %v1814, %v1949
        %v2010 = vadd.f32 %v1815, %v1952
        %v2011 = vadd.f32 %v1816, %v1954
        %v2012 = vadd.f32 %v1817, %v1957
        %v2013 = vadd.f32 %v1818, %v1959
        %v2014 = vadd.f32 %v1819, %v1962
        %v2015 = vadd.f32 %v1820, %v1964
        %v2016 = vadd.f32 %v1821, %v1967
        %v2017 = vadd.f32 %v1822, %v1969
        %v2018 = vadd.f32 %v1823, %v1972
        %v2019 = vadd.f32 %v1824, %v1974
        %v2020 = vadd.f32 %v1825, %v1977
        %v2021 = vadd.f32 %v1826, %v1979
        %v2022 = vadd.f32 %v1827, %v1982
        %v2023 = vadd.f32 %v1828, %v1984
        %v2024 = vadd.f32 %v1829, %v1987
        %v2025 = vadd.f32 %v1830, %v1989
        %v2026 = vadd.f32 %v1831, %v1992
        %v2027 = vadd.f32 %v1832, %v1994
        %v2028 = vadd.f32 %v1833, %v1997
        %v2029 = vadd.f32 %v1834, %v1999
        %v2030 = vadd.f32 %v1835, %v2002
        %v2031 = vadd.f32 %v1836, %v2004
        %v2032 = vld [vmem:[#allocation2 + $0x21] sm:$0xff]
        %v2033 = vld [vmem:[#allocation2 + $0x29] sm:$0xff]
        %v2034 = vld [vmem:[#allocation2 + $0x31] sm:$0xff]
        %v2035 = vld [vmem:[#allocation2 + $0x39] sm:$0xff]
        %v2036 = vld [vmem:[#allocation2 + $0x41] sm:$0xff]
        %v2037 = vld [vmem:[#allocation2 + $0x49] sm:$0xff]
        %v2038 = vld [vmem:[#allocation2 + $0x51] sm:$0xff]
        %v2039 = vld [vmem:[#allocation2 + $0x59] sm:$0xff]
        %v2040 = vld [vmem:[#allocation2 + $0x61] sm:$0xff]
        %v2041 = vld [vmem:[#allocation2 + $0x69] sm:$0xff]
        %v2042 = vld [vmem:[#allocation2 + $0x71] sm:$0xff]
        %v2043 = vld [vmem:[#allocation2 + $0x79] sm:$0xff]
        %v2044 = vld [vmem:[#allocation2 + $0x81] sm:$0xff]
        %v2045 = vld [vmem:[#allocation2 + $0x89] sm:$0xff]
        %v2046 = vld [vmem:[#allocation2 + $0x91] sm:$0xff]
        %v2047 = vld [vmem:[#allocation2 + $0x99] sm:$0xff]
        %v2048 = vld [vmem:[#allocation2 + $0xa1] sm:$0xff]
        %v2049 = vld [vmem:[#allocation2 + $0xa9] sm:$0xff]
        %v2050 = vld [vmem:[#allocation2 + $0xb1] sm:$0xff]
        %v2051 = vld [vmem:[#allocation2 + $0xb9] sm:$0xff]
        %v2052 = vld [vmem:[#allocation2 + $0xc1] sm:$0xff]
        %v2053 = vld [vmem:[#allocation2 + $0xc9] sm:$0xff]
        %v2054 = vld [vmem:[#allocation2 + $0xd1] sm:$0xff]
        %v2055 = vld [vmem:[#allocation2 + $0xd9] sm:$0xff]
        %v2056 = vld [vmem:[#allocation2 + $0xe1] sm:$0xff]
        %v2057 = vld [vmem:[#allocation2 + $0xe9] sm:$0xff]
        %v2058 = vpack.c.bf16 %v2033, %v2032
        %v2059 = vpack.c.bf16 %v2035, %v2034
        %v2060 = vpack.c.bf16 %v2037, %v2036
        %v2061 = vpack.c.bf16 %v2039, %v2038
        %v2062 = vpack.c.bf16 %v2041, %v2040
        %v2063 = vpack.c.bf16 %v2043, %v2042
        %v2064 = vpack.c.bf16 %v2045, %v2044
        %v2065 = vpack.c.bf16 %v2047, %v2046
        %v2066 = vpack.c.bf16 %v2049, %v2048
        %v2067 = vpack.c.bf16 %v2051, %v2050
        %v2068 = vpack.c.bf16 %v2053, %v2052
        %v2069 = vpack.c.bf16 %v2055, %v2054
        %v2070 = vpack.c.bf16 %v2057, %v2056
        %s2071 = scalar_lea.vmem %s3, 112
        %v2072 = vld [vmem:[%s2071] sm:$0xf]
        %v2073 = vld [vmem:[%s2071 + $0x4] sm:$0xf]
        %v2074 = vld [vmem:[%s2071 + $0x8] sm:$0xf]
        %v2075 = vld [vmem:[%s2071 + $0xc] sm:$0xf]
        %v2080 = vunpack.c.l.b16 %v2072
        %v2081 = vunpack.c.l.b16 %v2073
        %v2082 = vunpack.c.l.b16 %v2074
        %v2083 = vunpack.c.l.b16 %v2075
        %v2084 = vpack.c.b16 %v2081, %v2080
        %v2085 = vpack.c.b16 %v2083, %v2082
        %v2089 = vsel %vm688, %v2058, 0
        %v2092 = vsel %vm688, %v2059, 0
        %v2095 = vsel %vm688, %v2060, 0
        %v2098 = vsel %vm688, %v2061, 0
        %v2101 = vsel %vm688, %v2062, 0
        %v2104 = vsel %vm688, %v2063, 0
        %v2107 = vsel %vm688, %v2064, 0
        %v2110 = vsel %vm688, %v2065, 0
        %v2113 = vsel %vm688, %v2066, 0
        %v2116 = vsel %vm688, %v2067, 0
        %v2119 = vsel %vm688, %v2068, 0
        %v2122 = vsel %vm688, %v2069, 0
        %v2125 = vsel %vm688, %v2070, 0
        %2127 = vmatpush.bf16.msra.mxu0 0
        %2128 = vmatpush.bf16.msra.mxu0 0
        %2129 = vmatpush.bf16.msra.mxu0 0
        %2130 = vmatpush.bf16.msra.mxu0 0
        %2131 = vmatpush.bf16.msra.mxu0 0
        %2132 = vmatpush.bf16.msra.mxu0 0
        %2133 = vmatpush.bf16.msra.mxu0 %v2085
        %2134 = vmatpush.bf16.msra.mxu0 %v2084
        %2135 = vmatmul.bf16.gmra.mxu0 %v2089
        %v2136 = vpop.f32.mrf.mxu0
        %v2137 = vadd.f32 0.0, %v2136
        %v2138 = vpop.f32.mrf.mxu0
        %v2139 = vadd.f32 0.0, %v2138
        %2140 = vmatmul.bf16.gmra.mxu0 %v2092
        %v2141 = vpop.f32.mrf.mxu0
        %v2142 = vadd.f32 0.0, %v2141
        %v2143 = vpop.f32.mrf.mxu0
        %v2144 = vadd.f32 0.0, %v2143
        %2145 = vmatmul.bf16.gmra.mxu0 %v2095
        %v2146 = vpop.f32.mrf.mxu0
        %v2147 = vadd.f32 0.0, %v2146
        %v2148 = vpop.f32.mrf.mxu0
        %v2149 = vadd.f32 0.0, %v2148
        %2150 = vmatmul.bf16.gmra.mxu0 %v2098
        %v2151 = vpop.f32.mrf.mxu0
        %v2152 = vadd.f32 0.0, %v2151
        %v2153 = vpop.f32.mrf.mxu0
        %v2154 = vadd.f32 0.0, %v2153
        %2155 = vmatmul.bf16.gmra.mxu0 %v2101
        %v2156 = vpop.f32.mrf.mxu0
        %v2157 = vadd.f32 0.0, %v2156
        %v2158 = vpop.f32.mrf.mxu0
        %v2159 = vadd.f32 0.0, %v2158
        %2160 = vmatmul.bf16.gmra.mxu0 %v2104
        %v2161 = vpop.f32.mrf.mxu0
        %v2162 = vadd.f32 0.0, %v2161
        %v2163 = vpop.f32.mrf.mxu0
        %v2164 = vadd.f32 0.0, %v2163
        %2165 = vmatmul.bf16.gmra.mxu0 %v2107
        %v2166 = vpop.f32.mrf.mxu0
        %v2167 = vadd.f32 0.0, %v2166
        %v2168 = vpop.f32.mrf.mxu0
        %v2169 = vadd.f32 0.0, %v2168
        %2170 = vmatmul.bf16.gmra.mxu0 %v2110
        %v2171 = vpop.f32.mrf.mxu0
        %v2172 = vadd.f32 0.0, %v2171
        %v2173 = vpop.f32.mrf.mxu0
        %v2174 = vadd.f32 0.0, %v2173
        %2175 = vmatmul.bf16.gmra.mxu0 %v2113
        %v2176 = vpop.f32.mrf.mxu0
        %v2177 = vadd.f32 0.0, %v2176
        %v2178 = vpop.f32.mrf.mxu0
        %v2179 = vadd.f32 0.0, %v2178
        %2180 = vmatmul.bf16.gmra.mxu0 %v2116
        %v2181 = vpop.f32.mrf.mxu0
        %v2182 = vadd.f32 0.0, %v2181
        %v2183 = vpop.f32.mrf.mxu0
        %v2184 = vadd.f32 0.0, %v2183
        %2185 = vmatmul.bf16.gmra.mxu0 %v2119
        %v2186 = vpop.f32.mrf.mxu0
        %v2187 = vadd.f32 0.0, %v2186
        %v2188 = vpop.f32.mrf.mxu0
        %v2189 = vadd.f32 0.0, %v2188
        %2190 = vmatmul.bf16.gmra.mxu0 %v2122
        %v2191 = vpop.f32.mrf.mxu0
        %v2192 = vadd.f32 0.0, %v2191
        %v2193 = vpop.f32.mrf.mxu0
        %v2194 = vadd.f32 0.0, %v2193
        %2195 = vmatmul.bf16.gmra.mxu0 %v2125
        %v2196 = vpop.f32.mrf.mxu0
        %v2197 = vadd.f32 0.0, %v2196
        %v2198 = vpop.f32.mrf.mxu0
        %v2199 = vadd.f32 0.0, %v2198
        %2200 = vdwg.mxu0
        %v2201 = vadd.f32 %v2006, %v2137
        %v2202 = vadd.f32 %v2007, %v2139
        %v2203 = vadd.f32 %v2008, %v2142
        %v2204 = vadd.f32 %v2009, %v2144
        %v2205 = vadd.f32 %v2010, %v2147
        %v2206 = vadd.f32 %v2011, %v2149
        %v2207 = vadd.f32 %v2012, %v2152
        %v2208 = vadd.f32 %v2013, %v2154
        %v2209 = vadd.f32 %v2014, %v2157
        %v2210 = vadd.f32 %v2015, %v2159
        %v2211 = vadd.f32 %v2016, %v2162
        %v2212 = vadd.f32 %v2017, %v2164
        %v2213 = vadd.f32 %v2018, %v2167
        %v2214 = vadd.f32 %v2019, %v2169
        %v2215 = vadd.f32 %v2020, %v2172
        %v2216 = vadd.f32 %v2021, %v2174
        %v2217 = vadd.f32 %v2022, %v2177
        %v2218 = vadd.f32 %v2023, %v2179
        %v2219 = vadd.f32 %v2024, %v2182
        %v2220 = vadd.f32 %v2025, %v2184
        %v2221 = vadd.f32 %v2026, %v2187
        %v2222 = vadd.f32 %v2027, %v2189
        %v2223 = vadd.f32 %v2028, %v2192
        %v2224 = vadd.f32 %v2029, %v2194
        %v2225 = vadd.f32 %v2030, %v2197
        %v2226 = vadd.f32 %v2031, %v2199
        %v2227 = vld [vmem:[#allocation2 + $0x22] sm:$0xff]
        %v2228 = vld [vmem:[#allocation2 + $0x2a] sm:$0xff]
        %v2229 = vld [vmem:[#allocation2 + $0x32] sm:$0xff]
        %v2230 = vld [vmem:[#allocation2 + $0x3a] sm:$0xff]
        %v2231 = vld [vmem:[#allocation2 + $0x42] sm:$0xff]
        %v2232 = vld [vmem:[#allocation2 + $0x4a] sm:$0xff]
        %v2233 = vld [vmem:[#allocation2 + $0x52] sm:$0xff]
        %v2234 = vld [vmem:[#allocation2 + $0x5a] sm:$0xff]
        %v2235 = vld [vmem:[#allocation2 + $0x62] sm:$0xff]
        %v2236 = vld [vmem:[#allocation2 + $0x6a] sm:$0xff]
        %v2237 = vld [vmem:[#allocation2 + $0x72] sm:$0xff]
        %v2238 = vld [vmem:[#allocation2 + $0x7a] sm:$0xff]
        %v2239 = vld [vmem:[#allocation2 + $0x82] sm:$0xff]
        %v2240 = vld [vmem:[#allocation2 + $0x8a] sm:$0xff]
        %v2241 = vld [vmem:[#allocation2 + $0x92] sm:$0xff]
        %v2242 = vld [vmem:[#allocation2 + $0x9a] sm:$0xff]
        %v2243 = vld [vmem:[#allocation2 + $0xa2] sm:$0xff]
        %v2244 = vld [vmem:[#allocation2 + $0xaa] sm:$0xff]
        %v2245 = vld [vmem:[#allocation2 + $0xb2] sm:$0xff]
        %v2246 = vld [vmem:[#allocation2 + $0xba] sm:$0xff]
        %v2247 = vld [vmem:[#allocation2 + $0xc2] sm:$0xff]
        %v2248 = vld [vmem:[#allocation2 + $0xca] sm:$0xff]
        %v2249 = vld [vmem:[#allocation2 + $0xd2] sm:$0xff]
        %v2250 = vld [vmem:[#allocation2 + $0xda] sm:$0xff]
        %v2251 = vld [vmem:[#allocation2 + $0xe2] sm:$0xff]
        %v2252 = vld [vmem:[#allocation2 + $0xea] sm:$0xff]
        %v2253 = vpack.c.bf16 %v2228, %v2227
        %v2254 = vpack.c.bf16 %v2230, %v2229
        %v2255 = vpack.c.bf16 %v2232, %v2231
        %v2256 = vpack.c.bf16 %v2234, %v2233
        %v2257 = vpack.c.bf16 %v2236, %v2235
        %v2258 = vpack.c.bf16 %v2238, %v2237
        %v2259 = vpack.c.bf16 %v2240, %v2239
        %v2260 = vpack.c.bf16 %v2242, %v2241
        %v2261 = vpack.c.bf16 %v2244, %v2243
        %v2262 = vpack.c.bf16 %v2246, %v2245
        %v2263 = vpack.c.bf16 %v2248, %v2247
        %v2264 = vpack.c.bf16 %v2250, %v2249
        %v2265 = vpack.c.bf16 %v2252, %v2251
        %s2266 = scalar_lea.vmem %s3, 128
        %v2267 = vld [vmem:[%s2266] sm:$0xf]
        %v2268 = vld [vmem:[%s2266 + $0x4] sm:$0xf]
        %v2269 = vld [vmem:[%s2266 + $0x8] sm:$0xf]
        %v2270 = vld [vmem:[%s2266 + $0xc] sm:$0xf]
        %v2275 = vunpack.c.l.b16 %v2267
        %v2276 = vunpack.c.l.b16 %v2268
        %v2277 = vunpack.c.l.b16 %v2269
        %v2278 = vunpack.c.l.b16 %v2270
        %v2279 = vpack.c.b16 %v2276, %v2275
        %v2280 = vpack.c.b16 %v2278, %v2277
        %v2284 = vsel %vm688, %v2253, 0
        %v2287 = vsel %vm688, %v2254, 0
        %v2290 = vsel %vm688, %v2255, 0
        %v2293 = vsel %vm688, %v2256, 0
        %v2296 = vsel %vm688, %v2257, 0
        %v2299 = vsel %vm688, %v2258, 0
        %v2302 = vsel %vm688, %v2259, 0
        %v2305 = vsel %vm688, %v2260, 0
        %v2308 = vsel %vm688, %v2261, 0
        %v2311 = vsel %vm688, %v2262, 0
        %v2314 = vsel %vm688, %v2263, 0
        %v2317 = vsel %vm688, %v2264, 0
        %v2320 = vsel %vm688, %v2265, 0
        %2322 = vmatpush.bf16.msra.mxu0 0
        %2323 = vmatpush.bf16.msra.mxu0 0
        %2324 = vmatpush.bf16.msra.mxu0 0
        %2325 = vmatpush.bf16.msra.mxu0 0
        %2326 = vmatpush.bf16.msra.mxu0 0
        %2327 = vmatpush.bf16.msra.mxu0 0
        %2328 = vmatpush.bf16.msra.mxu0 %v2280
        %2329 = vmatpush.bf16.msra.mxu0 %v2279
        %2330 = vmatmul.bf16.gmra.mxu0 %v2284
        %v2331 = vpop.f32.mrf.mxu0
        %v2332 = vadd.f32 0.0, %v2331
        %v2333 = vpop.f32.mrf.mxu0
        %v2334 = vadd.f32 0.0, %v2333
        %2335 = vmatmul.bf16.gmra.mxu0 %v2287
        %v2336 = vpop.f32.mrf.mxu0
        %v2337 = vadd.f32 0.0, %v2336
        %v2338 = vpop.f32.mrf.mxu0
        %v2339 = vadd.f32 0.0, %v2338
        %2340 = vmatmul.bf16.gmra.mxu0 %v2290
        %v2341 = vpop.f32.mrf.mxu0
        %v2342 = vadd.f32 0.0, %v2341
        %v2343 = vpop.f32.mrf.mxu0
        %v2344 = vadd.f32 0.0, %v2343
        %2345 = vmatmul.bf16.gmra.mxu0 %v2293
        %v2346 = vpop.f32.mrf.mxu0
        %v2347 = vadd.f32 0.0, %v2346
        %v2348 = vpop.f32.mrf.mxu0
        %v2349 = vadd.f32 0.0, %v2348
        %2350 = vmatmul.bf16.gmra.mxu0 %v2296
        %v2351 = vpop.f32.mrf.mxu0
        %v2352 = vadd.f32 0.0, %v2351
        %v2353 = vpop.f32.mrf.mxu0
        %v2354 = vadd.f32 0.0, %v2353
        %2355 = vmatmul.bf16.gmra.mxu0 %v2299
        %v2356 = vpop.f32.mrf.mxu0
        %v2357 = vadd.f32 0.0, %v2356
        %v2358 = vpop.f32.mrf.mxu0
        %v2359 = vadd.f32 0.0, %v2358
        %2360 = vmatmul.bf16.gmra.mxu0 %v2302
        %v2361 = vpop.f32.mrf.mxu0
        %v2362 = vadd.f32 0.0, %v2361
        %v2363 = vpop.f32.mrf.mxu0
        %v2364 = vadd.f32 0.0, %v2363
        %2365 = vmatmul.bf16.gmra.mxu0 %v2305
        %v2366 = vpop.f32.mrf.mxu0
        %v2367 = vadd.f32 0.0, %v2366
        %v2368 = vpop.f32.mrf.mxu0
        %v2369 = vadd.f32 0.0, %v2368
        %2370 = vmatmul.bf16.gmra.mxu0 %v2308
        %v2371 = vpop.f32.mrf.mxu0
        %v2372 = vadd.f32 0.0, %v2371
        %v2373 = vpop.f32.mrf.mxu0
        %v2374 = vadd.f32 0.0, %v2373
        %2375 = vmatmul.bf16.gmra.mxu0 %v2311
        %v2376 = vpop.f32.mrf.mxu0
        %v2377 = vadd.f32 0.0, %v2376
        %v2378 = vpop.f32.mrf.mxu0
        %v2379 = vadd.f32 0.0, %v2378
        %2380 = vmatmul.bf16.gmra.mxu0 %v2314
        %v2381 = vpop.f32.mrf.mxu0
        %v2382 = vadd.f32 0.0, %v2381
        %v2383 = vpop.f32.mrf.mxu0
        %v2384 = vadd.f32 0.0, %v2383
        %2385 = vmatmul.bf16.gmra.mxu0 %v2317
        %v2386 = vpop.f32.mrf.mxu0
        %v2387 = vadd.f32 0.0, %v2386
        %v2388 = vpop.f32.mrf.mxu0
        %v2389 = vadd.f32 0.0, %v2388
        %2390 = vmatmul.bf16.gmra.mxu0 %v2320
        %v2391 = vpop.f32.mrf.mxu0
        %v2392 = vadd.f32 0.0, %v2391
        %v2393 = vpop.f32.mrf.mxu0
        %v2394 = vadd.f32 0.0, %v2393
        %2395 = vdwg.mxu0
        %v2396 = vadd.f32 %v2201, %v2332
        %v2397 = vadd.f32 %v2202, %v2334
        %v2398 = vadd.f32 %v2203, %v2337
        %v2399 = vadd.f32 %v2204, %v2339
        %v2400 = vadd.f32 %v2205, %v2342
        %v2401 = vadd.f32 %v2206, %v2344
        %v2402 = vadd.f32 %v2207, %v2347
        %v2403 = vadd.f32 %v2208, %v2349
        %v2404 = vadd.f32 %v2209, %v2352
        %v2405 = vadd.f32 %v2210, %v2354
        %v2406 = vadd.f32 %v2211, %v2357
        %v2407 = vadd.f32 %v2212, %v2359
        %v2408 = vadd.f32 %v2213, %v2362
        %v2409 = vadd.f32 %v2214, %v2364
        %v2410 = vadd.f32 %v2215, %v2367
        %v2411 = vadd.f32 %v2216, %v2369
        %v2412 = vadd.f32 %v2217, %v2372
        %v2413 = vadd.f32 %v2218, %v2374
        %v2414 = vadd.f32 %v2219, %v2377
        %v2415 = vadd.f32 %v2220, %v2379
        %v2416 = vadd.f32 %v2221, %v2382
        %v2417 = vadd.f32 %v2222, %v2384
        %v2418 = vadd.f32 %v2223, %v2387
        %v2419 = vadd.f32 %v2224, %v2389
        %v2420 = vadd.f32 %v2225, %v2392
        %v2421 = vadd.f32 %v2226, %v2394
        %v2422 = vld [vmem:[%s4] sm:$0x1]
        %v2424 = vperm.slane %v2422, 0
        %v2426 = vadd.f32 %v2396, %v2424
        %v2427 = vadd.f32 %v2397, %v2424
        %v2428 = vadd.f32 %v2398, %v2424
        %v2429 = vadd.f32 %v2399, %v2424
        %v2430 = vadd.f32 %v2400, %v2424
        %v2431 = vadd.f32 %v2401, %v2424
        %v2432 = vadd.f32 %v2402, %v2424
        %v2433 = vadd.f32 %v2403, %v2424
        %v2434 = vadd.f32 %v2404, %v2424
        %v2435 = vadd.f32 %v2405, %v2424
        %v2436 = vadd.f32 %v2406, %v2424
        %v2437 = vadd.f32 %v2407, %v2424
        %v2438 = vadd.f32 %v2408, %v2424
        %v2439 = vadd.f32 %v2409, %v2424
        %v2440 = vadd.f32 %v2410, %v2424
        %v2441 = vadd.f32 %v2411, %v2424
        %v2442 = vadd.f32 %v2412, %v2424
        %v2443 = vadd.f32 %v2413, %v2424
        %v2444 = vadd.f32 %v2414, %v2424
        %v2445 = vadd.f32 %v2415, %v2424
        %v2446 = vadd.f32 %v2416, %v2424
        %v2447 = vadd.f32 %v2417, %v2424
        %v2448 = vadd.f32 %v2418, %v2424
        %v2449 = vadd.f32 %v2419, %v2424
        %v2450 = vadd.f32 %v2420, %v2424
        %v2451 = vadd.f32 %v2421, %v2424
        %v2452 = vmax.f32 %v2426, 0.0
        %v2453 = vmax.f32 %v2427, 0.0
        %v2454 = vmax.f32 %v2428, 0.0
        %v2455 = vmax.f32 %v2429, 0.0
        %v2456 = vmax.f32 %v2430, 0.0
        %v2457 = vmax.f32 %v2431, 0.0
        %v2458 = vmax.f32 %v2432, 0.0
        %v2459 = vmax.f32 %v2433, 0.0
        %v2460 = vmax.f32 %v2434, 0.0
        %v2461 = vmax.f32 %v2435, 0.0
        %v2462 = vmax.f32 %v2436, 0.0
        %v2463 = vmax.f32 %v2437, 0.0
        %v2464 = vmax.f32 %v2438, 0.0
        %v2465 = vmax.f32 %v2439, 0.0
        %v2466 = vmax.f32 %v2440, 0.0
        %v2467 = vmax.f32 %v2441, 0.0
        %v2468 = vmax.f32 %v2442, 0.0
        %v2469 = vmax.f32 %v2443, 0.0
        %v2470 = vmax.f32 %v2444, 0.0
        %v2471 = vmax.f32 %v2445, 0.0
        %v2472 = vmax.f32 %v2446, 0.0
        %v2473 = vmax.f32 %v2447, 0.0
        %v2474 = vmax.f32 %v2448, 0.0
        %v2475 = vmax.f32 %v2449, 0.0
        %v2476 = vmax.f32 %v2450, 0.0
        %v2477 = vmax.f32 %v2451, 0.0
        %2478 = vst.msk [vmem:[#allocation3] sm:$0xff] %vm688, %v2452
        %2479 = vst.msk [vmem:[#allocation3 + $0x8] sm:$0xff] %vm688, %v2453
        %2480 = vst.msk [vmem:[#allocation3 + $0x10] sm:$0xff] %vm688, %v2454
        %2481 = vst.msk [vmem:[#allocation3 + $0x18] sm:$0xff] %vm688, %v2455
        %2482 = vst.msk [vmem:[#allocation3 + $0x20] sm:$0xff] %vm688, %v2456
        %2483 = vst.msk [vmem:[#allocation3 + $0x28] sm:$0xff] %vm688, %v2457
        %2484 = vst.msk [vmem:[#allocation3 + $0x30] sm:$0xff] %vm688, %v2458
        %2485 = vst.msk [vmem:[#allocation3 + $0x38] sm:$0xff] %vm688, %v2459
        %2486 = vst.msk [vmem:[#allocation3 + $0x40] sm:$0xff] %vm688, %v2460
        %2487 = vst.msk [vmem:[#allocation3 + $0x48] sm:$0xff] %vm688, %v2461
        %2488 = vst.msk [vmem:[#allocation3 + $0x50] sm:$0xff] %vm688, %v2462
        %2489 = vst.msk [vmem:[#allocation3 + $0x58] sm:$0xff] %vm688, %v2463
        %2490 = vst.msk [vmem:[#allocation3 + $0x60] sm:$0xff] %vm688, %v2464
        %2491 = vst.msk [vmem:[#allocation3 + $0x68] sm:$0xff] %vm688, %v2465
        %2492 = vst.msk [vmem:[#allocation3 + $0x70] sm:$0xff] %vm688, %v2466
        %2493 = vst.msk [vmem:[#allocation3 + $0x78] sm:$0xff] %vm688, %v2467
        %2494 = vst.msk [vmem:[#allocation3 + $0x80] sm:$0xff] %vm688, %v2468
        %2495 = vst.msk [vmem:[#allocation3 + $0x88] sm:$0xff] %vm688, %v2469
        %2496 = vst.msk [vmem:[#allocation3 + $0x90] sm:$0xff] %vm688, %v2470
        %2497 = vst.msk [vmem:[#allocation3 + $0x98] sm:$0xff] %vm688, %v2471
        %2498 = vst.msk [vmem:[#allocation3 + $0xa0] sm:$0xff] %vm688, %v2472
        %2499 = vst.msk [vmem:[#allocation3 + $0xa8] sm:$0xff] %vm688, %v2473
        %2500 = vst.msk [vmem:[#allocation3 + $0xb0] sm:$0xff] %vm688, %v2474
        %2501 = vst.msk [vmem:[#allocation3 + $0xb8] sm:$0xff] %vm688, %v2475
        %2502 = vst.msk [vmem:[#allocation3 + $0xc0] sm:$0xff] %vm688, %v2476
        %2503 = vst.msk [vmem:[#allocation3 + $0xc8] sm:$0xff] %vm688, %v2477
        %v2504 = vld [vmem:[#allocation3] sm:$0xff]
        %v2505 = vld [vmem:[#allocation3 + $0x8] sm:$0xff]
        %v2506 = vld [vmem:[#allocation3 + $0x10] sm:$0xff]
        %v2507 = vld [vmem:[#allocation3 + $0x18] sm:$0xff]
        %v2508 = vld [vmem:[#allocation3 + $0x20] sm:$0xff]
        %v2509 = vld [vmem:[#allocation3 + $0x28] sm:$0xff]
        %v2510 = vld [vmem:[#allocation3 + $0x30] sm:$0xff]
        %v2511 = vld [vmem:[#allocation3 + $0x38] sm:$0xff]
        %v2512 = vld [vmem:[#allocation3 + $0x40] sm:$0xff]
        %v2513 = vld [vmem:[#allocation3 + $0x48] sm:$0xff]
        %v2514 = vld [vmem:[#allocation3 + $0x50] sm:$0xff]
        %v2515 = vld [vmem:[#allocation3 + $0x58] sm:$0xff]
        %v2516 = vld [vmem:[#allocation3 + $0x60] sm:$0xff]
        %v2517 = vld [vmem:[#allocation3 + $0x68] sm:$0xff]
        %v2518 = vld [vmem:[#allocation3 + $0x70] sm:$0xff]
        %v2519 = vld [vmem:[#allocation3 + $0x78] sm:$0xff]
        %v2520 = vld [vmem:[#allocation3 + $0x80] sm:$0xff]
        %v2521 = vld [vmem:[#allocation3 + $0x88] sm:$0xff]
        %v2522 = vld [vmem:[#allocation3 + $0x90] sm:$0xff]
        %v2523 = vld [vmem:[#allocation3 + $0x98] sm:$0xff]
        %v2524 = vld [vmem:[#allocation3 + $0xa0] sm:$0xff]
        %v2525 = vpack.c.bf16 %v2505, %v2504
        %v2526 = vpack.c.bf16 %v2507, %v2506
        %v2527 = vpack.c.bf16 %v2509, %v2508
        %v2528 = vpack.c.bf16 %v2511, %v2510
        %v2529 = vpack.c.bf16 %v2513, %v2512
        %v2530 = vpack.c.bf16 %v2515, %v2514
        %v2531 = vpack.c.bf16 %v2517, %v2516
        %v2532 = vpack.c.bf16 %v2519, %v2518
        %v2533 = vpack.c.bf16 %v2521, %v2520
        %v2534 = vpack.c.bf16 %v2523, %v2522
        %v2535 = vpack.c.bf16 %v2524, %v2524
        %v2536 = vld [vmem:[%s5] sm:$0xf]
        %v2537 = vld [vmem:[%s5 + $0x4] sm:$0xf]
        %v2538 = vld [vmem:[%s5 + $0x8] sm:$0xf]
        %v2539 = vld [vmem:[%s5 + $0xc] sm:$0xf]
        %v2540 = vld [vmem:[#allocation3 + $0x1] sm:$0xff]
        %v2541 = vld [vmem:[#allocation3 + $0x9] sm:$0xff]
        %v2542 = vld [vmem:[#allocation3 + $0x11] sm:$0xff]
        %v2543 = vld [vmem:[#allocation3 + $0x19] sm:$0xff]
        %v2544 = vld [vmem:[#allocation3 + $0x21] sm:$0xff]
        %v2545 = vld [vmem:[#allocation3 + $0x29] sm:$0xff]
        %v2546 = vld [vmem:[#allocation3 + $0x31] sm:$0xff]
        %v2547 = vld [vmem:[#allocation3 + $0x39] sm:$0xff]
        %v2548 = vld [vmem:[#allocation3 + $0x41] sm:$0xff]
        %v2549 = vld [vmem:[#allocation3 + $0x49] sm:$0xff]
        %v2550 = vld [vmem:[#allocation3 + $0x51] sm:$0xff]
        %v2551 = vld [vmem:[#allocation3 + $0x59] sm:$0xff]
        %v2552 = vld [vmem:[#allocation3 + $0x61] sm:$0xff]
        %v2553 = vld [vmem:[#allocation3 + $0x69] sm:$0xff]
        %v2554 = vld [vmem:[#allocation3 + $0x71] sm:$0xff]
        %v2555 = vld [vmem:[#allocation3 + $0x79] sm:$0xff]
        %v2556 = vld [vmem:[#allocation3 + $0x81] sm:$0xff]
        %v2557 = vld [vmem:[#allocation3 + $0x89] sm:$0xff]
        %v2558 = vld [vmem:[#allocation3 + $0x91] sm:$0xff]
        %v2559 = vld [vmem:[#allocation3 + $0x99] sm:$0xff]
        %v2560 = vld [vmem:[#allocation3 + $0xa1] sm:$0xff]
        %v2561 = vpack.c.bf16 %v2541, %v2540
        %v2562 = vpack.c.bf16 %v2543, %v2542
        %v2563 = vpack.c.bf16 %v2545, %v2544
        %v2564 = vpack.c.bf16 %v2547, %v2546
        %v2565 = vpack.c.bf16 %v2549, %v2548
        %v2566 = vpack.c.bf16 %v2551, %v2550
        %v2567 = vpack.c.bf16 %v2553, %v2552
        %v2568 = vpack.c.bf16 %v2555, %v2554
        %v2569 = vpack.c.bf16 %v2557, %v2556
        %v2570 = vpack.c.bf16 %v2559, %v2558
        %v2571 = vpack.c.bf16 %v2560, %v2560
        %s2572 = scalar_lea.vmem %s5, 16
        %v2573 = vld [vmem:[%s2572] sm:$0xf]
        %v2574 = vld [vmem:[%s2572 + $0x4] sm:$0xf]
        %v2575 = vld [vmem:[%s2572 + $0x8] sm:$0xf]
        %v2576 = vld [vmem:[%s2572 + $0xc] sm:$0xf]
        %v2581 = vunpack.c.l.b16 %v2573
        %v2582 = vunpack.c.l.b16 %v2574
        %v2583 = vunpack.c.l.b16 %v2575
        %v2584 = vunpack.c.l.b16 %v2576
        %v2585 = vpack.c.b16 %v2582, %v2581
        %v2586 = vpack.c.b16 %v2584, %v2583
        %v2590 = vsel %vm688, %v2561, 0
        %v2593 = vsel %vm688, %v2562, 0
        %v2596 = vsel %vm688, %v2563, 0
        %v2599 = vsel %vm688, %v2564, 0
        %v2602 = vsel %vm688, %v2565, 0
        %v2605 = vsel %vm688, %v2566, 0
        %v2608 = vsel %vm688, %v2567, 0
        %v2611 = vsel %vm688, %v2568, 0
        %v2614 = vsel %vm688, %v2569, 0
        %v2617 = vsel %vm688, %v2570, 0
        %v2620 = vsel %vm688, %v2571, 0
        %2622 = vmatpush.bf16.msra.mxu0 0
        %2623 = vmatpush.bf16.msra.mxu0 0
        %2624 = vmatpush.bf16.msra.mxu0 0
        %2625 = vmatpush.bf16.msra.mxu0 0
        %2626 = vmatpush.bf16.msra.mxu0 0
        %2627 = vmatpush.bf16.msra.mxu0 0
        %2628 = vmatpush.bf16.msra.mxu0 %v2586
        %2629 = vmatpush.bf16.msra.mxu0 %v2585
        %2630 = vmatmul.bf16.gmra.mxu0 %v2590
        %v2631 = vpop.f32.mrf.mxu0
        %v2632 = vadd.f32 0.0, %v2631
        %v2633 = vpop.f32.mrf.mxu0
        %v2634 = vadd.f32 0.0, %v2633
        %2635 = vmatmul.bf16.gmra.mxu0 %v2593
        %v2636 = vpop.f32.mrf.mxu0
        %v2637 = vadd.f32 0.0, %v2636
        %v2638 = vpop.f32.mrf.mxu0
        %v2639 = vadd.f32 0.0, %v2638
        %2640 = vmatmul.bf16.gmra.mxu0 %v2596
        %v2641 = vpop.f32.mrf.mxu0
        %v2642 = vadd.f32 0.0, %v2641
        %v2643 = vpop.f32.mrf.mxu0
        %v2644 = vadd.f32 0.0, %v2643
        %2645 = vmatmul.bf16.gmra.mxu0 %v2599
        %v2646 = vpop.f32.mrf.mxu0
        %v2647 = vadd.f32 0.0, %v2646
        %v2648 = vpop.f32.mrf.mxu0
        %v2649 = vadd.f32 0.0, %v2648
        %2650 = vmatmul.bf16.gmra.mxu0 %v2602
        %v2651 = vpop.f32.mrf.mxu0
        %v2652 = vadd.f32 0.0, %v2651
        %v2653 = vpop.f32.mrf.mxu0
        %v2654 = vadd.f32 0.0, %v2653
        %2655 = vmatmul.bf16.gmra.mxu0 %v2605
        %v2656 = vpop.f32.mrf.mxu0
        %v2657 = vadd.f32 0.0, %v2656
        %v2658 = vpop.f32.mrf.mxu0
        %v2659 = vadd.f32 0.0, %v2658
        %2660 = vmatmul.bf16.gmra.mxu0 %v2608
        %v2661 = vpop.f32.mrf.mxu0
        %v2662 = vadd.f32 0.0, %v2661
        %v2663 = vpop.f32.mrf.mxu0
        %v2664 = vadd.f32 0.0, %v2663
        %2665 = vmatmul.bf16.gmra.mxu0 %v2611
        %v2666 = vpop.f32.mrf.mxu0
        %v2667 = vadd.f32 0.0, %v2666
        %v2668 = vpop.f32.mrf.mxu0
        %v2669 = vadd.f32 0.0, %v2668
        %2670 = vmatmul.bf16.gmra.mxu0 %v2614
        %v2671 = vpop.f32.mrf.mxu0
        %v2672 = vadd.f32 0.0, %v2671
        %v2673 = vpop.f32.mrf.mxu0
        %v2674 = vadd.f32 0.0, %v2673
        %2675 = vmatmul.bf16.gmra.mxu0 %v2617
        %v2676 = vpop.f32.mrf.mxu0
        %v2677 = vadd.f32 0.0, %v2676
        %v2678 = vpop.f32.mrf.mxu0
        %v2679 = vadd.f32 0.0, %v2678
        %2680 = vmatmul.bf16.gmra.mxu0 %v2620
        %v2681 = vpop.f32.mrf.mxu0
        %v2682 = vadd.f32 0.0, %v2681
        %v2683 = vpop.f32.mrf.mxu0
        %2684 = vdwg.mxu0
        %v2689 = vunpack.c.l.b16 %v2536
        %v2690 = vunpack.c.l.b16 %v2537
        %v2691 = vunpack.c.l.b16 %v2538
        %v2692 = vunpack.c.l.b16 %v2539
        %v2693 = vpack.c.b16 %v2690, %v2689
        %v2694 = vpack.c.b16 %v2692, %v2691
        %v2698 = vsel %vm688, %v2525, 0
        %v2701 = vsel %vm688, %v2526, 0
        %v2704 = vsel %vm688, %v2527, 0
        %v2707 = vsel %vm688, %v2528, 0
        %v2710 = vsel %vm688, %v2529, 0
        %v2713 = vsel %vm688, %v2530, 0
        %v2716 = vsel %vm688, %v2531, 0
        %v2719 = vsel %vm688, %v2532, 0
        %v2722 = vsel %vm688, %v2533, 0
        %v2725 = vsel %vm688, %v2534, 0
        %v2728 = vsel %vm688, %v2535, 0
        %2730 = vmatpush.bf16.msra.mxu0 0
        %2731 = vmatpush.bf16.msra.mxu0 0
        %2732 = vmatpush.bf16.msra.mxu0 0
        %2733 = vmatpush.bf16.msra.mxu0 0
        %2734 = vmatpush.bf16.msra.mxu0 0
        %2735 = vmatpush.bf16.msra.mxu0 0
        %2736 = vmatpush.bf16.msra.mxu0 %v2694
        %2737 = vmatpush.bf16.msra.mxu0 %v2693
        %2738 = vmatmul.bf16.gmra.mxu0 %v2698
        %v2739 = vpop.f32.mrf.mxu0
        %v2740 = vadd.f32 %v2632, %v2739
        %v2741 = vpop.f32.mrf.mxu0
        %v2742 = vadd.f32 %v2634, %v2741
        %2743 = vmatmul.bf16.gmra.mxu0 %v2701
        %v2744 = vpop.f32.mrf.mxu0
        %v2745 = vadd.f32 %v2637, %v2744
        %v2746 = vpop.f32.mrf.mxu0
        %v2747 = vadd.f32 %v2639, %v2746
        %2748 = vmatmul.bf16.gmra.mxu0 %v2704
        %v2749 = vpop.f32.mrf.mxu0
        %v2750 = vadd.f32 %v2642, %v2749
        %v2751 = vpop.f32.mrf.mxu0
        %v2752 = vadd.f32 %v2644, %v2751
        %2753 = vmatmul.bf16.gmra.mxu0 %v2707
        %v2754 = vpop.f32.mrf.mxu0
        %v2755 = vadd.f32 %v2647, %v2754
        %v2756 = vpop.f32.mrf.mxu0
        %v2757 = vadd.f32 %v2649, %v2756
        %2758 = vmatmul.bf16.gmra.mxu0 %v2710
        %v2759 = vpop.f32.mrf.mxu0
        %v2760 = vadd.f32 %v2652, %v2759
        %v2761 = vpop.f32.mrf.mxu0
        %v2762 = vadd.f32 %v2654, %v2761
        %2763 = vmatmul.bf16.gmra.mxu0 %v2713
        %v2764 = vpop.f32.mrf.mxu0
        %v2765 = vadd.f32 %v2657, %v2764
        %v2766 = vpop.f32.mrf.mxu0
        %v2767 = vadd.f32 %v2659, %v2766
        %2768 = vmatmul.bf16.gmra.mxu0 %v2716
        %v2769 = vpop.f32.mrf.mxu0
        %v2770 = vadd.f32 %v2662, %v2769
        %v2771 = vpop.f32.mrf.mxu0
        %v2772 = vadd.f32 %v2664, %v2771
        %2773 = vmatmul.bf16.gmra.mxu0 %v2719
        %v2774 = vpop.f32.mrf.mxu0
        %v2775 = vadd.f32 %v2667, %v2774
        %v2776 = vpop.f32.mrf.mxu0
        %v2777 = vadd.f32 %v2669, %v2776
        %2778 = vmatmul.bf16.gmra.mxu0 %v2722
        %v2779 = vpop.f32.mrf.mxu0
        %v2780 = vadd.f32 %v2672, %v2779
        %v2781 = vpop.f32.mrf.mxu0
        %v2782 = vadd.f32 %v2674, %v2781
        %2783 = vmatmul.bf16.gmra.mxu0 %v2725
        %v2784 = vpop.f32.mrf.mxu0
        %v2785 = vadd.f32 %v2677, %v2784
        %v2786 = vpop.f32.mrf.mxu0
        %v2787 = vadd.f32 %v2679, %v2786
        %2788 = vmatmul.bf16.gmra.mxu0 %v2728
        %v2789 = vpop.f32.mrf.mxu0
        %v2790 = vadd.f32 %v2682, %v2789
        %v2791 = vpop.f32.mrf.mxu0
        %2792 = vdwg.mxu0
        %v2793 = vld [vmem:[#allocation3 + $0x2] sm:$0xff]
        %v2794 = vld [vmem:[#allocation3 + $0xa] sm:$0xff]
        %v2795 = vld [vmem:[#allocation3 + $0x12] sm:$0xff]
        %v2796 = vld [vmem:[#allocation3 + $0x1a] sm:$0xff]
        %v2797 = vld [vmem:[#allocation3 + $0x22] sm:$0xff]
        %v2798 = vld [vmem:[#allocation3 + $0x2a] sm:$0xff]
        %v2799 = vld [vmem:[#allocation3 + $0x32] sm:$0xff]
        %v2800 = vld [vmem:[#allocation3 + $0x3a] sm:$0xff]
        %v2801 = vld [vmem:[#allocation3 + $0x42] sm:$0xff]
        %v2802 = vld [vmem:[#allocation3 + $0x4a] sm:$0xff]
        %v2803 = vld [vmem:[#allocation3 + $0x52] sm:$0xff]
        %v2804 = vld [vmem:[#allocation3 + $0x5a] sm:$0xff]
        %v2805 = vld [vmem:[#allocation3 + $0x62] sm:$0xff]
        %v2806 = vld [vmem:[#allocation3 + $0x6a] sm:$0xff]
        %v2807 = vld [vmem:[#allocation3 + $0x72] sm:$0xff]
        %v2808 = vld [vmem:[#allocation3 + $0x7a] sm:$0xff]
        %v2809 = vld [vmem:[#allocation3 + $0x82] sm:$0xff]
        %v2810 = vld [vmem:[#allocation3 + $0x8a] sm:$0xff]
        %v2811 = vld [vmem:[#allocation3 + $0x92] sm:$0xff]
        %v2812 = vld [vmem:[#allocation3 + $0x9a] sm:$0xff]
        %v2813 = vld [vmem:[#allocation3 + $0xa2] sm:$0xff]
        %v2814 = vpack.c.bf16 %v2794, %v2793
        %v2815 = vpack.c.bf16 %v2796, %v2795
        %v2816 = vpack.c.bf16 %v2798, %v2797
        %v2817 = vpack.c.bf16 %v2800, %v2799
        %v2818 = vpack.c.bf16 %v2802, %v2801
        %v2819 = vpack.c.bf16 %v2804, %v2803
        %v2820 = vpack.c.bf16 %v2806, %v2805
        %v2821 = vpack.c.bf16 %v2808, %v2807
        %v2822 = vpack.c.bf16 %v2810, %v2809
        %v2823 = vpack.c.bf16 %v2812, %v2811
        %v2824 = vpack.c.bf16 %v2813, %v2813
        %s2825 = scalar_lea.vmem %s5, 32
        %v2826 = vld [vmem:[%s2825] sm:$0xf]
        %v2827 = vld [vmem:[%s2825 + $0x4] sm:$0xf]
        %v2828 = vld [vmem:[%s2825 + $0x8] sm:$0xf]
        %v2829 = vld [vmem:[%s2825 + $0xc] sm:$0xf]
        %v2834 = vunpack.c.l.b16 %v2826
        %v2835 = vunpack.c.l.b16 %v2827
        %v2836 = vunpack.c.l.b16 %v2828
        %v2837 = vunpack.c.l.b16 %v2829
        %v2838 = vpack.c.b16 %v2835, %v2834
        %v2839 = vpack.c.b16 %v2837, %v2836
        %v2843 = vsel %vm688, %v2814, 0
        %v2846 = vsel %vm688, %v2815, 0
        %v2849 = vsel %vm688, %v2816, 0
        %v2852 = vsel %vm688, %v2817, 0
        %v2855 = vsel %vm688, %v2818, 0
        %v2858 = vsel %vm688, %v2819, 0
        %v2861 = vsel %vm688, %v2820, 0
        %v2864 = vsel %vm688, %v2821, 0
        %v2867 = vsel %vm688, %v2822, 0
        %v2870 = vsel %vm688, %v2823, 0
        %v2873 = vsel %vm688, %v2824, 0
        %2875 = vmatpush.bf16.msra.mxu0 0
        %2876 = vmatpush.bf16.msra.mxu0 0
        %2877 = vmatpush.bf16.msra.mxu0 0
        %2878 = vmatpush.bf16.msra.mxu0 0
        %2879 = vmatpush.bf16.msra.mxu0 0
        %2880 = vmatpush.bf16.msra.mxu0 0
        %2881 = vmatpush.bf16.msra.mxu0 %v2839
        %2882 = vmatpush.bf16.msra.mxu0 %v2838
        %2883 = vmatmul.bf16.gmra.mxu0 %v2843
        %v2884 = vpop.f32.mrf.mxu0
        %v2885 = vadd.f32 0.0, %v2884
        %v2886 = vpop.f32.mrf.mxu0
        %v2887 = vadd.f32 0.0, %v2886
        %2888 = vmatmul.bf16.gmra.mxu0 %v2846
        %v2889 = vpop.f32.mrf.mxu0
        %v2890 = vadd.f32 0.0, %v2889
        %v2891 = vpop.f32.mrf.mxu0
        %v2892 = vadd.f32 0.0, %v2891
        %2893 = vmatmul.bf16.gmra.mxu0 %v2849
        %v2894 = vpop.f32.mrf.mxu0
        %v2895 = vadd.f32 0.0, %v2894
        %v2896 = vpop.f32.mrf.mxu0
        %v2897 = vadd.f32 0.0, %v2896
        %2898 = vmatmul.bf16.gmra.mxu0 %v2852
        %v2899 = vpop.f32.mrf.mxu0
        %v2900 = vadd.f32 0.0, %v2899
        %v2901 = vpop.f32.mrf.mxu0
        %v2902 = vadd.f32 0.0, %v2901
        %2903 = vmatmul.bf16.gmra.mxu0 %v2855
        %v2904 = vpop.f32.mrf.mxu0
        %v2905 = vadd.f32 0.0, %v2904
        %v2906 = vpop.f32.mrf.mxu0
        %v2907 = vadd.f32 0.0, %v2906
        %2908 = vmatmul.bf16.gmra.mxu0 %v2858
        %v2909 = vpop.f32.mrf.mxu0
        %v2910 = vadd.f32 0.0, %v2909
        %v2911 = vpop.f32.mrf.mxu0
        %v2912 = vadd.f32 0.0, %v2911
        %2913 = vmatmul.bf16.gmra.mxu0 %v2861
        %v2914 = vpop.f32.mrf.mxu0
        %v2915 = vadd.f32 0.0, %v2914
        %v2916 = vpop.f32.mrf.mxu0
        %v2917 = vadd.f32 0.0, %v2916
        %2918 = vmatmul.bf16.gmra.mxu0 %v2864
        %v2919 = vpop.f32.mrf.mxu0
        %v2920 = vadd.f32 0.0, %v2919
        %v2921 = vpop.f32.mrf.mxu0
        %v2922 = vadd.f32 0.0, %v2921
        %2923 = vmatmul.bf16.gmra.mxu0 %v2867
        %v2924 = vpop.f32.mrf.mxu0
        %v2925 = vadd.f32 0.0, %v2924
        %v2926 = vpop.f32.mrf.mxu0
        %v2927 = vadd.f32 0.0, %v2926
        %2928 = vmatmul.bf16.gmra.mxu0 %v2870
        %v2929 = vpop.f32.mrf.mxu0
        %v2930 = vadd.f32 0.0, %v2929
        %v2931 = vpop.f32.mrf.mxu0
        %v2932 = vadd.f32 0.0, %v2931
        %2933 = vmatmul.bf16.gmra.mxu0 %v2873
        %v2934 = vpop.f32.mrf.mxu0
        %v2935 = vadd.f32 0.0, %v2934
        %v2936 = vpop.f32.mrf.mxu0
        %2937 = vdwg.mxu0
        %v2938 = vadd.f32 %v2740, %v2885
        %v2939 = vadd.f32 %v2742, %v2887
        %v2940 = vadd.f32 %v2745, %v2890
        %v2941 = vadd.f32 %v2747, %v2892
        %v2942 = vadd.f32 %v2750, %v2895
        %v2943 = vadd.f32 %v2752, %v2897
        %v2944 = vadd.f32 %v2755, %v2900
        %v2945 = vadd.f32 %v2757, %v2902
        %v2946 = vadd.f32 %v2760, %v2905
        %v2947 = vadd.f32 %v2762, %v2907
        %v2948 = vadd.f32 %v2765, %v2910
        %v2949 = vadd.f32 %v2767, %v2912
        %v2950 = vadd.f32 %v2770, %v2915
        %v2951 = vadd.f32 %v2772, %v2917
        %v2952 = vadd.f32 %v2775, %v2920
        %v2953 = vadd.f32 %v2777, %v2922
        %v2954 = vadd.f32 %v2780, %v2925
        %v2955 = vadd.f32 %v2782, %v2927
        %v2956 = vadd.f32 %v2785, %v2930
        %v2957 = vadd.f32 %v2787, %v2932
        %v2958 = vadd.f32 %v2790, %v2935
        %v2959 = vld [vmem:[#allocation3 + $0x10] sm:$0xff]
        %v2960 = vld [vmem:[#allocation3 + $0x18] sm:$0xff]
        %v2961 = vld [vmem:[#allocation3 + $0x20] sm:$0xff]
        %v2962 = vld [vmem:[#allocation3 + $0x28] sm:$0xff]
        %v2963 = vld [vmem:[#allocation3 + $0x30] sm:$0xff]
        %v2964 = vld [vmem:[#allocation3 + $0x38] sm:$0xff]
        %v2965 = vld [vmem:[#allocation3 + $0x40] sm:$0xff]
        %v2966 = vld [vmem:[#allocation3 + $0x48] sm:$0xff]
        %v2967 = vld [vmem:[#allocation3 + $0x50] sm:$0xff]
        %v2968 = vld [vmem:[#allocation3 + $0x58] sm:$0xff]
        %v2969 = vld [vmem:[#allocation3 + $0x60] sm:$0xff]
        %v2970 = vld [vmem:[#allocation3 + $0x68] sm:$0xff]
        %v2971 = vld [vmem:[#allocation3 + $0x70] sm:$0xff]
        %v2972 = vld [vmem:[#allocation3 + $0x78] sm:$0xff]
        %v2973 = vld [vmem:[#allocation3 + $0x80] sm:$0xff]
        %v2974 = vld [vmem:[#allocation3 + $0x88] sm:$0xff]
        %v2975 = vld [vmem:[#allocation3 + $0x90] sm:$0xff]
        %v2976 = vld [vmem:[#allocation3 + $0x98] sm:$0xff]
        %v2977 = vld [vmem:[#allocation3 + $0xa0] sm:$0xff]
        %v2978 = vld [vmem:[#allocation3 + $0xa8] sm:$0xff]
        %v2979 = vld [vmem:[#allocation3 + $0xb0] sm:$0xff]
        %v2980 = vpack.c.bf16 %v2960, %v2959
        %v2981 = vpack.c.bf16 %v2962, %v2961
        %v2982 = vpack.c.bf16 %v2964, %v2963
        %v2983 = vpack.c.bf16 %v2966, %v2965
        %v2984 = vpack.c.bf16 %v2968, %v2967
        %v2985 = vpack.c.bf16 %v2970, %v2969
        %v2986 = vpack.c.bf16 %v2972, %v2971
        %v2987 = vpack.c.bf16 %v2974, %v2973
        %v2988 = vpack.c.bf16 %v2976, %v2975
        %v2989 = vpack.c.bf16 %v2978, %v2977
        %v2990 = vpack.c.bf16 %v2979, %v2979
        %s2991 = scalar_lea.vmem %s5, 48
        %v2992 = vld [vmem:[%s2991] sm:$0xf]
        %v2993 = vld [vmem:[%s2991 + $0x4] sm:$0xf]
        %v2994 = vld [vmem:[%s2991 + $0x8] sm:$0xf]
        %v2995 = vld [vmem:[%s2991 + $0xc] sm:$0xf]
        %v3000 = vunpack.c.l.b16 %v2992
        %v3001 = vunpack.c.l.b16 %v2993
        %v3002 = vunpack.c.l.b16 %v2994
        %v3003 = vunpack.c.l.b16 %v2995
        %v3004 = vpack.c.b16 %v3001, %v3000
        %v3005 = vpack.c.b16 %v3003, %v3002
        %v3009 = vsel %vm688, %v2980, 0
        %v3012 = vsel %vm688, %v2981, 0
        %v3015 = vsel %vm688, %v2982, 0
        %v3018 = vsel %vm688, %v2983, 0
        %v3021 = vsel %vm688, %v2984, 0
        %v3024 = vsel %vm688, %v2985, 0
        %v3027 = vsel %vm688, %v2986, 0
        %v3030 = vsel %vm688, %v2987, 0
        %v3033 = vsel %vm688, %v2988, 0
        %v3036 = vsel %vm688, %v2989, 0
        %v3039 = vsel %vm688, %v2990, 0
        %3041 = vmatpush.bf16.msra.mxu0 0
        %3042 = vmatpush.bf16.msra.mxu0 0
        %3043 = vmatpush.bf16.msra.mxu0 0
        %3044 = vmatpush.bf16.msra.mxu0 0
        %3045 = vmatpush.bf16.msra.mxu0 0
        %3046 = vmatpush.bf16.msra.mxu0 0
        %3047 = vmatpush.bf16.msra.mxu0 %v3005
        %3048 = vmatpush.bf16.msra.mxu0 %v3004
        %3049 = vmatmul.bf16.gmra.mxu0 %v3009
        %v3050 = vpop.f32.mrf.mxu0
        %v3051 = vadd.f32 0.0, %v3050
        %v3052 = vpop.f32.mrf.mxu0
        %v3053 = vadd.f32 0.0, %v3052
        %3054 = vmatmul.bf16.gmra.mxu0 %v3012
        %v3055 = vpop.f32.mrf.mxu0
        %v3056 = vadd.f32 0.0, %v3055
        %v3057 = vpop.f32.mrf.mxu0
        %v3058 = vadd.f32 0.0, %v3057
        %3059 = vmatmul.bf16.gmra.mxu0 %v3015
        %v3060 = vpop.f32.mrf.mxu0
        %v3061 = vadd.f32 0.0, %v3060
        %v3062 = vpop.f32.mrf.mxu0
        %v3063 = vadd.f32 0.0, %v3062
        %3064 = vmatmul.bf16.gmra.mxu0 %v3018
        %v3065 = vpop.f32.mrf.mxu0
        %v3066 = vadd.f32 0.0, %v3065
        %v3067 = vpop.f32.mrf.mxu0
        %v3068 = vadd.f32 0.0, %v3067
        %3069 = vmatmul.bf16.gmra.mxu0 %v3021
        %v3070 = vpop.f32.mrf.mxu0
        %v3071 = vadd.f32 0.0, %v3070
        %v3072 = vpop.f32.mrf.mxu0
        %v3073 = vadd.f32 0.0, %v3072
        %3074 = vmatmul.bf16.gmra.mxu0 %v3024
        %v3075 = vpop.f32.mrf.mxu0
        %v3076 = vadd.f32 0.0, %v3075
        %v3077 = vpop.f32.mrf.mxu0
        %v3078 = vadd.f32 0.0, %v3077
        %3079 = vmatmul.bf16.gmra.mxu0 %v3027
        %v3080 = vpop.f32.mrf.mxu0
        %v3081 = vadd.f32 0.0, %v3080
        %v3082 = vpop.f32.mrf.mxu0
        %v3083 = vadd.f32 0.0, %v3082
        %3084 = vmatmul.bf16.gmra.mxu0 %v3030
        %v3085 = vpop.f32.mrf.mxu0
        %v3086 = vadd.f32 0.0, %v3085
        %v3087 = vpop.f32.mrf.mxu0
        %v3088 = vadd.f32 0.0, %v3087
        %3089 = vmatmul.bf16.gmra.mxu0 %v3033
        %v3090 = vpop.f32.mrf.mxu0
        %v3091 = vadd.f32 0.0, %v3090
        %v3092 = vpop.f32.mrf.mxu0
        %v3093 = vadd.f32 0.0, %v3092
        %3094 = vmatmul.bf16.gmra.mxu0 %v3036
        %v3095 = vpop.f32.mrf.mxu0
        %v3096 = vadd.f32 0.0, %v3095
        %v3097 = vpop.f32.mrf.mxu0
        %v3098 = vadd.f32 0.0, %v3097
        %3099 = vmatmul.bf16.gmra.mxu0 %v3039
        %v3100 = vpop.f32.mrf.mxu0
        %v3101 = vadd.f32 0.0, %v3100
        %v3102 = vpop.f32.mrf.mxu0
        %3103 = vdwg.mxu0
        %v3104 = vadd.f32 %v2938, %v3051
        %v3105 = vadd.f32 %v2939, %v3053
        %v3106 = vadd.f32 %v2940, %v3056
        %v3107 = vadd.f32 %v2941, %v3058
        %v3108 = vadd.f32 %v2942, %v3061
        %v3109 = vadd.f32 %v2943, %v3063
        %v3110 = vadd.f32 %v2944, %v3066
        %v3111 = vadd.f32 %v2945, %v3068
        %v3112 = vadd.f32 %v2946, %v3071
        %v3113 = vadd.f32 %v2947, %v3073
        %v3114 = vadd.f32 %v2948, %v3076
        %v3115 = vadd.f32 %v2949, %v3078
        %v3116 = vadd.f32 %v2950, %v3081
        %v3117 = vadd.f32 %v2951, %v3083
        %v3118 = vadd.f32 %v2952, %v3086
        %v3119 = vadd.f32 %v2953, %v3088
        %v3120 = vadd.f32 %v2954, %v3091
        %v3121 = vadd.f32 %v2955, %v3093
        %v3122 = vadd.f32 %v2956, %v3096
        %v3123 = vadd.f32 %v2957, %v3098
        %v3124 = vadd.f32 %v2958, %v3101
        %v3125 = vld [vmem:[#allocation3 + $0x11] sm:$0xff]
        %v3126 = vld [vmem:[#allocation3 + $0x19] sm:$0xff]
        %v3127 = vld [vmem:[#allocation3 + $0x21] sm:$0xff]
        %v3128 = vld [vmem:[#allocation3 + $0x29] sm:$0xff]
        %v3129 = vld [vmem:[#allocation3 + $0x31] sm:$0xff]
        %v3130 = vld [vmem:[#allocation3 + $0x39] sm:$0xff]
        %v3131 = vld [vmem:[#allocation3 + $0x41] sm:$0xff]
        %v3132 = vld [vmem:[#allocation3 + $0x49] sm:$0xff]
        %v3133 = vld [vmem:[#allocation3 + $0x51] sm:$0xff]
        %v3134 = vld [vmem:[#allocation3 + $0x59] sm:$0xff]
        %v3135 = vld [vmem:[#allocation3 + $0x61] sm:$0xff]
        %v3136 = vld [vmem:[#allocation3 + $0x69] sm:$0xff]
        %v3137 = vld [vmem:[#allocation3 + $0x71] sm:$0xff]
        %v3138 = vld [vmem:[#allocation3 + $0x79] sm:$0xff]
        %v3139 = vld [vmem:[#allocation3 + $0x81] sm:$0xff]
        %v3140 = vld [vmem:[#allocation3 + $0x89] sm:$0xff]
        %v3141 = vld [vmem:[#allocation3 + $0x91] sm:$0xff]
        %v3142 = vld [vmem:[#allocation3 + $0x99] sm:$0xff]
        %v3143 = vld [vmem:[#allocation3 + $0xa1] sm:$0xff]
        %v3144 = vld [vmem:[#allocation3 + $0xa9] sm:$0xff]
        %v3145 = vld [vmem:[#allocation3 + $0xb1] sm:$0xff]
        %v3146 = vpack.c.bf16 %v3126, %v3125
        %v3147 = vpack.c.bf16 %v3128, %v3127
        %v3148 = vpack.c.bf16 %v3130, %v3129
        %v3149 = vpack.c.bf16 %v3132, %v3131
        %v3150 = vpack.c.bf16 %v3134, %v3133
        %v3151 = vpack.c.bf16 %v3136, %v3135
        %v3152 = vpack.c.bf16 %v3138, %v3137
        %v3153 = vpack.c.bf16 %v3140, %v3139
        %v3154 = vpack.c.bf16 %v3142, %v3141
        %v3155 = vpack.c.bf16 %v3144, %v3143
        %v3156 = vpack.c.bf16 %v3145, %v3145
        %s3157 = scalar_lea.vmem %s5, 64
        %v3158 = vld [vmem:[%s3157] sm:$0xf]
        %v3159 = vld [vmem:[%s3157 + $0x4] sm:$0xf]
        %v3160 = vld [vmem:[%s3157 + $0x8] sm:$0xf]
        %v3161 = vld [vmem:[%s3157 + $0xc] sm:$0xf]
        %v3166 = vunpack.c.l.b16 %v3158
        %v3167 = vunpack.c.l.b16 %v3159
        %v3168 = vunpack.c.l.b16 %v3160
        %v3169 = vunpack.c.l.b16 %v3161
        %v3170 = vpack.c.b16 %v3167, %v3166
        %v3171 = vpack.c.b16 %v3169, %v3168
        %v3175 = vsel %vm688, %v3146, 0
        %v3178 = vsel %vm688, %v3147, 0
        %v3181 = vsel %vm688, %v3148, 0
        %v3184 = vsel %vm688, %v3149, 0
        %v3187 = vsel %vm688, %v3150, 0
        %v3190 = vsel %vm688, %v3151, 0
        %v3193 = vsel %vm688, %v3152, 0
        %v3196 = vsel %vm688, %v3153, 0
        %v3199 = vsel %vm688, %v3154, 0
        %v3202 = vsel %vm688, %v3155, 0
        %v3205 = vsel %vm688, %v3156, 0
        %3207 = vmatpush.bf16.msra.mxu0 0
        %3208 = vmatpush.bf16.msra.mxu0 0
        %3209 = vmatpush.bf16.msra.mxu0 0
        %3210 = vmatpush.bf16.msra.mxu0 0
        %3211 = vmatpush.bf16.msra.mxu0 0
        %3212 = vmatpush.bf16.msra.mxu0 0
        %3213 = vmatpush.bf16.msra.mxu0 %v3171
        %3214 = vmatpush.bf16.msra.mxu0 %v3170
        %3215 = vmatmul.bf16.gmra.mxu0 %v3175
        %v3216 = vpop.f32.mrf.mxu0
        %v3217 = vadd.f32 0.0, %v3216
        %v3218 = vpop.f32.mrf.mxu0
        %v3219 = vadd.f32 0.0, %v3218
        %3220 = vmatmul.bf16.gmra.mxu0 %v3178
        %v3221 = vpop.f32.mrf.mxu0
        %v3222 = vadd.f32 0.0, %v3221
        %v3223 = vpop.f32.mrf.mxu0
        %v3224 = vadd.f32 0.0, %v3223
        %3225 = vmatmul.bf16.gmra.mxu0 %v3181
        %v3226 = vpop.f32.mrf.mxu0
        %v3227 = vadd.f32 0.0, %v3226
        %v3228 = vpop.f32.mrf.mxu0
        %v3229 = vadd.f32 0.0, %v3228
        %3230 = vmatmul.bf16.gmra.mxu0 %v3184
        %v3231 = vpop.f32.mrf.mxu0
        %v3232 = vadd.f32 0.0, %v3231
        %v3233 = vpop.f32.mrf.mxu0
        %v3234 = vadd.f32 0.0, %v3233
        %3235 = vmatmul.bf16.gmra.mxu0 %v3187
        %v3236 = vpop.f32.mrf.mxu0
        %v3237 = vadd.f32 0.0, %v3236
        %v3238 = vpop.f32.mrf.mxu0
        %v3239 = vadd.f32 0.0, %v3238
        %3240 = vmatmul.bf16.gmra.mxu0 %v3190
        %v3241 = vpop.f32.mrf.mxu0
        %v3242 = vadd.f32 0.0, %v3241
        %v3243 = vpop.f32.mrf.mxu0
        %v3244 = vadd.f32 0.0, %v3243
        %3245 = vmatmul.bf16.gmra.mxu0 %v3193
        %v3246 = vpop.f32.mrf.mxu0
        %v3247 = vadd.f32 0.0, %v3246
        %v3248 = vpop.f32.mrf.mxu0
        %v3249 = vadd.f32 0.0, %v3248
        %3250 = vmatmul.bf16.gmra.mxu0 %v3196
        %v3251 = vpop.f32.mrf.mxu0
        %v3252 = vadd.f32 0.0, %v3251
        %v3253 = vpop.f32.mrf.mxu0
        %v3254 = vadd.f32 0.0, %v3253
        %3255 = vmatmul.bf16.gmra.mxu0 %v3199
        %v3256 = vpop.f32.mrf.mxu0
        %v3257 = vadd.f32 0.0, %v3256
        %v3258 = vpop.f32.mrf.mxu0
        %v3259 = vadd.f32 0.0, %v3258
        %3260 = vmatmul.bf16.gmra.mxu0 %v3202
        %v3261 = vpop.f32.mrf.mxu0
        %v3262 = vadd.f32 0.0, %v3261
        %v3263 = vpop.f32.mrf.mxu0
        %v3264 = vadd.f32 0.0, %v3263
        %3265 = vmatmul.bf16.gmra.mxu0 %v3205
        %v3266 = vpop.f32.mrf.mxu0
        %v3267 = vadd.f32 0.0, %v3266
        %v3268 = vpop.f32.mrf.mxu0
        %3269 = vdwg.mxu0
        %v3270 = vadd.f32 %v3104, %v3217
        %v3271 = vadd.f32 %v3105, %v3219
        %v3272 = vadd.f32 %v3106, %v3222
        %v3273 = vadd.f32 %v3107, %v3224
        %v3274 = vadd.f32 %v3108, %v3227
        %v3275 = vadd.f32 %v3109, %v3229
        %v3276 = vadd.f32 %v3110, %v3232
        %v3277 = vadd.f32 %v3111, %v3234
        %v3278 = vadd.f32 %v3112, %v3237
        %v3279 = vadd.f32 %v3113, %v3239
        %v3280 = vadd.f32 %v3114, %v3242
        %v3281 = vadd.f32 %v3115, %v3244
        %v3282 = vadd.f32 %v3116, %v3247
        %v3283 = vadd.f32 %v3117, %v3249
        %v3284 = vadd.f32 %v3118, %v3252
        %v3285 = vadd.f32 %v3119, %v3254
        %v3286 = vadd.f32 %v3120, %v3257
        %v3287 = vadd.f32 %v3121, %v3259
        %v3288 = vadd.f32 %v3122, %v3262
        %v3289 = vadd.f32 %v3123, %v3264
        %v3290 = vadd.f32 %v3124, %v3267
        %v3291 = vld [vmem:[#allocation3 + $0x12] sm:$0xff]
        %v3292 = vld [vmem:[#allocation3 + $0x1a] sm:$0xff]
        %v3293 = vld [vmem:[#allocation3 + $0x22] sm:$0xff]
        %v3294 = vld [vmem:[#allocation3 + $0x2a] sm:$0xff]
        %v3295 = vld [vmem:[#allocation3 + $0x32] sm:$0xff]
        %v3296 = vld [vmem:[#allocation3 + $0x3a] sm:$0xff]
        %v3297 = vld [vmem:[#allocation3 + $0x42] sm:$0xff]
        %v3298 = vld [vmem:[#allocation3 + $0x4a] sm:$0xff]
        %v3299 = vld [vmem:[#allocation3 + $0x52] sm:$0xff]
        %v3300 = vld [vmem:[#allocation3 + $0x5a] sm:$0xff]
        %v3301 = vld [vmem:[#allocation3 + $0x62] sm:$0xff]
        %v3302 = vld [vmem:[#allocation3 + $0x6a] sm:$0xff]
        %v3303 = vld [vmem:[#allocation3 + $0x72] sm:$0xff]
        %v3304 = vld [vmem:[#allocation3 + $0x7a] sm:$0xff]
        %v3305 = vld [vmem:[#allocation3 + $0x82] sm:$0xff]
        %v3306 = vld [vmem:[#allocation3 + $0x8a] sm:$0xff]
        %v3307 = vld [vmem:[#allocation3 + $0x92] sm:$0xff]
        %v3308 = vld [vmem:[#allocation3 + $0x9a] sm:$0xff]
        %v3309 = vld [vmem:[#allocation3 + $0xa2] sm:$0xff]
        %v3310 = vld [vmem:[#allocation3 + $0xaa] sm:$0xff]
        %v3311 = vld [vmem:[#allocation3 + $0xb2] sm:$0xff]
        %v3312 = vpack.c.bf16 %v3292, %v3291
        %v3313 = vpack.c.bf16 %v3294, %v3293
        %v3314 = vpack.c.bf16 %v3296, %v3295
        %v3315 = vpack.c.bf16 %v3298, %v3297
        %v3316 = vpack.c.bf16 %v3300, %v3299
        %v3317 = vpack.c.bf16 %v3302, %v3301
        %v3318 = vpack.c.bf16 %v3304, %v3303
        %v3319 = vpack.c.bf16 %v3306, %v3305
        %v3320 = vpack.c.bf16 %v3308, %v3307
        %v3321 = vpack.c.bf16 %v3310, %v3309
        %v3322 = vpack.c.bf16 %v3311, %v3311
        %s3323 = scalar_lea.vmem %s5, 80
        %v3324 = vld [vmem:[%s3323] sm:$0xf]
        %v3325 = vld [vmem:[%s3323 + $0x4] sm:$0xf]
        %v3326 = vld [vmem:[%s3323 + $0x8] sm:$0xf]
        %v3327 = vld [vmem:[%s3323 + $0xc] sm:$0xf]
        %v3332 = vunpack.c.l.b16 %v3324
        %v3333 = vunpack.c.l.b16 %v3325
        %v3334 = vunpack.c.l.b16 %v3326
        %v3335 = vunpack.c.l.b16 %v3327
        %v3336 = vpack.c.b16 %v3333, %v3332
        %v3337 = vpack.c.b16 %v3335, %v3334
        %v3341 = vsel %vm688, %v3312, 0
        %v3344 = vsel %vm688, %v3313, 0
        %v3347 = vsel %vm688, %v3314, 0
        %v3350 = vsel %vm688, %v3315, 0
        %v3353 = vsel %vm688, %v3316, 0
        %v3356 = vsel %vm688, %v3317, 0
        %v3359 = vsel %vm688, %v3318, 0
        %v3362 = vsel %vm688, %v3319, 0
        %v3365 = vsel %vm688, %v3320, 0
        %v3368 = vsel %vm688, %v3321, 0
        %v3371 = vsel %vm688, %v3322, 0
        %3373 = vmatpush.bf16.msra.mxu0 0
        %3374 = vmatpush.bf16.msra.mxu0 0
        %3375 = vmatpush.bf16.msra.mxu0 0
        %3376 = vmatpush.bf16.msra.mxu0 0
        %3377 = vmatpush.bf16.msra.mxu0 0
        %3378 = vmatpush.bf16.msra.mxu0 0
        %3379 = vmatpush.bf16.msra.mxu0 %v3337
        %3380 = vmatpush.bf16.msra.mxu0 %v3336
        %3381 = vmatmul.bf16.gmra.mxu0 %v3341
        %v3382 = vpop.f32.mrf.mxu0
        %v3383 = vadd.f32 0.0, %v3382
        %v3384 = vpop.f32.mrf.mxu0
        %v3385 = vadd.f32 0.0, %v3384
        %3386 = vmatmul.bf16.gmra.mxu0 %v3344
        %v3387 = vpop.f32.mrf.mxu0
        %v3388 = vadd.f32 0.0, %v3387
        %v3389 = vpop.f32.mrf.mxu0
        %v3390 = vadd.f32 0.0, %v3389
        %3391 = vmatmul.bf16.gmra.mxu0 %v3347
        %v3392 = vpop.f32.mrf.mxu0
        %v3393 = vadd.f32 0.0, %v3392
        %v3394 = vpop.f32.mrf.mxu0
        %v3395 = vadd.f32 0.0, %v3394
        %3396 = vmatmul.bf16.gmra.mxu0 %v3350
        %v3397 = vpop.f32.mrf.mxu0
        %v3398 = vadd.f32 0.0, %v3397
        %v3399 = vpop.f32.mrf.mxu0
        %v3400 = vadd.f32 0.0, %v3399
        %3401 = vmatmul.bf16.gmra.mxu0 %v3353
        %v3402 = vpop.f32.mrf.mxu0
        %v3403 = vadd.f32 0.0, %v3402
        %v3404 = vpop.f32.mrf.mxu0
        %v3405 = vadd.f32 0.0, %v3404
        %3406 = vmatmul.bf16.gmra.mxu0 %v3356
        %v3407 = vpop.f32.mrf.mxu0
        %v3408 = vadd.f32 0.0, %v3407
        %v3409 = vpop.f32.mrf.mxu0
        %v3410 = vadd.f32 0.0, %v3409
        %3411 = vmatmul.bf16.gmra.mxu0 %v3359
        %v3412 = vpop.f32.mrf.mxu0
        %v3413 = vadd.f32 0.0, %v3412
        %v3414 = vpop.f32.mrf.mxu0
        %v3415 = vadd.f32 0.0, %v3414
        %3416 = vmatmul.bf16.gmra.mxu0 %v3362
        %v3417 = vpop.f32.mrf.mxu0
        %v3418 = vadd.f32 0.0, %v3417
        %v3419 = vpop.f32.mrf.mxu0
        %v3420 = vadd.f32 0.0, %v3419
        %3421 = vmatmul.bf16.gmra.mxu0 %v3365
        %v3422 = vpop.f32.mrf.mxu0
        %v3423 = vadd.f32 0.0, %v3422
        %v3424 = vpop.f32.mrf.mxu0
        %v3425 = vadd.f32 0.0, %v3424
        %3426 = vmatmul.bf16.gmra.mxu0 %v3368
        %v3427 = vpop.f32.mrf.mxu0
        %v3428 = vadd.f32 0.0, %v3427
        %v3429 = vpop.f32.mrf.mxu0
        %v3430 = vadd.f32 0.0, %v3429
        %3431 = vmatmul.bf16.gmra.mxu0 %v3371
        %v3432 = vpop.f32.mrf.mxu0
        %v3433 = vadd.f32 0.0, %v3432
        %v3434 = vpop.f32.mrf.mxu0
        %3435 = vdwg.mxu0
        %v3436 = vadd.f32 %v3270, %v3383
        %v3437 = vadd.f32 %v3271, %v3385
        %v3438 = vadd.f32 %v3272, %v3388
        %v3439 = vadd.f32 %v3273, %v3390
        %v3440 = vadd.f32 %v3274, %v3393
        %v3441 = vadd.f32 %v3275, %v3395
        %v3442 = vadd.f32 %v3276, %v3398
        %v3443 = vadd.f32 %v3277, %v3400
        %v3444 = vadd.f32 %v3278, %v3403
        %v3445 = vadd.f32 %v3279, %v3405
        %v3446 = vadd.f32 %v3280, %v3408
        %v3447 = vadd.f32 %v3281, %v3410
        %v3448 = vadd.f32 %v3282, %v3413
        %v3449 = vadd.f32 %v3283, %v3415
        %v3450 = vadd.f32 %v3284, %v3418
        %v3451 = vadd.f32 %v3285, %v3420
        %v3452 = vadd.f32 %v3286, %v3423
        %v3453 = vadd.f32 %v3287, %v3425
        %v3454 = vadd.f32 %v3288, %v3428
        %v3455 = vadd.f32 %v3289, %v3430
        %v3456 = vadd.f32 %v3290, %v3433
        %v3457 = vld [vmem:[#allocation3 + $0x20] sm:$0xff]
        %v3458 = vld [vmem:[#allocation3 + $0x28] sm:$0xff]
        %v3459 = vld [vmem:[#allocation3 + $0x30] sm:$0xff]
        %v3460 = vld [vmem:[#allocation3 + $0x38] sm:$0xff]
        %v3461 = vld [vmem:[#allocation3 + $0x40] sm:$0xff]
        %v3462 = vld [vmem:[#allocation3 + $0x48] sm:$0xff]
        %v3463 = vld [vmem:[#allocation3 + $0x50] sm:$0xff]
        %v3464 = vld [vmem:[#allocation3 + $0x58] sm:$0xff]
        %v3465 = vld [vmem:[#allocation3 + $0x60] sm:$0xff]
        %v3466 = vld [vmem:[#allocation3 + $0x68] sm:$0xff]
        %v3467 = vld [vmem:[#allocation3 + $0x70] sm:$0xff]
        %v3468 = vld [vmem:[#allocation3 + $0x78] sm:$0xff]
        %v3469 = vld [vmem:[#allocation3 + $0x80] sm:$0xff]
        %v3470 = vld [vmem:[#allocation3 + $0x88] sm:$0xff]
        %v3471 = vld [vmem:[#allocation3 + $0x90] sm:$0xff]
        %v3472 = vld [vmem:[#allocation3 + $0x98] sm:$0xff]
        %v3473 = vld [vmem:[#allocation3 + $0xa0] sm:$0xff]
        %v3474 = vld [vmem:[#allocation3 + $0xa8] sm:$0xff]
        %v3475 = vld [vmem:[#allocation3 + $0xb0] sm:$0xff]
        %v3476 = vld [vmem:[#allocation3 + $0xb8] sm:$0xff]
        %v3477 = vld [vmem:[#allocation3 + $0xc0] sm:$0xff]
        %v3478 = vpack.c.bf16 %v3458, %v3457
        %v3479 = vpack.c.bf16 %v3460, %v3459
        %v3480 = vpack.c.bf16 %v3462, %v3461
        %v3481 = vpack.c.bf16 %v3464, %v3463
        %v3482 = vpack.c.bf16 %v3466, %v3465
        %v3483 = vpack.c.bf16 %v3468, %v3467
        %v3484 = vpack.c.bf16 %v3470, %v3469
        %v3485 = vpack.c.bf16 %v3472, %v3471
        %v3486 = vpack.c.bf16 %v3474, %v3473
        %v3487 = vpack.c.bf16 %v3476, %v3475
        %v3488 = vpack.c.bf16 %v3477, %v3477
        %s3489 = scalar_lea.vmem %s5, 96
        %v3490 = vld [vmem:[%s3489] sm:$0xf]
        %v3491 = vld [vmem:[%s3489 + $0x4] sm:$0xf]
        %v3492 = vld [vmem:[%s3489 + $0x8] sm:$0xf]
        %v3493 = vld [vmem:[%s3489 + $0xc] sm:$0xf]
        %v3498 = vunpack.c.l.b16 %v3490
        %v3499 = vunpack.c.l.b16 %v3491
        %v3500 = vunpack.c.l.b16 %v3492
        %v3501 = vunpack.c.l.b16 %v3493
        %v3502 = vpack.c.b16 %v3499, %v3498
        %v3503 = vpack.c.b16 %v3501, %v3500
        %v3507 = vsel %vm688, %v3478, 0
        %v3510 = vsel %vm688, %v3479, 0
        %v3513 = vsel %vm688, %v3480, 0
        %v3516 = vsel %vm688, %v3481, 0
        %v3519 = vsel %vm688, %v3482, 0
        %v3522 = vsel %vm688, %v3483, 0
        %v3525 = vsel %vm688, %v3484, 0
        %v3528 = vsel %vm688, %v3485, 0
        %v3531 = vsel %vm688, %v3486, 0
        %v3534 = vsel %vm688, %v3487, 0
        %v3537 = vsel %vm688, %v3488, 0
        %3539 = vmatpush.bf16.msra.mxu0 0
        %3540 = vmatpush.bf16.msra.mxu0 0
        %3541 = vmatpush.bf16.msra.mxu0 0
        %3542 = vmatpush.bf16.msra.mxu0 0
        %3543 = vmatpush.bf16.msra.mxu0 0
        %3544 = vmatpush.bf16.msra.mxu0 0
        %3545 = vmatpush.bf16.msra.mxu0 %v3503
        %3546 = vmatpush.bf16.msra.mxu0 %v3502
        %3547 = vmatmul.bf16.gmra.mxu0 %v3507
        %v3548 = vpop.f32.mrf.mxu0
        %v3549 = vadd.f32 0.0, %v3548
        %v3550 = vpop.f32.mrf.mxu0
        %v3551 = vadd.f32 0.0, %v3550
        %3552 = vmatmul.bf16.gmra.mxu0 %v3510
        %v3553 = vpop.f32.mrf.mxu0
        %v3554 = vadd.f32 0.0, %v3553
        %v3555 = vpop.f32.mrf.mxu0
        %v3556 = vadd.f32 0.0, %v3555
        %3557 = vmatmul.bf16.gmra.mxu0 %v3513
        %v3558 = vpop.f32.mrf.mxu0
        %v3559 = vadd.f32 0.0, %v3558
        %v3560 = vpop.f32.mrf.mxu0
        %v3561 = vadd.f32 0.0, %v3560
        %3562 = vmatmul.bf16.gmra.mxu0 %v3516
        %v3563 = vpop.f32.mrf.mxu0
        %v3564 = vadd.f32 0.0, %v3563
        %v3565 = vpop.f32.mrf.mxu0
        %v3566 = vadd.f32 0.0, %v3565
        %3567 = vmatmul.bf16.gmra.mxu0 %v3519
        %v3568 = vpop.f32.mrf.mxu0
        %v3569 = vadd.f32 0.0, %v3568
        %v3570 = vpop.f32.mrf.mxu0
        %v3571 = vadd.f32 0.0, %v3570
        %3572 = vmatmul.bf16.gmra.mxu0 %v3522
        %v3573 = vpop.f32.mrf.mxu0
        %v3574 = vadd.f32 0.0, %v3573
        %v3575 = vpop.f32.mrf.mxu0
        %v3576 = vadd.f32 0.0, %v3575
        %3577 = vmatmul.bf16.gmra.mxu0 %v3525
        %v3578 = vpop.f32.mrf.mxu0
        %v3579 = vadd.f32 0.0, %v3578
        %v3580 = vpop.f32.mrf.mxu0
        %v3581 = vadd.f32 0.0, %v3580
        %3582 = vmatmul.bf16.gmra.mxu0 %v3528
        %v3583 = vpop.f32.mrf.mxu0
        %v3584 = vadd.f32 0.0, %v3583
        %v3585 = vpop.f32.mrf.mxu0
        %v3586 = vadd.f32 0.0, %v3585
        %3587 = vmatmul.bf16.gmra.mxu0 %v3531
        %v3588 = vpop.f32.mrf.mxu0
        %v3589 = vadd.f32 0.0, %v3588
        %v3590 = vpop.f32.mrf.mxu0
        %v3591 = vadd.f32 0.0, %v3590
        %3592 = vmatmul.bf16.gmra.mxu0 %v3534
        %v3593 = vpop.f32.mrf.mxu0
        %v3594 = vadd.f32 0.0, %v3593
        %v3595 = vpop.f32.mrf.mxu0
        %v3596 = vadd.f32 0.0, %v3595
        %3597 = vmatmul.bf16.gmra.mxu0 %v3537
        %v3598 = vpop.f32.mrf.mxu0
        %v3599 = vadd.f32 0.0, %v3598
        %v3600 = vpop.f32.mrf.mxu0
        %3601 = vdwg.mxu0
        %v3602 = vadd.f32 %v3436, %v3549
        %v3603 = vadd.f32 %v3437, %v3551
        %v3604 = vadd.f32 %v3438, %v3554
        %v3605 = vadd.f32 %v3439, %v3556
        %v3606 = vadd.f32 %v3440, %v3559
        %v3607 = vadd.f32 %v3441, %v3561
        %v3608 = vadd.f32 %v3442, %v3564
        %v3609 = vadd.f32 %v3443, %v3566
        %v3610 = vadd.f32 %v3444, %v3569
        %v3611 = vadd.f32 %v3445, %v3571
        %v3612 = vadd.f32 %v3446, %v3574
        %v3613 = vadd.f32 %v3447, %v3576
        %v3614 = vadd.f32 %v3448, %v3579
        %v3615 = vadd.f32 %v3449, %v3581
        %v3616 = vadd.f32 %v3450, %v3584
        %v3617 = vadd.f32 %v3451, %v3586
        %v3618 = vadd.f32 %v3452, %v3589
        %v3619 = vadd.f32 %v3453, %v3591
        %v3620 = vadd.f32 %v3454, %v3594
        %v3621 = vadd.f32 %v3455, %v3596
        %v3622 = vadd.f32 %v3456, %v3599
        %v3623 = vld [vmem:[#allocation3 + $0x21] sm:$0xff]
        %v3624 = vld [vmem:[#allocation3 + $0x29] sm:$0xff]
        %v3625 = vld [vmem:[#allocation3 + $0x31] sm:$0xff]
        %v3626 = vld [vmem:[#allocation3 + $0x39] sm:$0xff]
        %v3627 = vld [vmem:[#allocation3 + $0x41] sm:$0xff]
        %v3628 = vld [vmem:[#allocation3 + $0x49] sm:$0xff]
        %v3629 = vld [vmem:[#allocation3 + $0x51] sm:$0xff]
        %v3630 = vld [vmem:[#allocation3 + $0x59] sm:$0xff]
        %v3631 = vld [vmem:[#allocation3 + $0x61] sm:$0xff]
        %v3632 = vld [vmem:[#allocation3 + $0x69] sm:$0xff]
        %v3633 = vld [vmem:[#allocation3 + $0x71] sm:$0xff]
        %v3634 = vld [vmem:[#allocation3 + $0x79] sm:$0xff]
        %v3635 = vld [vmem:[#allocation3 + $0x81] sm:$0xff]
        %v3636 = vld [vmem:[#allocation3 + $0x89] sm:$0xff]
        %v3637 = vld [vmem:[#allocation3 + $0x91] sm:$0xff]
        %v3638 = vld [vmem:[#allocation3 + $0x99] sm:$0xff]
        %v3639 = vld [vmem:[#allocation3 + $0xa1] sm:$0xff]
        %v3640 = vld [vmem:[#allocation3 + $0xa9] sm:$0xff]
        %v3641 = vld [vmem:[#allocation3 + $0xb1] sm:$0xff]
        %v3642 = vld [vmem:[#allocation3 + $0xb9] sm:$0xff]
        %v3643 = vld [vmem:[#allocation3 + $0xc1] sm:$0xff]
        %v3644 = vpack.c.bf16 %v3624, %v3623
        %v3645 = vpack.c.bf16 %v3626, %v3625
        %v3646 = vpack.c.bf16 %v3628, %v3627
        %v3647 = vpack.c.bf16 %v3630, %v3629
        %v3648 = vpack.c.bf16 %v3632, %v3631
        %v3649 = vpack.c.bf16 %v3634, %v3633
        %v3650 = vpack.c.bf16 %v3636, %v3635
        %v3651 = vpack.c.bf16 %v3638, %v3637
        %v3652 = vpack.c.bf16 %v3640, %v3639
        %v3653 = vpack.c.bf16 %v3642, %v3641
        %v3654 = vpack.c.bf16 %v3643, %v3643
        %s3655 = scalar_lea.vmem %s5, 112
        %v3656 = vld [vmem:[%s3655] sm:$0xf]
        %v3657 = vld [vmem:[%s3655 + $0x4] sm:$0xf]
        %v3658 = vld [vmem:[%s3655 + $0x8] sm:$0xf]
        %v3659 = vld [vmem:[%s3655 + $0xc] sm:$0xf]
        %v3664 = vunpack.c.l.b16 %v3656
        %v3665 = vunpack.c.l.b16 %v3657
        %v3666 = vunpack.c.l.b16 %v3658
        %v3667 = vunpack.c.l.b16 %v3659
        %v3668 = vpack.c.b16 %v3665, %v3664
        %v3669 = vpack.c.b16 %v3667, %v3666
        %v3673 = vsel %vm688, %v3644, 0
        %v3676 = vsel %vm688, %v3645, 0
        %v3679 = vsel %vm688, %v3646, 0
        %v3682 = vsel %vm688, %v3647, 0
        %v3685 = vsel %vm688, %v3648, 0
        %v3688 = vsel %vm688, %v3649, 0
        %v3691 = vsel %vm688, %v3650, 0
        %v3694 = vsel %vm688, %v3651, 0
        %v3697 = vsel %vm688, %v3652, 0
        %v3700 = vsel %vm688, %v3653, 0
        %v3703 = vsel %vm688, %v3654, 0
        %3705 = vmatpush.bf16.msra.mxu0 0
        %3706 = vmatpush.bf16.msra.mxu0 0
        %3707 = vmatpush.bf16.msra.mxu0 0
        %3708 = vmatpush.bf16.msra.mxu0 0
        %3709 = vmatpush.bf16.msra.mxu0 0
        %3710 = vmatpush.bf16.msra.mxu0 0
        %3711 = vmatpush.bf16.msra.mxu0 %v3669
        %3712 = vmatpush.bf16.msra.mxu0 %v3668
        %3713 = vmatmul.bf16.gmra.mxu0 %v3673
        %v3714 = vpop.f32.mrf.mxu0
        %v3715 = vadd.f32 0.0, %v3714
        %v3716 = vpop.f32.mrf.mxu0
        %v3717 = vadd.f32 0.0, %v3716
        %3718 = vmatmul.bf16.gmra.mxu0 %v3676
        %v3719 = vpop.f32.mrf.mxu0
        %v3720 = vadd.f32 0.0, %v3719
        %v3721 = vpop.f32.mrf.mxu0
        %v3722 = vadd.f32 0.0, %v3721
        %3723 = vmatmul.bf16.gmra.mxu0 %v3679
        %v3724 = vpop.f32.mrf.mxu0
        %v3725 = vadd.f32 0.0, %v3724
        %v3726 = vpop.f32.mrf.mxu0
        %v3727 = vadd.f32 0.0, %v3726
        %3728 = vmatmul.bf16.gmra.mxu0 %v3682
        %v3729 = vpop.f32.mrf.mxu0
        %v3730 = vadd.f32 0.0, %v3729
        %v3731 = vpop.f32.mrf.mxu0
        %v3732 = vadd.f32 0.0, %v3731
        %3733 = vmatmul.bf16.gmra.mxu0 %v3685
        %v3734 = vpop.f32.mrf.mxu0
        %v3735 = vadd.f32 0.0, %v3734
        %v3736 = vpop.f32.mrf.mxu0
        %v3737 = vadd.f32 0.0, %v3736
        %3738 = vmatmul.bf16.gmra.mxu0 %v3688
        %v3739 = vpop.f32.mrf.mxu0
        %v3740 = vadd.f32 0.0, %v3739
        %v3741 = vpop.f32.mrf.mxu0
        %v3742 = vadd.f32 0.0, %v3741
        %3743 = vmatmul.bf16.gmra.mxu0 %v3691
        %v3744 = vpop.f32.mrf.mxu0
        %v3745 = vadd.f32 0.0, %v3744
        %v3746 = vpop.f32.mrf.mxu0
        %v3747 = vadd.f32 0.0, %v3746
        %3748 = vmatmul.bf16.gmra.mxu0 %v3694
        %v3749 = vpop.f32.mrf.mxu0
        %v3750 = vadd.f32 0.0, %v3749
        %v3751 = vpop.f32.mrf.mxu0
        %v3752 = vadd.f32 0.0, %v3751
        %3753 = vmatmul.bf16.gmra.mxu0 %v3697
        %v3754 = vpop.f32.mrf.mxu0
        %v3755 = vadd.f32 0.0, %v3754
        %v3756 = vpop.f32.mrf.mxu0
        %v3757 = vadd.f32 0.0, %v3756
        %3758 = vmatmul.bf16.gmra.mxu0 %v3700
        %v3759 = vpop.f32.mrf.mxu0
        %v3760 = vadd.f32 0.0, %v3759
        %v3761 = vpop.f32.mrf.mxu0
        %v3762 = vadd.f32 0.0, %v3761
        %3763 = vmatmul.bf16.gmra.mxu0 %v3703
        %v3764 = vpop.f32.mrf.mxu0
        %v3765 = vadd.f32 0.0, %v3764
        %v3766 = vpop.f32.mrf.mxu0
        %3767 = vdwg.mxu0
        %v3768 = vadd.f32 %v3602, %v3715
        %v3769 = vadd.f32 %v3603, %v3717
        %v3770 = vadd.f32 %v3604, %v3720
        %v3771 = vadd.f32 %v3605, %v3722
        %v3772 = vadd.f32 %v3606, %v3725
        %v3773 = vadd.f32 %v3607, %v3727
        %v3774 = vadd.f32 %v3608, %v3730
        %v3775 = vadd.f32 %v3609, %v3732
        %v3776 = vadd.f32 %v3610, %v3735
        %v3777 = vadd.f32 %v3611, %v3737
        %v3778 = vadd.f32 %v3612, %v3740
        %v3779 = vadd.f32 %v3613, %v3742
        %v3780 = vadd.f32 %v3614, %v3745
        %v3781 = vadd.f32 %v3615, %v3747
        %v3782 = vadd.f32 %v3616, %v3750
        %v3783 = vadd.f32 %v3617, %v3752
        %v3784 = vadd.f32 %v3618, %v3755
        %v3785 = vadd.f32 %v3619, %v3757
        %v3786 = vadd.f32 %v3620, %v3760
        %v3787 = vadd.f32 %v3621, %v3762
        %v3788 = vadd.f32 %v3622, %v3765
        %v3789 = vld [vmem:[#allocation3 + $0x22] sm:$0xff]
        %v3790 = vld [vmem:[#allocation3 + $0x2a] sm:$0xff]
        %v3791 = vld [vmem:[#allocation3 + $0x32] sm:$0xff]
        %v3792 = vld [vmem:[#allocation3 + $0x3a] sm:$0xff]
        %v3793 = vld [vmem:[#allocation3 + $0x42] sm:$0xff]
        %v3794 = vld [vmem:[#allocation3 + $0x4a] sm:$0xff]
        %v3795 = vld [vmem:[#allocation3 + $0x52] sm:$0xff]
        %v3796 = vld [vmem:[#allocation3 + $0x5a] sm:$0xff]
        %v3797 = vld [vmem:[#allocation3 + $0x62] sm:$0xff]
        %v3798 = vld [vmem:[#allocation3 + $0x6a] sm:$0xff]
        %v3799 = vld [vmem:[#allocation3 + $0x72] sm:$0xff]
        %v3800 = vld [vmem:[#allocation3 + $0x7a] sm:$0xff]
        %v3801 = vld [vmem:[#allocation3 + $0x82] sm:$0xff]
        %v3802 = vld [vmem:[#allocation3 + $0x8a] sm:$0xff]
        %v3803 = vld [vmem:[#allocation3 + $0x92] sm:$0xff]
        %v3804 = vld [vmem:[#allocation3 + $0x9a] sm:$0xff]
        %v3805 = vld [vmem:[#allocation3 + $0xa2] sm:$0xff]
        %v3806 = vld [vmem:[#allocation3 + $0xaa] sm:$0xff]
        %v3807 = vld [vmem:[#allocation3 + $0xb2] sm:$0xff]
        %v3808 = vld [vmem:[#allocation3 + $0xba] sm:$0xff]
        %v3809 = vld [vmem:[#allocation3 + $0xc2] sm:$0xff]
        %v3810 = vpack.c.bf16 %v3790, %v3789
        %v3811 = vpack.c.bf16 %v3792, %v3791
        %v3812 = vpack.c.bf16 %v3794, %v3793
        %v3813 = vpack.c.bf16 %v3796, %v3795
        %v3814 = vpack.c.bf16 %v3798, %v3797
        %v3815 = vpack.c.bf16 %v3800, %v3799
        %v3816 = vpack.c.bf16 %v3802, %v3801
        %v3817 = vpack.c.bf16 %v3804, %v3803
        %v3818 = vpack.c.bf16 %v3806, %v3805
        %v3819 = vpack.c.bf16 %v3808, %v3807
        %v3820 = vpack.c.bf16 %v3809, %v3809
        %s3821 = scalar_lea.vmem %s5, 128
        %v3822 = vld [vmem:[%s3821] sm:$0xf]
        %v3823 = vld [vmem:[%s3821 + $0x4] sm:$0xf]
        %v3824 = vld [vmem:[%s3821 + $0x8] sm:$0xf]
        %v3825 = vld [vmem:[%s3821 + $0xc] sm:$0xf]
        %v3830 = vunpack.c.l.b16 %v3822
        %v3831 = vunpack.c.l.b16 %v3823
        %v3832 = vunpack.c.l.b16 %v3824
        %v3833 = vunpack.c.l.b16 %v3825
        %v3834 = vpack.c.b16 %v3831, %v3830
        %v3835 = vpack.c.b16 %v3833, %v3832
        %v3839 = vsel %vm688, %v3810, 0
        %v3842 = vsel %vm688, %v3811, 0
        %v3845 = vsel %vm688, %v3812, 0
        %v3848 = vsel %vm688, %v3813, 0
        %v3851 = vsel %vm688, %v3814, 0
        %v3854 = vsel %vm688, %v3815, 0
        %v3857 = vsel %vm688, %v3816, 0
        %v3860 = vsel %vm688, %v3817, 0
        %v3863 = vsel %vm688, %v3818, 0
        %v3866 = vsel %vm688, %v3819, 0
        %v3869 = vsel %vm688, %v3820, 0
        %3871 = vmatpush.bf16.msra.mxu0 0
        %3872 = vmatpush.bf16.msra.mxu0 0
        %3873 = vmatpush.bf16.msra.mxu0 0
        %3874 = vmatpush.bf16.msra.mxu0 0
        %3875 = vmatpush.bf16.msra.mxu0 0
        %3876 = vmatpush.bf16.msra.mxu0 0
        %3877 = vmatpush.bf16.msra.mxu0 %v3835
        %3878 = vmatpush.bf16.msra.mxu0 %v3834
        %3879 = vmatmul.bf16.gmra.mxu0 %v3839
        %v3880 = vpop.f32.mrf.mxu0
        %v3881 = vadd.f32 0.0, %v3880
        %v3882 = vpop.f32.mrf.mxu0
        %v3883 = vadd.f32 0.0, %v3882
        %3884 = vmatmul.bf16.gmra.mxu0 %v3842
        %v3885 = vpop.f32.mrf.mxu0
        %v3886 = vadd.f32 0.0, %v3885
        %v3887 = vpop.f32.mrf.mxu0
        %v3888 = vadd.f32 0.0, %v3887
        %3889 = vmatmul.bf16.gmra.mxu0 %v3845
        %v3890 = vpop.f32.mrf.mxu0
        %v3891 = vadd.f32 0.0, %v3890
        %v3892 = vpop.f32.mrf.mxu0
        %v3893 = vadd.f32 0.0, %v3892
        %3894 = vmatmul.bf16.gmra.mxu0 %v3848
        %v3895 = vpop.f32.mrf.mxu0
        %v3896 = vadd.f32 0.0, %v3895
        %v3897 = vpop.f32.mrf.mxu0
        %v3898 = vadd.f32 0.0, %v3897
        %3899 = vmatmul.bf16.gmra.mxu0 %v3851
        %v3900 = vpop.f32.mrf.mxu0
        %v3901 = vadd.f32 0.0, %v3900
        %v3902 = vpop.f32.mrf.mxu0
        %v3903 = vadd.f32 0.0, %v3902
        %3904 = vmatmul.bf16.gmra.mxu0 %v3854
        %v3905 = vpop.f32.mrf.mxu0
        %v3906 = vadd.f32 0.0, %v3905
        %v3907 = vpop.f32.mrf.mxu0
        %v3908 = vadd.f32 0.0, %v3907
        %3909 = vmatmul.bf16.gmra.mxu0 %v3857
        %v3910 = vpop.f32.mrf.mxu0
        %v3911 = vadd.f32 0.0, %v3910
        %v3912 = vpop.f32.mrf.mxu0
        %v3913 = vadd.f32 0.0, %v3912
        %3914 = vmatmul.bf16.gmra.mxu0 %v3860
        %v3915 = vpop.f32.mrf.mxu0
        %v3916 = vadd.f32 0.0, %v3915
        %v3917 = vpop.f32.mrf.mxu0
        %v3918 = vadd.f32 0.0, %v3917
        %3919 = vmatmul.bf16.gmra.mxu0 %v3863
        %v3920 = vpop.f32.mrf.mxu0
        %v3921 = vadd.f32 0.0, %v3920
        %v3922 = vpop.f32.mrf.mxu0
        %v3923 = vadd.f32 0.0, %v3922
        %3924 = vmatmul.bf16.gmra.mxu0 %v3866
        %v3925 = vpop.f32.mrf.mxu0
        %v3926 = vadd.f32 0.0, %v3925
        %v3927 = vpop.f32.mrf.mxu0
        %v3928 = vadd.f32 0.0, %v3927
        %3929 = vmatmul.bf16.gmra.mxu0 %v3869
        %v3930 = vpop.f32.mrf.mxu0
        %v3931 = vadd.f32 0.0, %v3930
        %v3932 = vpop.f32.mrf.mxu0
        %3933 = vdwg.mxu0
        %v3934 = vadd.f32 %v3768, %v3881
        %v3935 = vadd.f32 %v3769, %v3883
        %v3936 = vadd.f32 %v3770, %v3886
        %v3937 = vadd.f32 %v3771, %v3888
        %v3938 = vadd.f32 %v3772, %v3891
        %v3939 = vadd.f32 %v3773, %v3893
        %v3940 = vadd.f32 %v3774, %v3896
        %v3941 = vadd.f32 %v3775, %v3898
        %v3942 = vadd.f32 %v3776, %v3901
        %v3943 = vadd.f32 %v3777, %v3903
        %v3944 = vadd.f32 %v3778, %v3906
        %v3945 = vadd.f32 %v3779, %v3908
        %v3946 = vadd.f32 %v3780, %v3911
        %v3947 = vadd.f32 %v3781, %v3913
        %v3948 = vadd.f32 %v3782, %v3916
        %v3949 = vadd.f32 %v3783, %v3918
        %v3950 = vadd.f32 %v3784, %v3921
        %v3951 = vadd.f32 %v3785, %v3923
        %v3952 = vadd.f32 %v3786, %v3926
        %v3953 = vadd.f32 %v3787, %v3928
        %v3954 = vadd.f32 %v3788, %v3931
        %v3955 = vld [vmem:[%s6] sm:$0x1]
        %v3957 = vperm.slane %v3955, 0
        %v3959 = vadd.f32 %v3934, %v3957
        %v3960 = vadd.f32 %v3935, %v3957
        %v3961 = vadd.f32 %v3936, %v3957
        %v3962 = vadd.f32 %v3937, %v3957
        %v3963 = vadd.f32 %v3938, %v3957
        %v3964 = vadd.f32 %v3939, %v3957
        %v3965 = vadd.f32 %v3940, %v3957
        %v3966 = vadd.f32 %v3941, %v3957
        %v3967 = vadd.f32 %v3942, %v3957
        %v3968 = vadd.f32 %v3943, %v3957
        %v3969 = vadd.f32 %v3944, %v3957
        %v3970 = vadd.f32 %v3945, %v3957
        %v3971 = vadd.f32 %v3946, %v3957
        %v3972 = vadd.f32 %v3947, %v3957
        %v3973 = vadd.f32 %v3948, %v3957
        %v3974 = vadd.f32 %v3949, %v3957
        %v3975 = vadd.f32 %v3950, %v3957
        %v3976 = vadd.f32 %v3951, %v3957
        %v3977 = vadd.f32 %v3952, %v3957
        %v3978 = vadd.f32 %v3953, %v3957
        %v3979 = vadd.f32 %v3954, %v3957
        %v3980 = vmax.f32 %v3959, 0.0
        %v3981 = vmax.f32 %v3960, 0.0
        %v3982 = vmax.f32 %v3961, 0.0
        %v3983 = vmax.f32 %v3962, 0.0
        %v3984 = vmax.f32 %v3963, 0.0
        %v3985 = vmax.f32 %v3964, 0.0
        %v3986 = vmax.f32 %v3965, 0.0
        %v3987 = vmax.f32 %v3966, 0.0
        %v3988 = vmax.f32 %v3967, 0.0
        %v3989 = vmax.f32 %v3968, 0.0
        %v3990 = vmax.f32 %v3969, 0.0
        %v3991 = vmax.f32 %v3970, 0.0
        %v3992 = vmax.f32 %v3971, 0.0
        %v3993 = vmax.f32 %v3972, 0.0
        %v3994 = vmax.f32 %v3973, 0.0
        %v3995 = vmax.f32 %v3974, 0.0
        %v3996 = vmax.f32 %v3975, 0.0
        %v3997 = vmax.f32 %v3976, 0.0
        %v3998 = vmax.f32 %v3977, 0.0
        %v3999 = vmax.f32 %v3978, 0.0
        %v4000 = vmax.f32 %v3979, 0.0
        %vm4001 = vcmask 523264
        %4002 = vst.msk [vmem:[#allocation4] sm:$0xff] %vm4001, %v3980
        %4003 = vst.msk [vmem:[#allocation4 + $0x8] sm:$0xff] %vm4001, %v3981
        %4004 = vst.msk [vmem:[#allocation4 + $0x10] sm:$0xff] %vm4001, %v3982
        %4005 = vst.msk [vmem:[#allocation4 + $0x18] sm:$0xff] %vm4001, %v3983
        %4006 = vst.msk [vmem:[#allocation4 + $0x20] sm:$0xff] %vm4001, %v3984
        %4007 = vst.msk [vmem:[#allocation4 + $0x28] sm:$0xff] %vm4001, %v3985
        %4008 = vst.msk [vmem:[#allocation4 + $0x30] sm:$0xff] %vm4001, %v3986
        %4009 = vst.msk [vmem:[#allocation4 + $0x38] sm:$0xff] %vm4001, %v3987
        %4010 = vst.msk [vmem:[#allocation4 + $0x40] sm:$0xff] %vm4001, %v3988
        %4011 = vst.msk [vmem:[#allocation4 + $0x48] sm:$0xff] %vm4001, %v3989
        %4012 = vst.msk [vmem:[#allocation4 + $0x50] sm:$0xff] %vm4001, %v3990
        %4013 = vst.msk [vmem:[#allocation4 + $0x58] sm:$0xff] %vm4001, %v3991
        %4014 = vst.msk [vmem:[#allocation4 + $0x60] sm:$0xff] %vm4001, %v3992
        %4015 = vst.msk [vmem:[#allocation4 + $0x68] sm:$0xff] %vm4001, %v3993
        %4016 = vst.msk [vmem:[#allocation4 + $0x70] sm:$0xff] %vm4001, %v3994
        %4017 = vst.msk [vmem:[#allocation4 + $0x78] sm:$0xff] %vm4001, %v3995
        %4018 = vst.msk [vmem:[#allocation4 + $0x80] sm:$0xff] %vm4001, %v3996
        %4019 = vst.msk [vmem:[#allocation4 + $0x88] sm:$0xff] %vm4001, %v3997
        %4020 = vst.msk [vmem:[#allocation4 + $0x90] sm:$0xff] %vm4001, %v3998
        %4021 = vst.msk [vmem:[#allocation4 + $0x98] sm:$0xff] %vm4001, %v3999
        %4022 = vst.msk [vmem:[#allocation4 + $0xa0] sm:$0xff] %vm4001, %v4000
        %v4023 = vld [vmem:[#allocation4] sm:$0xff]
        %v4024 = vld [vmem:[#allocation4 + $0x8] sm:$0xff]
        %v4025 = vld [vmem:[#allocation4 + $0x10] sm:$0xff]
        %v4026 = vld [vmem:[#allocation4 + $0x18] sm:$0xff]
        %v4027 = vld [vmem:[#allocation4 + $0x20] sm:$0xff]
        %v4028 = vld [vmem:[#allocation4 + $0x28] sm:$0xff]
        %v4029 = vld [vmem:[#allocation4 + $0x30] sm:$0xff]
        %v4030 = vld [vmem:[#allocation4 + $0x38] sm:$0xff]
        %v4031 = vld [vmem:[#allocation4 + $0x40] sm:$0xff]
        %v4032 = vld [vmem:[#allocation4 + $0x48] sm:$0xff]
        %v4033 = vld [vmem:[#allocation4 + $0x50] sm:$0xff]
        %v4034 = vld [vmem:[#allocation4 + $0x58] sm:$0xff]
        %v4035 = vld [vmem:[#allocation4 + $0x60] sm:$0xff]
        %v4036 = vld [vmem:[#allocation4 + $0x68] sm:$0xff]
        %v4037 = vld [vmem:[#allocation4 + $0x70] sm:$0xff]
        %v4038 = vld [vmem:[#allocation4 + $0x78] sm:$0xff]
        %v4039 = vpack.c.bf16 %v4024, %v4023
        %v4040 = vpack.c.bf16 %v4026, %v4025
        %v4041 = vpack.c.bf16 %v4028, %v4027
        %v4042 = vpack.c.bf16 %v4030, %v4029
        %v4043 = vpack.c.bf16 %v4032, %v4031
        %v4044 = vpack.c.bf16 %v4034, %v4033
        %v4045 = vpack.c.bf16 %v4036, %v4035
        %v4046 = vpack.c.bf16 %v4038, %v4037
        %v4047 = vld [vmem:[%s7] sm:$0xf]
        %v4048 = vld [vmem:[%s7 + $0x4] sm:$0xf]
        %v4049 = vld [vmem:[%s7 + $0x8] sm:$0xf]
        %v4050 = vld [vmem:[%s7 + $0xc] sm:$0xf]
        %v4051 = vld [vmem:[%s7 + $0x10] sm:$0xf]
        %v4052 = vld [vmem:[%s7 + $0x14] sm:$0xf]
        %v4053 = vld [vmem:[%s7 + $0x18] sm:$0xf]
        %v4054 = vld [vmem:[%s7 + $0x1c] sm:$0xf]
        %v4055 = vld [vmem:[#allocation4 + $0x1] sm:$0xff]
        %v4056 = vld [vmem:[#allocation4 + $0x9] sm:$0xff]
        %v4057 = vld [vmem:[#allocation4 + $0x11] sm:$0xff]
        %v4058 = vld [vmem:[#allocation4 + $0x19] sm:$0xff]
        %v4059 = vld [vmem:[#allocation4 + $0x21] sm:$0xff]
        %v4060 = vld [vmem:[#allocation4 + $0x29] sm:$0xff]
        %v4061 = vld [vmem:[#allocation4 + $0x31] sm:$0xff]
        %v4062 = vld [vmem:[#allocation4 + $0x39] sm:$0xff]
        %v4063 = vld [vmem:[#allocation4 + $0x41] sm:$0xff]
        %v4064 = vld [vmem:[#allocation4 + $0x49] sm:$0xff]
        %v4065 = vld [vmem:[#allocation4 + $0x51] sm:$0xff]
        %v4066 = vld [vmem:[#allocation4 + $0x59] sm:$0xff]
        %v4067 = vld [vmem:[#allocation4 + $0x61] sm:$0xff]
        %v4068 = vld [vmem:[#allocation4 + $0x69] sm:$0xff]
        %v4069 = vld [vmem:[#allocation4 + $0x71] sm:$0xff]
        %v4070 = vld [vmem:[#allocation4 + $0x79] sm:$0xff]
        %v4071 = vpack.c.bf16 %v4056, %v4055
        %v4072 = vpack.c.bf16 %v4058, %v4057
        %v4073 = vpack.c.bf16 %v4060, %v4059
        %v4074 = vpack.c.bf16 %v4062, %v4061
        %v4075 = vpack.c.bf16 %v4064, %v4063
        %v4076 = vpack.c.bf16 %v4066, %v4065
        %v4077 = vpack.c.bf16 %v4068, %v4067
        %v4078 = vpack.c.bf16 %v4070, %v4069
        %s4079 = scalar_lea.vmem %s7, 32
        %v4080 = vld [vmem:[%s4079] sm:$0xf]
        %v4081 = vld [vmem:[%s4079 + $0x4] sm:$0xf]
        %v4082 = vld [vmem:[%s4079 + $0x8] sm:$0xf]
        %v4083 = vld [vmem:[%s4079 + $0xc] sm:$0xf]
        %v4084 = vld [vmem:[%s4079 + $0x10] sm:$0xf]
        %v4085 = vld [vmem:[%s4079 + $0x14] sm:$0xf]
        %v4086 = vld [vmem:[%s4079 + $0x18] sm:$0xf]
        %v4087 = vld [vmem:[%s4079 + $0x1c] sm:$0xf]
        %v4096 = vunpack.c.l.b16 %v4080
        %v4097 = vunpack.c.l.b16 %v4081
        %v4098 = vunpack.c.l.b16 %v4082
        %v4099 = vunpack.c.l.b16 %v4083
        %v4100 = vunpack.c.l.b16 %v4084
        %v4101 = vunpack.c.l.b16 %v4085
        %v4102 = vunpack.c.l.b16 %v4086
        %v4103 = vunpack.c.l.b16 %v4087
        %v4104 = vpack.c.b16 %v4097, %v4096
        %v4105 = vpack.c.b16 %v4099, %v4098
        %v4106 = vpack.c.b16 %v4101, %v4100
        %v4107 = vpack.c.b16 %v4103, %v4102
        %v4113 = vsel %vm4001, %v4071, 0
        %v4116 = vsel %vm4001, %v4072, 0
        %v4119 = vsel %vm4001, %v4073, 0
        %v4122 = vsel %vm4001, %v4074, 0
        %v4125 = vsel %vm4001, %v4075, 0
        %v4128 = vsel %vm4001, %v4076, 0
        %v4131 = vsel %vm4001, %v4077, 0
        %v4134 = vsel %vm4001, %v4078, 0
        %4136 = vmatpush.bf16.msra.mxu0 0
        %4137 = vmatpush.bf16.msra.mxu0 0
        %4138 = vmatpush.bf16.msra.mxu0 0
        %4139 = vmatpush.bf16.msra.mxu0 0
        %4140 = vmatpush.bf16.msra.mxu0 %v4107
        %4141 = vmatpush.bf16.msra.mxu0 %v4106
        %4142 = vmatpush.bf16.msra.mxu0 %v4105
        %4143 = vmatpush.bf16.msra.mxu0 %v4104
        %4144 = vmatmul.bf16.gmra.mxu0 %v4113
        %v4145 = vpop.f32.mrf.mxu0
        %v4146 = vadd.f32 0.0, %v4145
        %v4147 = vpop.f32.mrf.mxu0
        %v4148 = vadd.f32 0.0, %v4147
        %4149 = vmatmul.bf16.gmra.mxu0 %v4116
        %v4150 = vpop.f32.mrf.mxu0
        %v4151 = vadd.f32 0.0, %v4150
        %v4152 = vpop.f32.mrf.mxu0
        %v4153 = vadd.f32 0.0, %v4152
        %4154 = vmatmul.bf16.gmra.mxu0 %v4119
        %v4155 = vpop.f32.mrf.mxu0
        %v4156 = vadd.f32 0.0, %v4155
        %v4157 = vpop.f32.mrf.mxu0
        %v4158 = vadd.f32 0.0, %v4157
        %4159 = vmatmul.bf16.gmra.mxu0 %v4122
        %v4160 = vpop.f32.mrf.mxu0
        %v4161 = vadd.f32 0.0, %v4160
        %v4162 = vpop.f32.mrf.mxu0
        %v4163 = vadd.f32 0.0, %v4162
        %4164 = vmatmul.bf16.gmra.mxu0 %v4125
        %v4165 = vpop.f32.mrf.mxu0
        %v4166 = vadd.f32 0.0, %v4165
        %v4167 = vpop.f32.mrf.mxu0
        %v4168 = vadd.f32 0.0, %v4167
        %4169 = vmatmul.bf16.gmra.mxu0 %v4128
        %v4170 = vpop.f32.mrf.mxu0
        %v4171 = vadd.f32 0.0, %v4170
        %v4172 = vpop.f32.mrf.mxu0
        %v4173 = vadd.f32 0.0, %v4172
        %4174 = vmatmul.bf16.gmra.mxu0 %v4131
        %v4175 = vpop.f32.mrf.mxu0
        %v4176 = vadd.f32 0.0, %v4175
        %v4177 = vpop.f32.mrf.mxu0
        %v4178 = vadd.f32 0.0, %v4177
        %4179 = vmatmul.bf16.gmra.mxu0 %v4134
        %v4180 = vpop.f32.mrf.mxu0
        %v4181 = vadd.f32 0.0, %v4180
        %v4182 = vpop.f32.mrf.mxu0
        %v4183 = vadd.f32 0.0, %v4182
        %4184 = vdwg.mxu0
        %v4193 = vunpack.c.l.b16 %v4047
        %v4194 = vunpack.c.l.b16 %v4048
        %v4195 = vunpack.c.l.b16 %v4049
        %v4196 = vunpack.c.l.b16 %v4050
        %v4197 = vunpack.c.l.b16 %v4051
        %v4198 = vunpack.c.l.b16 %v4052
        %v4199 = vunpack.c.l.b16 %v4053
        %v4200 = vunpack.c.l.b16 %v4054
        %v4201 = vpack.c.b16 %v4194, %v4193
        %v4202 = vpack.c.b16 %v4196, %v4195
        %v4203 = vpack.c.b16 %v4198, %v4197
        %v4204 = vpack.c.b16 %v4200, %v4199
        %v4210 = vsel %vm4001, %v4039, 0
        %v4213 = vsel %vm4001, %v4040, 0
        %v4216 = vsel %vm4001, %v4041, 0
        %v4219 = vsel %vm4001, %v4042, 0
        %v4222 = vsel %vm4001, %v4043, 0
        %v4225 = vsel %vm4001, %v4044, 0
        %v4228 = vsel %vm4001, %v4045, 0
        %v4231 = vsel %vm4001, %v4046, 0
        %4233 = vmatpush.bf16.msra.mxu0 0
        %4234 = vmatpush.bf16.msra.mxu0 0
        %4235 = vmatpush.bf16.msra.mxu0 0
        %4236 = vmatpush.bf16.msra.mxu0 0
        %4237 = vmatpush.bf16.msra.mxu0 %v4204
        %4238 = vmatpush.bf16.msra.mxu0 %v4203
        %4239 = vmatpush.bf16.msra.mxu0 %v4202
        %4240 = vmatpush.bf16.msra.mxu0 %v4201
        %4241 = vmatmul.bf16.gmra.mxu0 %v4210
        %v4242 = vpop.f32.mrf.mxu0
        %v4243 = vadd.f32 %v4146, %v4242
        %v4244 = vpop.f32.mrf.mxu0
        %v4245 = vadd.f32 %v4148, %v4244
        %4246 = vmatmul.bf16.gmra.mxu0 %v4213
        %v4247 = vpop.f32.mrf.mxu0
        %v4248 = vadd.f32 %v4151, %v4247
        %v4249 = vpop.f32.mrf.mxu0
        %v4250 = vadd.f32 %v4153, %v4249
        %4251 = vmatmul.bf16.gmra.mxu0 %v4216
        %v4252 = vpop.f32.mrf.mxu0
        %v4253 = vadd.f32 %v4156, %v4252
        %v4254 = vpop.f32.mrf.mxu0
        %v4255 = vadd.f32 %v4158, %v4254
        %4256 = vmatmul.bf16.gmra.mxu0 %v4219
        %v4257 = vpop.f32.mrf.mxu0
        %v4258 = vadd.f32 %v4161, %v4257
        %v4259 = vpop.f32.mrf.mxu0
        %v4260 = vadd.f32 %v4163, %v4259
        %4261 = vmatmul.bf16.gmra.mxu0 %v4222
        %v4262 = vpop.f32.mrf.mxu0
        %v4263 = vadd.f32 %v4166, %v4262
        %v4264 = vpop.f32.mrf.mxu0
        %v4265 = vadd.f32 %v4168, %v4264
        %4266 = vmatmul.bf16.gmra.mxu0 %v4225
        %v4267 = vpop.f32.mrf.mxu0
        %v4268 = vadd.f32 %v4171, %v4267
        %v4269 = vpop.f32.mrf.mxu0
        %v4270 = vadd.f32 %v4173, %v4269
        %4271 = vmatmul.bf16.gmra.mxu0 %v4228
        %v4272 = vpop.f32.mrf.mxu0
        %v4273 = vadd.f32 %v4176, %v4272
        %v4274 = vpop.f32.mrf.mxu0
        %v4275 = vadd.f32 %v4178, %v4274
        %4276 = vmatmul.bf16.gmra.mxu0 %v4231
        %v4277 = vpop.f32.mrf.mxu0
        %v4278 = vadd.f32 %v4181, %v4277
        %v4279 = vpop.f32.mrf.mxu0
        %v4280 = vadd.f32 %v4183, %v4279
        %4281 = vdwg.mxu0
        %v4282 = vld [vmem:[#allocation4 + $0x2] sm:$0xff]
        %v4283 = vld [vmem:[#allocation4 + $0xa] sm:$0xff]
        %v4284 = vld [vmem:[#allocation4 + $0x12] sm:$0xff]
        %v4285 = vld [vmem:[#allocation4 + $0x1a] sm:$0xff]
        %v4286 = vld [vmem:[#allocation4 + $0x22] sm:$0xff]
        %v4287 = vld [vmem:[#allocation4 + $0x2a] sm:$0xff]
        %v4288 = vld [vmem:[#allocation4 + $0x32] sm:$0xff]
        %v4289 = vld [vmem:[#allocation4 + $0x3a] sm:$0xff]
        %v4290 = vld [vmem:[#allocation4 + $0x42] sm:$0xff]
        %v4291 = vld [vmem:[#allocation4 + $0x4a] sm:$0xff]
        %v4292 = vld [vmem:[#allocation4 + $0x52] sm:$0xff]
        %v4293 = vld [vmem:[#allocation4 + $0x5a] sm:$0xff]
        %v4294 = vld [vmem:[#allocation4 + $0x62] sm:$0xff]
        %v4295 = vld [vmem:[#allocation4 + $0x6a] sm:$0xff]
        %v4296 = vld [vmem:[#allocation4 + $0x72] sm:$0xff]
        %v4297 = vld [vmem:[#allocation4 + $0x7a] sm:$0xff]
        %v4298 = vpack.c.bf16 %v4283, %v4282
        %v4299 = vpack.c.bf16 %v4285, %v4284
        %v4300 = vpack.c.bf16 %v4287, %v4286
        %v4301 = vpack.c.bf16 %v4289, %v4288
        %v4302 = vpack.c.bf16 %v4291, %v4290
        %v4303 = vpack.c.bf16 %v4293, %v4292
        %v4304 = vpack.c.bf16 %v4295, %v4294
        %v4305 = vpack.c.bf16 %v4297, %v4296
        %s4306 = scalar_lea.vmem %s7, 64
        %v4307 = vld [vmem:[%s4306] sm:$0xf]
        %v4308 = vld [vmem:[%s4306 + $0x4] sm:$0xf]
        %v4309 = vld [vmem:[%s4306 + $0x8] sm:$0xf]
        %v4310 = vld [vmem:[%s4306 + $0xc] sm:$0xf]
        %v4311 = vld [vmem:[%s4306 + $0x10] sm:$0xf]
        %v4312 = vld [vmem:[%s4306 + $0x14] sm:$0xf]
        %v4313 = vld [vmem:[%s4306 + $0x18] sm:$0xf]
        %v4314 = vld [vmem:[%s4306 + $0x1c] sm:$0xf]
        %v4323 = vunpack.c.l.b16 %v4307
        %v4324 = vunpack.c.l.b16 %v4308
        %v4325 = vunpack.c.l.b16 %v4309
        %v4326 = vunpack.c.l.b16 %v4310
        %v4327 = vunpack.c.l.b16 %v4311
        %v4328 = vunpack.c.l.b16 %v4312
        %v4329 = vunpack.c.l.b16 %v4313
        %v4330 = vunpack.c.l.b16 %v4314
        %v4331 = vpack.c.b16 %v4324, %v4323
        %v4332 = vpack.c.b16 %v4326, %v4325
        %v4333 = vpack.c.b16 %v4328, %v4327
        %v4334 = vpack.c.b16 %v4330, %v4329
        %v4340 = vsel %vm4001, %v4298, 0
        %v4343 = vsel %vm4001, %v4299, 0
        %v4346 = vsel %vm4001, %v4300, 0
        %v4349 = vsel %vm4001, %v4301, 0
        %v4352 = vsel %vm4001, %v4302, 0
        %v4355 = vsel %vm4001, %v4303, 0
        %v4358 = vsel %vm4001, %v4304, 0
        %v4361 = vsel %vm4001, %v4305, 0
        %4363 = vmatpush.bf16.msra.mxu0 0
        %4364 = vmatpush.bf16.msra.mxu0 0
        %4365 = vmatpush.bf16.msra.mxu0 0
        %4366 = vmatpush.bf16.msra.mxu0 0
        %4367 = vmatpush.bf16.msra.mxu0 %v4334
        %4368 = vmatpush.bf16.msra.mxu0 %v4333
        %4369 = vmatpush.bf16.msra.mxu0 %v4332
        %4370 = vmatpush.bf16.msra.mxu0 %v4331
        %4371 = vmatmul.bf16.gmra.mxu0 %v4340
        %v4372 = vpop.f32.mrf.mxu0
        %v4373 = vadd.f32 0.0, %v4372
        %v4374 = vpop.f32.mrf.mxu0
        %v4375 = vadd.f32 0.0, %v4374
        %4376 = vmatmul.bf16.gmra.mxu0 %v4343
        %v4377 = vpop.f32.mrf.mxu0
        %v4378 = vadd.f32 0.0, %v4377
        %v4379 = vpop.f32.mrf.mxu0
        %v4380 = vadd.f32 0.0, %v4379
        %4381 = vmatmul.bf16.gmra.mxu0 %v4346
        %v4382 = vpop.f32.mrf.mxu0
        %v4383 = vadd.f32 0.0, %v4382
        %v4384 = vpop.f32.mrf.mxu0
        %v4385 = vadd.f32 0.0, %v4384
        %4386 = vmatmul.bf16.gmra.mxu0 %v4349
        %v4387 = vpop.f32.mrf.mxu0
        %v4388 = vadd.f32 0.0, %v4387
        %v4389 = vpop.f32.mrf.mxu0
        %v4390 = vadd.f32 0.0, %v4389
        %4391 = vmatmul.bf16.gmra.mxu0 %v4352
        %v4392 = vpop.f32.mrf.mxu0
        %v4393 = vadd.f32 0.0, %v4392
        %v4394 = vpop.f32.mrf.mxu0
        %v4395 = vadd.f32 0.0, %v4394
        %4396 = vmatmul.bf16.gmra.mxu0 %v4355
        %v4397 = vpop.f32.mrf.mxu0
        %v4398 = vadd.f32 0.0, %v4397
        %v4399 = vpop.f32.mrf.mxu0
        %v4400 = vadd.f32 0.0, %v4399
        %4401 = vmatmul.bf16.gmra.mxu0 %v4358
        %v4402 = vpop.f32.mrf.mxu0
        %v4403 = vadd.f32 0.0, %v4402
        %v4404 = vpop.f32.mrf.mxu0
        %v4405 = vadd.f32 0.0, %v4404
        %4406 = vmatmul.bf16.gmra.mxu0 %v4361
        %v4407 = vpop.f32.mrf.mxu0
        %v4408 = vadd.f32 0.0, %v4407
        %v4409 = vpop.f32.mrf.mxu0
        %v4410 = vadd.f32 0.0, %v4409
        %4411 = vdwg.mxu0
        %v4412 = vadd.f32 %v4243, %v4373
        %v4413 = vadd.f32 %v4245, %v4375
        %v4414 = vadd.f32 %v4248, %v4378
        %v4415 = vadd.f32 %v4250, %v4380
        %v4416 = vadd.f32 %v4253, %v4383
        %v4417 = vadd.f32 %v4255, %v4385
        %v4418 = vadd.f32 %v4258, %v4388
        %v4419 = vadd.f32 %v4260, %v4390
        %v4420 = vadd.f32 %v4263, %v4393
        %v4421 = vadd.f32 %v4265, %v4395
        %v4422 = vadd.f32 %v4268, %v4398
        %v4423 = vadd.f32 %v4270, %v4400
        %v4424 = vadd.f32 %v4273, %v4403
        %v4425 = vadd.f32 %v4275, %v4405
        %v4426 = vadd.f32 %v4278, %v4408
        %v4427 = vadd.f32 %v4280, %v4410
        %v4428 = vld [vmem:[#allocation4 + $0x10] sm:$0xff]
        %v4429 = vld [vmem:[#allocation4 + $0x18] sm:$0xff]
        %v4430 = vld [vmem:[#allocation4 + $0x20] sm:$0xff]
        %v4431 = vld [vmem:[#allocation4 + $0x28] sm:$0xff]
        %v4432 = vld [vmem:[#allocation4 + $0x30] sm:$0xff]
        %v4433 = vld [vmem:[#allocation4 + $0x38] sm:$0xff]
        %v4434 = vld [vmem:[#allocation4 + $0x40] sm:$0xff]
        %v4435 = vld [vmem:[#allocation4 + $0x48] sm:$0xff]
        %v4436 = vld [vmem:[#allocation4 + $0x50] sm:$0xff]
        %v4437 = vld [vmem:[#allocation4 + $0x58] sm:$0xff]
        %v4438 = vld [vmem:[#allocation4 + $0x60] sm:$0xff]
        %v4439 = vld [vmem:[#allocation4 + $0x68] sm:$0xff]
        %v4440 = vld [vmem:[#allocation4 + $0x70] sm:$0xff]
        %v4441 = vld [vmem:[#allocation4 + $0x78] sm:$0xff]
        %v4442 = vld [vmem:[#allocation4 + $0x80] sm:$0xff]
        %v4443 = vld [vmem:[#allocation4 + $0x88] sm:$0xff]
        %v4444 = vpack.c.bf16 %v4429, %v4428
        %v4445 = vpack.c.bf16 %v4431, %v4430
        %v4446 = vpack.c.bf16 %v4433, %v4432
        %v4447 = vpack.c.bf16 %v4435, %v4434
        %v4448 = vpack.c.bf16 %v4437, %v4436
        %v4449 = vpack.c.bf16 %v4439, %v4438
        %v4450 = vpack.c.bf16 %v4441, %v4440
        %v4451 = vpack.c.bf16 %v4443, %v4442
        %s4452 = scalar_lea.vmem %s7, 96
        %v4453 = vld [vmem:[%s4452] sm:$0xf]
        %v4454 = vld [vmem:[%s4452 + $0x4] sm:$0xf]
        %v4455 = vld [vmem:[%s4452 + $0x8] sm:$0xf]
        %v4456 = vld [vmem:[%s4452 + $0xc] sm:$0xf]
        %v4457 = vld [vmem:[%s4452 + $0x10] sm:$0xf]
        %v4458 = vld [vmem:[%s4452 + $0x14] sm:$0xf]
        %v4459 = vld [vmem:[%s4452 + $0x18] sm:$0xf]
        %v4460 = vld [vmem:[%s4452 + $0x1c] sm:$0xf]
        %v4469 = vunpack.c.l.b16 %v4453
        %v4470 = vunpack.c.l.b16 %v4454
        %v4471 = vunpack.c.l.b16 %v4455
        %v4472 = vunpack.c.l.b16 %v4456
        %v4473 = vunpack.c.l.b16 %v4457
        %v4474 = vunpack.c.l.b16 %v4458
        %v4475 = vunpack.c.l.b16 %v4459
        %v4476 = vunpack.c.l.b16 %v4460
        %v4477 = vpack.c.b16 %v4470, %v4469
        %v4478 = vpack.c.b16 %v4472, %v4471
        %v4479 = vpack.c.b16 %v4474, %v4473
        %v4480 = vpack.c.b16 %v4476, %v4475
        %v4486 = vsel %vm4001, %v4444, 0
        %v4489 = vsel %vm4001, %v4445, 0
        %v4492 = vsel %vm4001, %v4446, 0
        %v4495 = vsel %vm4001, %v4447, 0
        %v4498 = vsel %vm4001, %v4448, 0
        %v4501 = vsel %vm4001, %v4449, 0
        %v4504 = vsel %vm4001, %v4450, 0
        %v4507 = vsel %vm4001, %v4451, 0
        %4509 = vmatpush.bf16.msra.mxu0 0
        %4510 = vmatpush.bf16.msra.mxu0 0
        %4511 = vmatpush.bf16.msra.mxu0 0
        %4512 = vmatpush.bf16.msra.mxu0 0
        %4513 = vmatpush.bf16.msra.mxu0 %v4480
        %4514 = vmatpush.bf16.msra.mxu0 %v4479
        %4515 = vmatpush.bf16.msra.mxu0 %v4478
        %4516 = vmatpush.bf16.msra.mxu0 %v4477
        %4517 = vmatmul.bf16.gmra.mxu0 %v4486
        %v4518 = vpop.f32.mrf.mxu0
        %v4519 = vadd.f32 0.0, %v4518
        %v4520 = vpop.f32.mrf.mxu0
        %v4521 = vadd.f32 0.0, %v4520
        %4522 = vmatmul.bf16.gmra.mxu0 %v4489
        %v4523 = vpop.f32.mrf.mxu0
        %v4524 = vadd.f32 0.0, %v4523
        %v4525 = vpop.f32.mrf.mxu0
        %v4526 = vadd.f32 0.0, %v4525
        %4527 = vmatmul.bf16.gmra.mxu0 %v4492
        %v4528 = vpop.f32.mrf.mxu0
        %v4529 = vadd.f32 0.0, %v4528
        %v4530 = vpop.f32.mrf.mxu0
        %v4531 = vadd.f32 0.0, %v4530
        %4532 = vmatmul.bf16.gmra.mxu0 %v4495
        %v4533 = vpop.f32.mrf.mxu0
        %v4534 = vadd.f32 0.0, %v4533
        %v4535 = vpop.f32.mrf.mxu0
        %v4536 = vadd.f32 0.0, %v4535
        %4537 = vmatmul.bf16.gmra.mxu0 %v4498
        %v4538 = vpop.f32.mrf.mxu0
        %v4539 = vadd.f32 0.0, %v4538
        %v4540 = vpop.f32.mrf.mxu0
        %v4541 = vadd.f32 0.0, %v4540
        %4542 = vmatmul.bf16.gmra.mxu0 %v4501
        %v4543 = vpop.f32.mrf.mxu0
        %v4544 = vadd.f32 0.0, %v4543
        %v4545 = vpop.f32.mrf.mxu0
        %v4546 = vadd.f32 0.0, %v4545
        %4547 = vmatmul.bf16.gmra.mxu0 %v4504
        %v4548 = vpop.f32.mrf.mxu0
        %v4549 = vadd.f32 0.0, %v4548
        %v4550 = vpop.f32.mrf.mxu0
        %v4551 = vadd.f32 0.0, %v4550
        %4552 = vmatmul.bf16.gmra.mxu0 %v4507
        %v4553 = vpop.f32.mrf.mxu0
        %v4554 = vadd.f32 0.0, %v4553
        %v4555 = vpop.f32.mrf.mxu0
        %v4556 = vadd.f32 0.0, %v4555
        %4557 = vdwg.mxu0
        %v4558 = vadd.f32 %v4412, %v4519
        %v4559 = vadd.f32 %v4413, %v4521
        %v4560 = vadd.f32 %v4414, %v4524
        %v4561 = vadd.f32 %v4415, %v4526
        %v4562 = vadd.f32 %v4416, %v4529
        %v4563 = vadd.f32 %v4417, %v4531
        %v4564 = vadd.f32 %v4418, %v4534
        %v4565 = vadd.f32 %v4419, %v4536
        %v4566 = vadd.f32 %v4420, %v4539
        %v4567 = vadd.f32 %v4421, %v4541
        %v4568 = vadd.f32 %v4422, %v4544
        %v4569 = vadd.f32 %v4423, %v4546
        %v4570 = vadd.f32 %v4424, %v4549
        %v4571 = vadd.f32 %v4425, %v4551
        %v4572 = vadd.f32 %v4426, %v4554
        %v4573 = vadd.f32 %v4427, %v4556
        %v4574 = vld [vmem:[#allocation4 + $0x11] sm:$0xff]
        %v4575 = vld [vmem:[#allocation4 + $0x19] sm:$0xff]
        %v4576 = vld [vmem:[#allocation4 + $0x21] sm:$0xff]
        %v4577 = vld [vmem:[#allocation4 + $0x29] sm:$0xff]
        %v4578 = vld [vmem:[#allocation4 + $0x31] sm:$0xff]
        %v4579 = vld [vmem:[#allocation4 + $0x39] sm:$0xff]
        %v4580 = vld [vmem:[#allocation4 + $0x41] sm:$0xff]
        %v4581 = vld [vmem:[#allocation4 + $0x49] sm:$0xff]
        %v4582 = vld [vmem:[#allocation4 + $0x51] sm:$0xff]
        %v4583 = vld [vmem:[#allocation4 + $0x59] sm:$0xff]
        %v4584 = vld [vmem:[#allocation4 + $0x61] sm:$0xff]
        %v4585 = vld [vmem:[#allocation4 + $0x69] sm:$0xff]
        %v4586 = vld [vmem:[#allocation4 + $0x71] sm:$0xff]
        %v4587 = vld [vmem:[#allocation4 + $0x79] sm:$0xff]
        %v4588 = vld [vmem:[#allocation4 + $0x81] sm:$0xff]
        %v4589 = vld [vmem:[#allocation4 + $0x89] sm:$0xff]
        %v4590 = vpack.c.bf16 %v4575, %v4574
        %v4591 = vpack.c.bf16 %v4577, %v4576
        %v4592 = vpack.c.bf16 %v4579, %v4578
        %v4593 = vpack.c.bf16 %v4581, %v4580
        %v4594 = vpack.c.bf16 %v4583, %v4582
        %v4595 = vpack.c.bf16 %v4585, %v4584
        %v4596 = vpack.c.bf16 %v4587, %v4586
        %v4597 = vpack.c.bf16 %v4589, %v4588
        %s4598 = scalar_lea.vmem %s7, 128
        %v4599 = vld [vmem:[%s4598] sm:$0xf]
        %v4600 = vld [vmem:[%s4598 + $0x4] sm:$0xf]
        %v4601 = vld [vmem:[%s4598 + $0x8] sm:$0xf]
        %v4602 = vld [vmem:[%s4598 + $0xc] sm:$0xf]
        %v4603 = vld [vmem:[%s4598 + $0x10] sm:$0xf]
        %v4604 = vld [vmem:[%s4598 + $0x14] sm:$0xf]
        %v4605 = vld [vmem:[%s4598 + $0x18] sm:$0xf]
        %v4606 = vld [vmem:[%s4598 + $0x1c] sm:$0xf]
        %v4615 = vunpack.c.l.b16 %v4599
        %v4616 = vunpack.c.l.b16 %v4600
        %v4617 = vunpack.c.l.b16 %v4601
        %v4618 = vunpack.c.l.b16 %v4602
        %v4619 = vunpack.c.l.b16 %v4603
        %v4620 = vunpack.c.l.b16 %v4604
        %v4621 = vunpack.c.l.b16 %v4605
        %v4622 = vunpack.c.l.b16 %v4606
        %v4623 = vpack.c.b16 %v4616, %v4615
        %v4624 = vpack.c.b16 %v4618, %v4617
        %v4625 = vpack.c.b16 %v4620, %v4619
        %v4626 = vpack.c.b16 %v4622, %v4621
        %v4632 = vsel %vm4001, %v4590, 0
        %v4635 = vsel %vm4001, %v4591, 0
        %v4638 = vsel %vm4001, %v4592, 0
        %v4641 = vsel %vm4001, %v4593, 0
        %v4644 = vsel %vm4001, %v4594, 0
        %v4647 = vsel %vm4001, %v4595, 0
        %v4650 = vsel %vm4001, %v4596, 0
        %v4653 = vsel %vm4001, %v4597, 0
        %4655 = vmatpush.bf16.msra.mxu0 0
        %4656 = vmatpush.bf16.msra.mxu0 0
        %4657 = vmatpush.bf16.msra.mxu0 0
        %4658 = vmatpush.bf16.msra.mxu0 0
        %4659 = vmatpush.bf16.msra.mxu0 %v4626
        %4660 = vmatpush.bf16.msra.mxu0 %v4625
        %4661 = vmatpush.bf16.msra.mxu0 %v4624
        %4662 = vmatpush.bf16.msra.mxu0 %v4623
        %4663 = vmatmul.bf16.gmra.mxu0 %v4632
        %v4664 = vpop.f32.mrf.mxu0
        %v4665 = vadd.f32 0.0, %v4664
        %v4666 = vpop.f32.mrf.mxu0
        %v4667 = vadd.f32 0.0, %v4666
        %4668 = vmatmul.bf16.gmra.mxu0 %v4635
        %v4669 = vpop.f32.mrf.mxu0
        %v4670 = vadd.f32 0.0, %v4669
        %v4671 = vpop.f32.mrf.mxu0
        %v4672 = vadd.f32 0.0, %v4671
        %4673 = vmatmul.bf16.gmra.mxu0 %v4638
        %v4674 = vpop.f32.mrf.mxu0
        %v4675 = vadd.f32 0.0, %v4674
        %v4676 = vpop.f32.mrf.mxu0
        %v4677 = vadd.f32 0.0, %v4676
        %4678 = vmatmul.bf16.gmra.mxu0 %v4641
        %v4679 = vpop.f32.mrf.mxu0
        %v4680 = vadd.f32 0.0, %v4679
        %v4681 = vpop.f32.mrf.mxu0
        %v4682 = vadd.f32 0.0, %v4681
        %4683 = vmatmul.bf16.gmra.mxu0 %v4644
        %v4684 = vpop.f32.mrf.mxu0
        %v4685 = vadd.f32 0.0, %v4684
        %v4686 = vpop.f32.mrf.mxu0
        %v4687 = vadd.f32 0.0, %v4686
        %4688 = vmatmul.bf16.gmra.mxu0 %v4647
        %v4689 = vpop.f32.mrf.mxu0
        %v4690 = vadd.f32 0.0, %v4689
        %v4691 = vpop.f32.mrf.mxu0
        %v4692 = vadd.f32 0.0, %v4691
        %4693 = vmatmul.bf16.gmra.mxu0 %v4650
        %v4694 = vpop.f32.mrf.mxu0
        %v4695 = vadd.f32 0.0, %v4694
        %v4696 = vpop.f32.mrf.mxu0
        %v4697 = vadd.f32 0.0, %v4696
        %4698 = vmatmul.bf16.gmra.mxu0 %v4653
        %v4699 = vpop.f32.mrf.mxu0
        %v4700 = vadd.f32 0.0, %v4699
        %v4701 = vpop.f32.mrf.mxu0
        %v4702 = vadd.f32 0.0, %v4701
        %4703 = vdwg.mxu0
        %v4704 = vadd.f32 %v4558, %v4665
        %v4705 = vadd.f32 %v4559, %v4667
        %v4706 = vadd.f32 %v4560, %v4670
        %v4707 = vadd.f32 %v4561, %v4672
        %v4708 = vadd.f32 %v4562, %v4675
        %v4709 = vadd.f32 %v4563, %v4677
        %v4710 = vadd.f32 %v4564, %v4680
        %v4711 = vadd.f32 %v4565, %v4682
        %v4712 = vadd.f32 %v4566, %v4685
        %v4713 = vadd.f32 %v4567, %v4687
        %v4714 = vadd.f32 %v4568, %v4690
        %v4715 = vadd.f32 %v4569, %v4692
        %v4716 = vadd.f32 %v4570, %v4695
        %v4717 = vadd.f32 %v4571, %v4697
        %v4718 = vadd.f32 %v4572, %v4700
        %v4719 = vadd.f32 %v4573, %v4702
        %v4720 = vld [vmem:[#allocation4 + $0x12] sm:$0xff]
        %v4721 = vld [vmem:[#allocation4 + $0x1a] sm:$0xff]
        %v4722 = vld [vmem:[#allocation4 + $0x22] sm:$0xff]
        %v4723 = vld [vmem:[#allocation4 + $0x2a] sm:$0xff]
        %v4724 = vld [vmem:[#allocation4 + $0x32] sm:$0xff]
        %v4725 = vld [vmem:[#allocation4 + $0x3a] sm:$0xff]
        %v4726 = vld [vmem:[#allocation4 + $0x42] sm:$0xff]
        %v4727 = vld [vmem:[#allocation4 + $0x4a] sm:$0xff]
        %v4728 = vld [vmem:[#allocation4 + $0x52] sm:$0xff]
        %v4729 = vld [vmem:[#allocation4 + $0x5a] sm:$0xff]
        %v4730 = vld [vmem:[#allocation4 + $0x62] sm:$0xff]
        %v4731 = vld [vmem:[#allocation4 + $0x6a] sm:$0xff]
        %v4732 = vld [vmem:[#allocation4 + $0x72] sm:$0xff]
        %v4733 = vld [vmem:[#allocation4 + $0x7a] sm:$0xff]
        %v4734 = vld [vmem:[#allocation4 + $0x82] sm:$0xff]
        %v4735 = vld [vmem:[#allocation4 + $0x8a] sm:$0xff]
        %v4736 = vpack.c.bf16 %v4721, %v4720
        %v4737 = vpack.c.bf16 %v4723, %v4722
        %v4738 = vpack.c.bf16 %v4725, %v4724
        %v4739 = vpack.c.bf16 %v4727, %v4726
        %v4740 = vpack.c.bf16 %v4729, %v4728
        %v4741 = vpack.c.bf16 %v4731, %v4730
        %v4742 = vpack.c.bf16 %v4733, %v4732
        %v4743 = vpack.c.bf16 %v4735, %v4734
        %s4744 = scalar_lea.vmem %s7, 160
        %v4745 = vld [vmem:[%s4744] sm:$0xf]
        %v4746 = vld [vmem:[%s4744 + $0x4] sm:$0xf]
        %v4747 = vld [vmem:[%s4744 + $0x8] sm:$0xf]
        %v4748 = vld [vmem:[%s4744 + $0xc] sm:$0xf]
        %v4749 = vld [vmem:[%s4744 + $0x10] sm:$0xf]
        %v4750 = vld [vmem:[%s4744 + $0x14] sm:$0xf]
        %v4751 = vld [vmem:[%s4744 + $0x18] sm:$0xf]
        %v4752 = vld [vmem:[%s4744 + $0x1c] sm:$0xf]
        %v4761 = vunpack.c.l.b16 %v4745
        %v4762 = vunpack.c.l.b16 %v4746
        %v4763 = vunpack.c.l.b16 %v4747
        %v4764 = vunpack.c.l.b16 %v4748
        %v4765 = vunpack.c.l.b16 %v4749
        %v4766 = vunpack.c.l.b16 %v4750
        %v4767 = vunpack.c.l.b16 %v4751
        %v4768 = vunpack.c.l.b16 %v4752
        %v4769 = vpack.c.b16 %v4762, %v4761
        %v4770 = vpack.c.b16 %v4764, %v4763
        %v4771 = vpack.c.b16 %v4766, %v4765
        %v4772 = vpack.c.b16 %v4768, %v4767
        %v4778 = vsel %vm4001, %v4736, 0
        %v4781 = vsel %vm4001, %v4737, 0
        %v4784 = vsel %vm4001, %v4738, 0
        %v4787 = vsel %vm4001, %v4739, 0
        %v4790 = vsel %vm4001, %v4740, 0
        %v4793 = vsel %vm4001, %v4741, 0
        %v4796 = vsel %vm4001, %v4742, 0
        %v4799 = vsel %vm4001, %v4743, 0
        %4801 = vmatpush.bf16.msra.mxu0 0
        %4802 = vmatpush.bf16.msra.mxu0 0
        %4803 = vmatpush.bf16.msra.mxu0 0
        %4804 = vmatpush.bf16.msra.mxu0 0
        %4805 = vmatpush.bf16.msra.mxu0 %v4772
        %4806 = vmatpush.bf16.msra.mxu0 %v4771
        %4807 = vmatpush.bf16.msra.mxu0 %v4770
        %4808 = vmatpush.bf16.msra.mxu0 %v4769
        %4809 = vmatmul.bf16.gmra.mxu0 %v4778
        %v4810 = vpop.f32.mrf.mxu0
        %v4811 = vadd.f32 0.0, %v4810
        %v4812 = vpop.f32.mrf.mxu0
        %v4813 = vadd.f32 0.0, %v4812
        %4814 = vmatmul.bf16.gmra.mxu0 %v4781
        %v4815 = vpop.f32.mrf.mxu0
        %v4816 = vadd.f32 0.0, %v4815
        %v4817 = vpop.f32.mrf.mxu0
        %v4818 = vadd.f32 0.0, %v4817
        %4819 = vmatmul.bf16.gmra.mxu0 %v4784
        %v4820 = vpop.f32.mrf.mxu0
        %v4821 = vadd.f32 0.0, %v4820
        %v4822 = vpop.f32.mrf.mxu0
        %v4823 = vadd.f32 0.0, %v4822
        %4824 = vmatmul.bf16.gmra.mxu0 %v4787
        %v4825 = vpop.f32.mrf.mxu0
        %v4826 = vadd.f32 0.0, %v4825
        %v4827 = vpop.f32.mrf.mxu0
        %v4828 = vadd.f32 0.0, %v4827
        %4829 = vmatmul.bf16.gmra.mxu0 %v4790
        %v4830 = vpop.f32.mrf.mxu0
        %v4831 = vadd.f32 0.0, %v4830
        %v4832 = vpop.f32.mrf.mxu0
        %v4833 = vadd.f32 0.0, %v4832
        %4834 = vmatmul.bf16.gmra.mxu0 %v4793
        %v4835 = vpop.f32.mrf.mxu0
        %v4836 = vadd.f32 0.0, %v4835
        %v4837 = vpop.f32.mrf.mxu0
        %v4838 = vadd.f32 0.0, %v4837
        %4839 = vmatmul.bf16.gmra.mxu0 %v4796
        %v4840 = vpop.f32.mrf.mxu0
        %v4841 = vadd.f32 0.0, %v4840
        %v4842 = vpop.f32.mrf.mxu0
        %v4843 = vadd.f32 0.0, %v4842
        %4844 = vmatmul.bf16.gmra.mxu0 %v4799
        %v4845 = vpop.f32.mrf.mxu0
        %v4846 = vadd.f32 0.0, %v4845
        %v4847 = vpop.f32.mrf.mxu0
        %v4848 = vadd.f32 0.0, %v4847
        %4849 = vdwg.mxu0
        %v4850 = vadd.f32 %v4704, %v4811
        %v4851 = vadd.f32 %v4705, %v4813
        %v4852 = vadd.f32 %v4706, %v4816
        %v4853 = vadd.f32 %v4707, %v4818
        %v4854 = vadd.f32 %v4708, %v4821
        %v4855 = vadd.f32 %v4709, %v4823
        %v4856 = vadd.f32 %v4710, %v4826
        %v4857 = vadd.f32 %v4711, %v4828
        %v4858 = vadd.f32 %v4712, %v4831
        %v4859 = vadd.f32 %v4713, %v4833
        %v4860 = vadd.f32 %v4714, %v4836
        %v4861 = vadd.f32 %v4715, %v4838
        %v4862 = vadd.f32 %v4716, %v4841
        %v4863 = vadd.f32 %v4717, %v4843
        %v4864 = vadd.f32 %v4718, %v4846
        %v4865 = vadd.f32 %v4719, %v4848
        %v4866 = vld [vmem:[#allocation4 + $0x20] sm:$0xff]
        %v4867 = vld [vmem:[#allocation4 + $0x28] sm:$0xff]
        %v4868 = vld [vmem:[#allocation4 + $0x30] sm:$0xff]
        %v4869 = vld [vmem:[#allocation4 + $0x38] sm:$0xff]
        %v4870 = vld [vmem:[#allocation4 + $0x40] sm:$0xff]
        %v4871 = vld [vmem:[#allocation4 + $0x48] sm:$0xff]
        %v4872 = vld [vmem:[#allocation4 + $0x50] sm:$0xff]
        %v4873 = vld [vmem:[#allocation4 + $0x58] sm:$0xff]
        %v4874 = vld [vmem:[#allocation4 + $0x60] sm:$0xff]
        %v4875 = vld [vmem:[#allocation4 + $0x68] sm:$0xff]
        %v4876 = vld [vmem:[#allocation4 + $0x70] sm:$0xff]
        %v4877 = vld [vmem:[#allocation4 + $0x78] sm:$0xff]
        %v4878 = vld [vmem:[#allocation4 + $0x80] sm:$0xff]
        %v4879 = vld [vmem:[#allocation4 + $0x88] sm:$0xff]
        %v4880 = vld [vmem:[#allocation4 + $0x90] sm:$0xff]
        %v4881 = vld [vmem:[#allocation4 + $0x98] sm:$0xff]
        %v4882 = vpack.c.bf16 %v4867, %v4866
        %v4883 = vpack.c.bf16 %v4869, %v4868
        %v4884 = vpack.c.bf16 %v4871, %v4870
        %v4885 = vpack.c.bf16 %v4873, %v4872
        %v4886 = vpack.c.bf16 %v4875, %v4874
        %v4887 = vpack.c.bf16 %v4877, %v4876
        %v4888 = vpack.c.bf16 %v4879, %v4878
        %v4889 = vpack.c.bf16 %v4881, %v4880
        %s4890 = scalar_lea.vmem %s7, 192
        %v4891 = vld [vmem:[%s4890] sm:$0xf]
        %v4892 = vld [vmem:[%s4890 + $0x4] sm:$0xf]
        %v4893 = vld [vmem:[%s4890 + $0x8] sm:$0xf]
        %v4894 = vld [vmem:[%s4890 + $0xc] sm:$0xf]
        %v4895 = vld [vmem:[%s4890 + $0x10] sm:$0xf]
        %v4896 = vld [vmem:[%s4890 + $0x14] sm:$0xf]
        %v4897 = vld [vmem:[%s4890 + $0x18] sm:$0xf]
        %v4898 = vld [vmem:[%s4890 + $0x1c] sm:$0xf]
        %v4907 = vunpack.c.l.b16 %v4891
        %v4908 = vunpack.c.l.b16 %v4892
        %v4909 = vunpack.c.l.b16 %v4893
        %v4910 = vunpack.c.l.b16 %v4894
        %v4911 = vunpack.c.l.b16 %v4895
        %v4912 = vunpack.c.l.b16 %v4896
        %v4913 = vunpack.c.l.b16 %v4897
        %v4914 = vunpack.c.l.b16 %v4898
        %v4915 = vpack.c.b16 %v4908, %v4907
        %v4916 = vpack.c.b16 %v4910, %v4909
        %v4917 = vpack.c.b16 %v4912, %v4911
        %v4918 = vpack.c.b16 %v4914, %v4913
        %v4924 = vsel %vm4001, %v4882, 0
        %v4927 = vsel %vm4001, %v4883, 0
        %v4930 = vsel %vm4001, %v4884, 0
        %v4933 = vsel %vm4001, %v4885, 0
        %v4936 = vsel %vm4001, %v4886, 0
        %v4939 = vsel %vm4001, %v4887, 0
        %v4942 = vsel %vm4001, %v4888, 0
        %v4945 = vsel %vm4001, %v4889, 0
        %4947 = vmatpush.bf16.msra.mxu0 0
        %4948 = vmatpush.bf16.msra.mxu0 0
        %4949 = vmatpush.bf16.msra.mxu0 0
        %4950 = vmatpush.bf16.msra.mxu0 0
        %4951 = vmatpush.bf16.msra.mxu0 %v4918
        %4952 = vmatpush.bf16.msra.mxu0 %v4917
        %4953 = vmatpush.bf16.msra.mxu0 %v4916
        %4954 = vmatpush.bf16.msra.mxu0 %v4915
        %4955 = vmatmul.bf16.gmra.mxu0 %v4924
        %v4956 = vpop.f32.mrf.mxu0
        %v4957 = vadd.f32 0.0, %v4956
        %v4958 = vpop.f32.mrf.mxu0
        %v4959 = vadd.f32 0.0, %v4958
        %4960 = vmatmul.bf16.gmra.mxu0 %v4927
        %v4961 = vpop.f32.mrf.mxu0
        %v4962 = vadd.f32 0.0, %v4961
        %v4963 = vpop.f32.mrf.mxu0
        %v4964 = vadd.f32 0.0, %v4963
        %4965 = vmatmul.bf16.gmra.mxu0 %v4930
        %v4966 = vpop.f32.mrf.mxu0
        %v4967 = vadd.f32 0.0, %v4966
        %v4968 = vpop.f32.mrf.mxu0
        %v4969 = vadd.f32 0.0, %v4968
        %4970 = vmatmul.bf16.gmra.mxu0 %v4933
        %v4971 = vpop.f32.mrf.mxu0
        %v4972 = vadd.f32 0.0, %v4971
        %v4973 = vpop.f32.mrf.mxu0
        %v4974 = vadd.f32 0.0, %v4973
        %4975 = vmatmul.bf16.gmra.mxu0 %v4936
        %v4976 = vpop.f32.mrf.mxu0
        %v4977 = vadd.f32 0.0, %v4976
        %v4978 = vpop.f32.mrf.mxu0
        %v4979 = vadd.f32 0.0, %v4978
        %4980 = vmatmul.bf16.gmra.mxu0 %v4939
        %v4981 = vpop.f32.mrf.mxu0
        %v4982 = vadd.f32 0.0, %v4981
        %v4983 = vpop.f32.mrf.mxu0
        %v4984 = vadd.f32 0.0, %v4983
        %4985 = vmatmul.bf16.gmra.mxu0 %v4942
        %v4986 = vpop.f32.mrf.mxu0
        %v4987 = vadd.f32 0.0, %v4986
        %v4988 = vpop.f32.mrf.mxu0
        %v4989 = vadd.f32 0.0, %v4988
        %4990 = vmatmul.bf16.gmra.mxu0 %v4945
        %v4991 = vpop.f32.mrf.mxu0
        %v4992 = vadd.f32 0.0, %v4991
        %v4993 = vpop.f32.mrf.mxu0
        %v4994 = vadd.f32 0.0, %v4993
        %4995 = vdwg.mxu0
        %v4996 = vadd.f32 %v4850, %v4957
        %v4997 = vadd.f32 %v4851, %v4959
        %v4998 = vadd.f32 %v4852, %v4962
        %v4999 = vadd.f32 %v4853, %v4964
        %v5000 = vadd.f32 %v4854, %v4967
        %v5001 = vadd.f32 %v4855, %v4969
        %v5002 = vadd.f32 %v4856, %v4972
        %v5003 = vadd.f32 %v4857, %v4974
        %v5004 = vadd.f32 %v4858, %v4977
        %v5005 = vadd.f32 %v4859, %v4979
        %v5006 = vadd.f32 %v4860, %v4982
        %v5007 = vadd.f32 %v4861, %v4984
        %v5008 = vadd.f32 %v4862, %v4987
        %v5009 = vadd.f32 %v4863, %v4989
        %v5010 = vadd.f32 %v4864, %v4992
        %v5011 = vadd.f32 %v4865, %v4994
        %v5012 = vld [vmem:[#allocation4 + $0x21] sm:$0xff]
        %v5013 = vld [vmem:[#allocation4 + $0x29] sm:$0xff]
        %v5014 = vld [vmem:[#allocation4 + $0x31] sm:$0xff]
        %v5015 = vld [vmem:[#allocation4 + $0x39] sm:$0xff]
        %v5016 = vld [vmem:[#allocation4 + $0x41] sm:$0xff]
        %v5017 = vld [vmem:[#allocation4 + $0x49] sm:$0xff]
        %v5018 = vld [vmem:[#allocation4 + $0x51] sm:$0xff]
        %v5019 = vld [vmem:[#allocation4 + $0x59] sm:$0xff]
        %v5020 = vld [vmem:[#allocation4 + $0x61] sm:$0xff]
        %v5021 = vld [vmem:[#allocation4 + $0x69] sm:$0xff]
        %v5022 = vld [vmem:[#allocation4 + $0x71] sm:$0xff]
        %v5023 = vld [vmem:[#allocation4 + $0x79] sm:$0xff]
        %v5024 = vld [vmem:[#allocation4 + $0x81] sm:$0xff]
        %v5025 = vld [vmem:[#allocation4 + $0x89] sm:$0xff]
        %v5026 = vld [vmem:[#allocation4 + $0x91] sm:$0xff]
        %v5027 = vld [vmem:[#allocation4 + $0x99] sm:$0xff]
        %v5028 = vpack.c.bf16 %v5013, %v5012
        %v5029 = vpack.c.bf16 %v5015, %v5014
        %v5030 = vpack.c.bf16 %v5017, %v5016
        %v5031 = vpack.c.bf16 %v5019, %v5018
        %v5032 = vpack.c.bf16 %v5021, %v5020
        %v5033 = vpack.c.bf16 %v5023, %v5022
        %v5034 = vpack.c.bf16 %v5025, %v5024
        %v5035 = vpack.c.bf16 %v5027, %v5026
        %s5036 = scalar_lea.vmem %s7, 224
        %v5037 = vld [vmem:[%s5036] sm:$0xf]
        %v5038 = vld [vmem:[%s5036 + $0x4] sm:$0xf]
        %v5039 = vld [vmem:[%s5036 + $0x8] sm:$0xf]
        %v5040 = vld [vmem:[%s5036 + $0xc] sm:$0xf]
        %v5041 = vld [vmem:[%s5036 + $0x10] sm:$0xf]
        %v5042 = vld [vmem:[%s5036 + $0x14] sm:$0xf]
        %v5043 = vld [vmem:[%s5036 + $0x18] sm:$0xf]
        %v5044 = vld [vmem:[%s5036 + $0x1c] sm:$0xf]
        %v5053 = vunpack.c.l.b16 %v5037
        %v5054 = vunpack.c.l.b16 %v5038
        %v5055 = vunpack.c.l.b16 %v5039
        %v5056 = vunpack.c.l.b16 %v5040
        %v5057 = vunpack.c.l.b16 %v5041
        %v5058 = vunpack.c.l.b16 %v5042
        %v5059 = vunpack.c.l.b16 %v5043
        %v5060 = vunpack.c.l.b16 %v5044
        %v5061 = vpack.c.b16 %v5054, %v5053
        %v5062 = vpack.c.b16 %v5056, %v5055
        %v5063 = vpack.c.b16 %v5058, %v5057
        %v5064 = vpack.c.b16 %v5060, %v5059
        %v5070 = vsel %vm4001, %v5028, 0
        %v5073 = vsel %vm4001, %v5029, 0
        %v5076 = vsel %vm4001, %v5030, 0
        %v5079 = vsel %vm4001, %v5031, 0
        %v5082 = vsel %vm4001, %v5032, 0
        %v5085 = vsel %vm4001, %v5033, 0
        %v5088 = vsel %vm4001, %v5034, 0
        %v5091 = vsel %vm4001, %v5035, 0
        %5093 = vmatpush.bf16.msra.mxu0 0
        %5094 = vmatpush.bf16.msra.mxu0 0
        %5095 = vmatpush.bf16.msra.mxu0 0
        %5096 = vmatpush.bf16.msra.mxu0 0
        %5097 = vmatpush.bf16.msra.mxu0 %v5064
        %5098 = vmatpush.bf16.msra.mxu0 %v5063
        %5099 = vmatpush.bf16.msra.mxu0 %v5062
        %5100 = vmatpush.bf16.msra.mxu0 %v5061
        %5101 = vmatmul.bf16.gmra.mxu0 %v5070
        %v5102 = vpop.f32.mrf.mxu0
        %v5103 = vadd.f32 0.0, %v5102
        %v5104 = vpop.f32.mrf.mxu0
        %v5105 = vadd.f32 0.0, %v5104
        %5106 = vmatmul.bf16.gmra.mxu0 %v5073
        %v5107 = vpop.f32.mrf.mxu0
        %v5108 = vadd.f32 0.0, %v5107
        %v5109 = vpop.f32.mrf.mxu0
        %v5110 = vadd.f32 0.0, %v5109
        %5111 = vmatmul.bf16.gmra.mxu0 %v5076
        %v5112 = vpop.f32.mrf.mxu0
        %v5113 = vadd.f32 0.0, %v5112
        %v5114 = vpop.f32.mrf.mxu0
        %v5115 = vadd.f32 0.0, %v5114
        %5116 = vmatmul.bf16.gmra.mxu0 %v5079
        %v5117 = vpop.f32.mrf.mxu0
        %v5118 = vadd.f32 0.0, %v5117
        %v5119 = vpop.f32.mrf.mxu0
        %v5120 = vadd.f32 0.0, %v5119
        %5121 = vmatmul.bf16.gmra.mxu0 %v5082
        %v5122 = vpop.f32.mrf.mxu0
        %v5123 = vadd.f32 0.0, %v5122
        %v5124 = vpop.f32.mrf.mxu0
        %v5125 = vadd.f32 0.0, %v5124
        %5126 = vmatmul.bf16.gmra.mxu0 %v5085
        %v5127 = vpop.f32.mrf.mxu0
        %v5128 = vadd.f32 0.0, %v5127
        %v5129 = vpop.f32.mrf.mxu0
        %v5130 = vadd.f32 0.0, %v5129
        %5131 = vmatmul.bf16.gmra.mxu0 %v5088
        %v5132 = vpop.f32.mrf.mxu0
        %v5133 = vadd.f32 0.0, %v5132
        %v5134 = vpop.f32.mrf.mxu0
        %v5135 = vadd.f32 0.0, %v5134
        %5136 = vmatmul.bf16.gmra.mxu0 %v5091
        %v5137 = vpop.f32.mrf.mxu0
        %v5138 = vadd.f32 0.0, %v5137
        %v5139 = vpop.f32.mrf.mxu0
        %v5140 = vadd.f32 0.0, %v5139
        %5141 = vdwg.mxu0
        %v5142 = vadd.f32 %v4996, %v5103
        %v5143 = vadd.f32 %v4997, %v5105
        %v5144 = vadd.f32 %v4998, %v5108
        %v5145 = vadd.f32 %v4999, %v5110
        %v5146 = vadd.f32 %v5000, %v5113
        %v5147 = vadd.f32 %v5001, %v5115
        %v5148 = vadd.f32 %v5002, %v5118
        %v5149 = vadd.f32 %v5003, %v5120
        %v5150 = vadd.f32 %v5004, %v5123
        %v5151 = vadd.f32 %v5005, %v5125
        %v5152 = vadd.f32 %v5006, %v5128
        %v5153 = vadd.f32 %v5007, %v5130
        %v5154 = vadd.f32 %v5008, %v5133
        %v5155 = vadd.f32 %v5009, %v5135
        %v5156 = vadd.f32 %v5010, %v5138
        %v5157 = vadd.f32 %v5011, %v5140
        %v5158 = vld [vmem:[#allocation4 + $0x22] sm:$0xff]
        %v5159 = vld [vmem:[#allocation4 + $0x2a] sm:$0xff]
        %v5160 = vld [vmem:[#allocation4 + $0x32] sm:$0xff]
        %v5161 = vld [vmem:[#allocation4 + $0x3a] sm:$0xff]
        %v5162 = vld [vmem:[#allocation4 + $0x42] sm:$0xff]
        %v5163 = vld [vmem:[#allocation4 + $0x4a] sm:$0xff]
        %v5164 = vld [vmem:[#allocation4 + $0x52] sm:$0xff]
        %v5165 = vld [vmem:[#allocation4 + $0x5a] sm:$0xff]
        %v5166 = vld [vmem:[#allocation4 + $0x62] sm:$0xff]
        %v5167 = vld [vmem:[#allocation4 + $0x6a] sm:$0xff]
        %v5168 = vld [vmem:[#allocation4 + $0x72] sm:$0xff]
        %v5169 = vld [vmem:[#allocation4 + $0x7a] sm:$0xff]
        %v5170 = vld [vmem:[#allocation4 + $0x82] sm:$0xff]
        %v5171 = vld [vmem:[#allocation4 + $0x8a] sm:$0xff]
        %v5172 = vld [vmem:[#allocation4 + $0x92] sm:$0xff]
        %v5173 = vld [vmem:[#allocation4 + $0x9a] sm:$0xff]
        %v5174 = vpack.c.bf16 %v5159, %v5158
        %v5175 = vpack.c.bf16 %v5161, %v5160
        %v5176 = vpack.c.bf16 %v5163, %v5162
        %v5177 = vpack.c.bf16 %v5165, %v5164
        %v5178 = vpack.c.bf16 %v5167, %v5166
        %v5179 = vpack.c.bf16 %v5169, %v5168
        %v5180 = vpack.c.bf16 %v5171, %v5170
        %v5181 = vpack.c.bf16 %v5173, %v5172
        %s5182 = scalar_lea.vmem %s7, 256
        %v5183 = vld [vmem:[%s5182] sm:$0xf]
        %v5184 = vld [vmem:[%s5182 + $0x4] sm:$0xf]
        %v5185 = vld [vmem:[%s5182 + $0x8] sm:$0xf]
        %v5186 = vld [vmem:[%s5182 + $0xc] sm:$0xf]
        %v5187 = vld [vmem:[%s5182 + $0x10] sm:$0xf]
        %v5188 = vld [vmem:[%s5182 + $0x14] sm:$0xf]
        %v5189 = vld [vmem:[%s5182 + $0x18] sm:$0xf]
        %v5190 = vld [vmem:[%s5182 + $0x1c] sm:$0xf]
        %v5199 = vunpack.c.l.b16 %v5183
        %v5200 = vunpack.c.l.b16 %v5184
        %v5201 = vunpack.c.l.b16 %v5185
        %v5202 = vunpack.c.l.b16 %v5186
        %v5203 = vunpack.c.l.b16 %v5187
        %v5204 = vunpack.c.l.b16 %v5188
        %v5205 = vunpack.c.l.b16 %v5189
        %v5206 = vunpack.c.l.b16 %v5190
        %v5207 = vpack.c.b16 %v5200, %v5199
        %v5208 = vpack.c.b16 %v5202, %v5201
        %v5209 = vpack.c.b16 %v5204, %v5203
        %v5210 = vpack.c.b16 %v5206, %v5205
        %v5216 = vsel %vm4001, %v5174, 0
        %v5219 = vsel %vm4001, %v5175, 0
        %v5222 = vsel %vm4001, %v5176, 0
        %v5225 = vsel %vm4001, %v5177, 0
        %v5228 = vsel %vm4001, %v5178, 0
        %v5231 = vsel %vm4001, %v5179, 0
        %v5234 = vsel %vm4001, %v5180, 0
        %v5237 = vsel %vm4001, %v5181, 0
        %5239 = vmatpush.bf16.msra.mxu0 0
        %5240 = vmatpush.bf16.msra.mxu0 0
        %5241 = vmatpush.bf16.msra.mxu0 0
        %5242 = vmatpush.bf16.msra.mxu0 0
        %5243 = vmatpush.bf16.msra.mxu0 %v5210
        %5244 = vmatpush.bf16.msra.mxu0 %v5209
        %5245 = vmatpush.bf16.msra.mxu0 %v5208
        %5246 = vmatpush.bf16.msra.mxu0 %v5207
        %5247 = vmatmul.bf16.gmra.mxu0 %v5216
        %v5248 = vpop.f32.mrf.mxu0
        %v5249 = vadd.f32 0.0, %v5248
        %v5250 = vpop.f32.mrf.mxu0
        %v5251 = vadd.f32 0.0, %v5250
        %5252 = vmatmul.bf16.gmra.mxu0 %v5219
        %v5253 = vpop.f32.mrf.mxu0
        %v5254 = vadd.f32 0.0, %v5253
        %v5255 = vpop.f32.mrf.mxu0
        %v5256 = vadd.f32 0.0, %v5255
        %5257 = vmatmul.bf16.gmra.mxu0 %v5222
        %v5258 = vpop.f32.mrf.mxu0
        %v5259 = vadd.f32 0.0, %v5258
        %v5260 = vpop.f32.mrf.mxu0
        %v5261 = vadd.f32 0.0, %v5260
        %5262 = vmatmul.bf16.gmra.mxu0 %v5225
        %v5263 = vpop.f32.mrf.mxu0
        %v5264 = vadd.f32 0.0, %v5263
        %v5265 = vpop.f32.mrf.mxu0
        %v5266 = vadd.f32 0.0, %v5265
        %5267 = vmatmul.bf16.gmra.mxu0 %v5228
        %v5268 = vpop.f32.mrf.mxu0
        %v5269 = vadd.f32 0.0, %v5268
        %v5270 = vpop.f32.mrf.mxu0
        %v5271 = vadd.f32 0.0, %v5270
        %5272 = vmatmul.bf16.gmra.mxu0 %v5231
        %v5273 = vpop.f32.mrf.mxu0
        %v5274 = vadd.f32 0.0, %v5273
        %v5275 = vpop.f32.mrf.mxu0
        %v5276 = vadd.f32 0.0, %v5275
        %5277 = vmatmul.bf16.gmra.mxu0 %v5234
        %v5278 = vpop.f32.mrf.mxu0
        %v5279 = vadd.f32 0.0, %v5278
        %v5280 = vpop.f32.mrf.mxu0
        %v5281 = vadd.f32 0.0, %v5280
        %5282 = vmatmul.bf16.gmra.mxu0 %v5237
        %v5283 = vpop.f32.mrf.mxu0
        %v5284 = vadd.f32 0.0, %v5283
        %v5285 = vpop.f32.mrf.mxu0
        %v5286 = vadd.f32 0.0, %v5285
        %5287 = vdwg.mxu0
        %v5288 = vadd.f32 %v5142, %v5249
        %v5289 = vadd.f32 %v5143, %v5251
        %v5290 = vadd.f32 %v5144, %v5254
        %v5291 = vadd.f32 %v5145, %v5256
        %v5292 = vadd.f32 %v5146, %v5259
        %v5293 = vadd.f32 %v5147, %v5261
        %v5294 = vadd.f32 %v5148, %v5264
        %v5295 = vadd.f32 %v5149, %v5266
        %v5296 = vadd.f32 %v5150, %v5269
        %v5297 = vadd.f32 %v5151, %v5271
        %v5298 = vadd.f32 %v5152, %v5274
        %v5299 = vadd.f32 %v5153, %v5276
        %v5300 = vadd.f32 %v5154, %v5279
        %v5301 = vadd.f32 %v5155, %v5281
        %v5302 = vadd.f32 %v5156, %v5284
        %v5303 = vadd.f32 %v5157, %v5286
        %v5304 = vld [vmem:[%s8] sm:$0x1]
        %v5306 = vperm.slane %v5304, 0
        %v5308 = vadd.f32 %v5288, %v5306
        %v5309 = vadd.f32 %v5289, %v5306
        %v5310 = vadd.f32 %v5290, %v5306
        %v5311 = vadd.f32 %v5291, %v5306
        %v5312 = vadd.f32 %v5292, %v5306
        %v5313 = vadd.f32 %v5293, %v5306
        %v5314 = vadd.f32 %v5294, %v5306
        %v5315 = vadd.f32 %v5295, %v5306
        %v5316 = vadd.f32 %v5296, %v5306
        %v5317 = vadd.f32 %v5297, %v5306
        %v5318 = vadd.f32 %v5298, %v5306
        %v5319 = vadd.f32 %v5299, %v5306
        %v5320 = vadd.f32 %v5300, %v5306
        %v5321 = vadd.f32 %v5301, %v5306
        %v5322 = vadd.f32 %v5302, %v5306
        %v5323 = vadd.f32 %v5303, %v5306
        %v5324 = vmax.f32 %v5308, 0.0
        %v5325 = vmax.f32 %v5309, 0.0
        %v5326 = vmax.f32 %v5310, 0.0
        %v5327 = vmax.f32 %v5311, 0.0
        %v5328 = vmax.f32 %v5312, 0.0
        %v5329 = vmax.f32 %v5313, 0.0
        %v5330 = vmax.f32 %v5314, 0.0
        %v5331 = vmax.f32 %v5315, 0.0
        %v5332 = vmax.f32 %v5316, 0.0
        %v5333 = vmax.f32 %v5317, 0.0
        %v5334 = vmax.f32 %v5318, 0.0
        %v5335 = vmax.f32 %v5319, 0.0
        %v5336 = vmax.f32 %v5320, 0.0
        %v5337 = vmax.f32 %v5321, 0.0
        %v5338 = vmax.f32 %v5322, 0.0
        %v5339 = vmax.f32 %v5323, 0.0
        %5340 = vst.msk [vmem:[#allocation5] sm:$0xff] %vm4001, %v5324
        %5341 = vst.msk [vmem:[#allocation5 + $0x8] sm:$0xff] %vm4001, %v5325
        %5342 = vst.msk [vmem:[#allocation5 + $0x10] sm:$0xff] %vm4001, %v5326
        %5343 = vst.msk [vmem:[#allocation5 + $0x18] sm:$0xff] %vm4001, %v5327
        %5344 = vst.msk [vmem:[#allocation5 + $0x20] sm:$0xff] %vm4001, %v5328
        %5345 = vst.msk [vmem:[#allocation5 + $0x28] sm:$0xff] %vm4001, %v5329
        %5346 = vst.msk [vmem:[#allocation5 + $0x30] sm:$0xff] %vm4001, %v5330
        %5347 = vst.msk [vmem:[#allocation5 + $0x38] sm:$0xff] %vm4001, %v5331
        %5348 = vst.msk [vmem:[#allocation5 + $0x40] sm:$0xff] %vm4001, %v5332
        %5349 = vst.msk [vmem:[#allocation5 + $0x48] sm:$0xff] %vm4001, %v5333
        %5350 = vst.msk [vmem:[#allocation5 + $0x50] sm:$0xff] %vm4001, %v5334
        %5351 = vst.msk [vmem:[#allocation5 + $0x58] sm:$0xff] %vm4001, %v5335
        %5352 = vst.msk [vmem:[#allocation5 + $0x60] sm:$0xff] %vm4001, %v5336
        %5353 = vst.msk [vmem:[#allocation5 + $0x68] sm:$0xff] %vm4001, %v5337
        %5354 = vst.msk [vmem:[#allocation5 + $0x70] sm:$0xff] %vm4001, %v5338
        %5355 = vst.msk [vmem:[#allocation5 + $0x78] sm:$0xff] %vm4001, %v5339
        %v5356 = vld [vmem:[#allocation5] sm:$0xff]
        %v5357 = vld [vmem:[#allocation5 + $0x8] sm:$0xff]
        %v5358 = vld [vmem:[#allocation5 + $0x10] sm:$0xff]
        %v5359 = vld [vmem:[#allocation5 + $0x18] sm:$0xff]
        %v5360 = vld [vmem:[#allocation5 + $0x20] sm:$0xff]
        %v5361 = vld [vmem:[#allocation5 + $0x28] sm:$0xff]
        %v5362 = vld [vmem:[#allocation5 + $0x30] sm:$0xff]
        %v5363 = vld [vmem:[#allocation5 + $0x38] sm:$0xff]
        %v5364 = vld [vmem:[#allocation5 + $0x40] sm:$0xff]
        %v5365 = vld [vmem:[#allocation5 + $0x48] sm:$0xff]
        %v5366 = vld [vmem:[#allocation5 + $0x50] sm:$0xff]
        %v5367 = vld [vmem:[#allocation5 + $0x58] sm:$0xff]
        %v5368 = vld [vmem:[#allocation5 + $0x60] sm:$0xff]
        %v5369 = vld [vmem:[#allocation5 + $0x68] sm:$0xff]
        %v5370 = vld [vmem:[#allocation5 + $0x70] sm:$0xff]
        %v5371 = vld [vmem:[#allocation5 + $0x78] sm:$0xff]
        %v5372 = vld [vmem:[%s9] sm:$0xf]
        %v5373 = vld [vmem:[%s9 + $0x4] sm:$0xf]
        %v5374 = vld [vmem:[%s9 + $0x8] sm:$0xf]
        %v5375 = vld [vmem:[%s9 + $0xc] sm:$0xf]
        %v5376 = vld [vmem:[%s9 + $0x10] sm:$0xf]
        %v5377 = vld [vmem:[%s9 + $0x14] sm:$0xf]
        %v5378 = vld [vmem:[%s9 + $0x18] sm:$0xf]
        %v5379 = vld [vmem:[%s9 + $0x1c] sm:$0xf]
        %v5380 = vld [vmem:[%s9 + $0x20] sm:$0xf]
        %v5381 = vld [vmem:[%s9 + $0x24] sm:$0xf]
        %v5382 = vld [vmem:[%s9 + $0x28] sm:$0xf]
        %v5383 = vld [vmem:[%s9 + $0x2c] sm:$0xf]
        %v5384 = vld [vmem:[%s9 + $0x30] sm:$0xf]
        %v5385 = vld [vmem:[%s9 + $0x34] sm:$0xf]
        %v5386 = vld [vmem:[%s9 + $0x38] sm:$0xf]
        %v5387 = vld [vmem:[%s9 + $0x3c] sm:$0xf]
        %v5388 = vunpack.c.l.bf16 %v5372
        %v5389 = vunpack.c.l.bf16 %v5373
        %v5390 = vunpack.c.l.bf16 %v5374
        %v5391 = vunpack.c.l.bf16 %v5375
        %v5392 = vunpack.c.l.bf16 %v5376
        %v5393 = vunpack.c.l.bf16 %v5377
        %v5394 = vunpack.c.l.bf16 %v5378
        %v5395 = vunpack.c.l.bf16 %v5379
        %v5396 = vunpack.c.l.bf16 %v5380
        %v5397 = vunpack.c.l.bf16 %v5381
        %v5398 = vunpack.c.l.bf16 %v5382
        %v5399 = vunpack.c.l.bf16 %v5383
        %v5400 = vunpack.c.l.bf16 %v5384
        %v5401 = vunpack.c.l.bf16 %v5385
        %v5402 = vunpack.c.l.bf16 %v5386
        %v5403 = vunpack.c.l.bf16 %v5387
        %v5404 = vmul.f32 %v5356, %v5388
        %v5405 = vmul.f32 %v5357, %v5389
        %v5406 = vmul.f32 %v5358, %v5390
        %v5407 = vmul.f32 %v5359, %v5391
        %v5408 = vmul.f32 %v5360, %v5392
        %v5409 = vmul.f32 %v5361, %v5393
        %v5410 = vmul.f32 %v5362, %v5394
        %v5411 = vmul.f32 %v5363, %v5395
        %v5412 = vmul.f32 %v5364, %v5396
        %v5413 = vmul.f32 %v5365, %v5397
        %v5414 = vmul.f32 %v5366, %v5398
        %v5415 = vmul.f32 %v5367, %v5399
        %v5416 = vmul.f32 %v5368, %v5400
        %v5417 = vmul.f32 %v5369, %v5401
        %v5418 = vmul.f32 %v5370, %v5402
        %v5419 = vmul.f32 %v5371, %v5403
        %v5420 = vsel %vm4001, %v5404, 0.0
        %5421 = vadd.xlane.f32.xlu0 %v5420
        %v5422 = vpop.xlane.xlu0 %5421
        %v5423 = vsel %vm4001, %v5405, 0.0
        %5424 = vadd.xlane.f32.xlu0 %v5423
        %v5425 = vpop.xlane.xlu0 %5424
        %v5426 = vsel %vm4001, %v5406, 0.0
        %5427 = vadd.xlane.f32.xlu0 %v5426
        %v5428 = vpop.xlane.xlu0 %5427
        %v5429 = vsel %vm4001, %v5407, 0.0
        %5430 = vadd.xlane.f32.xlu0 %v5429
        %v5431 = vpop.xlane.xlu0 %5430
        %v5432 = vsel %vm4001, %v5408, 0.0
        %5433 = vadd.xlane.f32.xlu0 %v5432
        %v5434 = vpop.xlane.xlu0 %5433
        %v5435 = vsel %vm4001, %v5409, 0.0
        %5436 = vadd.xlane.f32.xlu0 %v5435
        %v5437 = vpop.xlane.xlu0 %5436
        %v5438 = vsel %vm4001, %v5410, 0.0
        %5439 = vadd.xlane.f32.xlu0 %v5438
        %v5440 = vpop.xlane.xlu0 %5439
        %v5441 = vsel %vm4001, %v5411, 0.0
        %5442 = vadd.xlane.f32.xlu0 %v5441
        %v5443 = vpop.xlane.xlu0 %5442
        %v5444 = vsel %vm4001, %v5412, 0.0
        %5445 = vadd.xlane.f32.xlu0 %v5444
        %v5446 = vpop.xlane.xlu0 %5445
        %v5447 = vsel %vm4001, %v5413, 0.0
        %5448 = vadd.xlane.f32.xlu0 %v5447
        %v5449 = vpop.xlane.xlu0 %5448
        %v5450 = vsel %vm4001, %v5414, 0.0
        %5451 = vadd.xlane.f32.xlu0 %v5450
        %v5452 = vpop.xlane.xlu0 %5451
        %v5453 = vsel %vm4001, %v5415, 0.0
        %5454 = vadd.xlane.f32.xlu0 %v5453
        %v5455 = vpop.xlane.xlu0 %5454
        %v5456 = vsel %vm4001, %v5416, 0.0
        %5457 = vadd.xlane.f32.xlu0 %v5456
        %v5458 = vpop.xlane.xlu0 %5457
        %v5459 = vsel %vm4001, %v5417, 0.0
        %5460 = vadd.xlane.f32.xlu0 %v5459
        %v5461 = vpop.xlane.xlu0 %5460
        %v5462 = vsel %vm4001, %v5418, 0.0
        %5463 = vadd.xlane.f32.xlu0 %v5462
        %v5464 = vpop.xlane.xlu0 %5463
        %v5465 = vsel %vm4001, %v5419, 0.0
        %5466 = vadd.xlane.f32.xlu0 %v5465
        %v5467 = vpop.xlane.xlu0 %5466
        %v5468 = vadd.f32 %v5422, %v5425
        %v5469 = vadd.f32 %v5468, %v5428
        %v5470 = vadd.f32 %v5469, %v5431
        %v5471 = vadd.f32 %v5470, %v5434
        %v5472 = vadd.f32 %v5471, %v5437
        %v5473 = vadd.f32 %v5472, %v5440
        %v5474 = vadd.f32 %v5473, %v5443
        %v5475 = vadd.f32 %v5474, %v5446
        %v5476 = vadd.f32 %v5475, %v5449
        %v5477 = vadd.f32 %v5476, %v5452
        %v5478 = vadd.f32 %v5477, %v5455
        %v5479 = vadd.f32 %v5478, %v5458
        %v5480 = vadd.f32 %v5479, %v5461
        %v5481 = vadd.f32 %v5480, %v5464
        %v5482 = vadd.f32 %v5481, %v5467
        %v5483 = vrot.slane %v5482, 4
        %v5484 = vadd.f32 %v5482, %v5483
        %v5485 = vrot.slane %v5484, 2
        %v5486 = vadd.f32 %v5484, %v5485
        %v5487 = vrot.slane %v5486, 1
        %v5488 = vadd.f32 %v5486, %v5487
        %v5489 = vld [vmem:[%s10] sm:$0x1]
        %v5490 = vadd.f32 %v5488, %v5489
        %vm5491 = vcmask 0
        %5492 = vst.msk [vmem:[%s378] sm:$0x1] %vm5491, %v5490
        %s5493 = scalar_lea.vmem %s9, 64
        %v5494 = vld [vmem:[%s5493] sm:$0xf]
        %v5495 = vld [vmem:[%s5493 + $0x4] sm:$0xf]
        %v5496 = vld [vmem:[%s5493 + $0x8] sm:$0xf]
        %v5497 = vld [vmem:[%s5493 + $0xc] sm:$0xf]
        %v5498 = vld [vmem:[%s5493 + $0x10] sm:$0xf]
        %v5499 = vld [vmem:[%s5493 + $0x14] sm:$0xf]
        %v5500 = vld [vmem:[%s5493 + $0x18] sm:$0xf]
        %v5501 = vld [vmem:[%s5493 + $0x1c] sm:$0xf]
        %v5502 = vld [vmem:[%s5493 + $0x20] sm:$0xf]
        %v5503 = vld [vmem:[%s5493 + $0x24] sm:$0xf]
        %v5504 = vld [vmem:[%s5493 + $0x28] sm:$0xf]
        %v5505 = vld [vmem:[%s5493 + $0x2c] sm:$0xf]
        %v5506 = vld [vmem:[%s5493 + $0x30] sm:$0xf]
        %v5507 = vld [vmem:[%s5493 + $0x34] sm:$0xf]
        %v5508 = vld [vmem:[%s5493 + $0x38] sm:$0xf]
        %v5509 = vld [vmem:[%s5493 + $0x3c] sm:$0xf]
        %v5510 = vunpack.c.l.bf16 %v5494
        %v5511 = vunpack.c.l.bf16 %v5495
        %v5512 = vunpack.c.l.bf16 %v5496
        %v5513 = vunpack.c.l.bf16 %v5497
        %v5514 = vunpack.c.l.bf16 %v5498
        %v5515 = vunpack.c.l.bf16 %v5499
        %v5516 = vunpack.c.l.bf16 %v5500
        %v5517 = vunpack.c.l.bf16 %v5501
        %v5518 = vunpack.c.l.bf16 %v5502
        %v5519 = vunpack.c.l.bf16 %v5503
        %v5520 = vunpack.c.l.bf16 %v5504
        %v5521 = vunpack.c.l.bf16 %v5505
        %v5522 = vunpack.c.l.bf16 %v5506
        %v5523 = vunpack.c.l.bf16 %v5507
        %v5524 = vunpack.c.l.bf16 %v5508
        %v5525 = vunpack.c.l.bf16 %v5509
        %v5526 = vmul.f32 %v5356, %v5510
        %v5527 = vmul.f32 %v5357, %v5511
        %v5528 = vmul.f32 %v5358, %v5512
        %v5529 = vmul.f32 %v5359, %v5513
        %v5530 = vmul.f32 %v5360, %v5514
        %v5531 = vmul.f32 %v5361, %v5515
        %v5532 = vmul.f32 %v5362, %v5516
        %v5533 = vmul.f32 %v5363, %v5517
        %v5534 = vmul.f32 %v5364, %v5518
        %v5535 = vmul.f32 %v5365, %v5519
        %v5536 = vmul.f32 %v5366, %v5520
        %v5537 = vmul.f32 %v5367, %v5521
        %v5538 = vmul.f32 %v5368, %v5522
        %v5539 = vmul.f32 %v5369, %v5523
        %v5540 = vmul.f32 %v5370, %v5524
        %v5541 = vmul.f32 %v5371, %v5525
        %v5542 = vsel %vm4001, %v5526, 0.0
        %5543 = vadd.xlane.f32.xlu0 %v5542
        %v5544 = vpop.xlane.xlu0 %5543
        %v5545 = vsel %vm4001, %v5527, 0.0
        %5546 = vadd.xlane.f32.xlu0 %v5545
        %v5547 = vpop.xlane.xlu0 %5546
        %v5548 = vsel %vm4001, %v5528, 0.0
        %5549 = vadd.xlane.f32.xlu0 %v5548
        %v5550 = vpop.xlane.xlu0 %5549
        %v5551 = vsel %vm4001, %v5529, 0.0
        %5552 = vadd.xlane.f32.xlu0 %v5551
        %v5553 = vpop.xlane.xlu0 %5552
        %v5554 = vsel %vm4001, %v5530, 0.0
        %5555 = vadd.xlane.f32.xlu0 %v5554
        %v5556 = vpop.xlane.xlu0 %5555
        %v5557 = vsel %vm4001, %v5531, 0.0
        %5558 = vadd.xlane.f32.xlu0 %v5557
        %v5559 = vpop.xlane.xlu0 %5558
        %v5560 = vsel %vm4001, %v5532, 0.0
        %5561 = vadd.xlane.f32.xlu0 %v5560
        %v5562 = vpop.xlane.xlu0 %5561
        %v5563 = vsel %vm4001, %v5533, 0.0
        %5564 = vadd.xlane.f32.xlu0 %v5563
        %v5565 = vpop.xlane.xlu0 %5564
        %v5566 = vsel %vm4001, %v5534, 0.0
        %5567 = vadd.xlane.f32.xlu0 %v5566
        %v5568 = vpop.xlane.xlu0 %5567
        %v5569 = vsel %vm4001, %v5535, 0.0
        %5570 = vadd.xlane.f32.xlu0 %v5569
        %v5571 = vpop.xlane.xlu0 %5570
        %v5572 = vsel %vm4001, %v5536, 0.0
        %5573 = vadd.xlane.f32.xlu0 %v5572
        %v5574 = vpop.xlane.xlu0 %5573
        %v5575 = vsel %vm4001, %v5537, 0.0
        %5576 = vadd.xlane.f32.xlu0 %v5575
        %v5577 = vpop.xlane.xlu0 %5576
        %v5578 = vsel %vm4001, %v5538, 0.0
        %5579 = vadd.xlane.f32.xlu0 %v5578
        %v5580 = vpop.xlane.xlu0 %5579
        %v5581 = vsel %vm4001, %v5539, 0.0
        %5582 = vadd.xlane.f32.xlu0 %v5581
        %v5583 = vpop.xlane.xlu0 %5582
        %v5584 = vsel %vm4001, %v5540, 0.0
        %5585 = vadd.xlane.f32.xlu0 %v5584
        %v5586 = vpop.xlane.xlu0 %5585
        %v5587 = vsel %vm4001, %v5541, 0.0
        %5588 = vadd.xlane.f32.xlu0 %v5587
        %v5589 = vpop.xlane.xlu0 %5588
        %v5590 = vadd.f32 %v5544, %v5547
        %v5591 = vadd.f32 %v5590, %v5550
        %v5592 = vadd.f32 %v5591, %v5553
        %v5593 = vadd.f32 %v5592, %v5556
        %v5594 = vadd.f32 %v5593, %v5559
        %v5595 = vadd.f32 %v5594, %v5562
        %v5596 = vadd.f32 %v5595, %v5565
        %v5597 = vadd.f32 %v5596, %v5568
        %v5598 = vadd.f32 %v5597, %v5571
        %v5599 = vadd.f32 %v5598, %v5574
        %v5600 = vadd.f32 %v5599, %v5577
        %v5601 = vadd.f32 %v5600, %v5580
        %v5602 = vadd.f32 %v5601, %v5583
        %v5603 = vadd.f32 %v5602, %v5586
        %v5604 = vadd.f32 %v5603, %v5589
        %v5605 = vrot.slane %v5604, 4
        %v5606 = vadd.f32 %v5604, %v5605
        %v5607 = vrot.slane %v5606, 2
        %v5608 = vadd.f32 %v5606, %v5607
        %v5609 = vrot.slane %v5608, 1
        %v5610 = vadd.f32 %v5608, %v5609
        %v5611 = vld [vmem:[%s10] sm:$0x1]
        %v5612 = vadd.f32 %v5610, %v5611
        %vm5613 = vcmask 8200
        %5614 = vst.msk [vmem:[%s378] sm:$0x1] %vm5613, %v5612
        %s5615 = scalar_lea.vmem %s9, 128
        %v5616 = vld [vmem:[%s5615] sm:$0xf]
        %v5617 = vld [vmem:[%s5615 + $0x4] sm:$0xf]
        %v5618 = vld [vmem:[%s5615 + $0x8] sm:$0xf]
        %v5619 = vld [vmem:[%s5615 + $0xc] sm:$0xf]
        %v5620 = vld [vmem:[%s5615 + $0x10] sm:$0xf]
        %v5621 = vld [vmem:[%s5615 + $0x14] sm:$0xf]
        %v5622 = vld [vmem:[%s5615 + $0x18] sm:$0xf]
        %v5623 = vld [vmem:[%s5615 + $0x1c] sm:$0xf]
        %v5624 = vld [vmem:[%s5615 + $0x20] sm:$0xf]
        %v5625 = vld [vmem:[%s5615 + $0x24] sm:$0xf]
        %v5626 = vld [vmem:[%s5615 + $0x28] sm:$0xf]
        %v5627 = vld [vmem:[%s5615 + $0x2c] sm:$0xf]
        %v5628 = vld [vmem:[%s5615 + $0x30] sm:$0xf]
        %v5629 = vld [vmem:[%s5615 + $0x34] sm:$0xf]
        %v5630 = vld [vmem:[%s5615 + $0x38] sm:$0xf]
        %v5631 = vld [vmem:[%s5615 + $0x3c] sm:$0xf]
        %v5632 = vunpack.c.l.bf16 %v5616
        %v5633 = vunpack.c.l.bf16 %v5617
        %v5634 = vunpack.c.l.bf16 %v5618
        %v5635 = vunpack.c.l.bf16 %v5619
        %v5636 = vunpack.c.l.bf16 %v5620
        %v5637 = vunpack.c.l.bf16 %v5621
        %v5638 = vunpack.c.l.bf16 %v5622
        %v5639 = vunpack.c.l.bf16 %v5623
        %v5640 = vunpack.c.l.bf16 %v5624
        %v5641 = vunpack.c.l.bf16 %v5625
        %v5642 = vunpack.c.l.bf16 %v5626
        %v5643 = vunpack.c.l.bf16 %v5627
        %v5644 = vunpack.c.l.bf16 %v5628
        %v5645 = vunpack.c.l.bf16 %v5629
        %v5646 = vunpack.c.l.bf16 %v5630
        %v5647 = vunpack.c.l.bf16 %v5631
        %v5648 = vmul.f32 %v5356, %v5632
        %v5649 = vmul.f32 %v5357, %v5633
        %v5650 = vmul.f32 %v5358, %v5634
        %v5651 = vmul.f32 %v5359, %v5635
        %v5652 = vmul.f32 %v5360, %v5636
        %v5653 = vmul.f32 %v5361, %v5637
        %v5654 = vmul.f32 %v5362, %v5638
        %v5655 = vmul.f32 %v5363, %v5639
        %v5656 = vmul.f32 %v5364, %v5640
        %v5657 = vmul.f32 %v5365, %v5641
        %v5658 = vmul.f32 %v5366, %v5642
        %v5659 = vmul.f32 %v5367, %v5643
        %v5660 = vmul.f32 %v5368, %v5644
        %v5661 = vmul.f32 %v5369, %v5645
        %v5662 = vmul.f32 %v5370, %v5646
        %v5663 = vmul.f32 %v5371, %v5647
        %v5664 = vsel %vm4001, %v5648, 0.0
        %5665 = vadd.xlane.f32.xlu0 %v5664
        %v5666 = vpop.xlane.xlu0 %5665
        %v5667 = vsel %vm4001, %v5649, 0.0
        %5668 = vadd.xlane.f32.xlu0 %v5667
        %v5669 = vpop.xlane.xlu0 %5668
        %v5670 = vsel %vm4001, %v5650, 0.0
        %5671 = vadd.xlane.f32.xlu0 %v5670
        %v5672 = vpop.xlane.xlu0 %5671
        %v5673 = vsel %vm4001, %v5651, 0.0
        %5674 = vadd.xlane.f32.xlu0 %v5673
        %v5675 = vpop.xlane.xlu0 %5674
        %v5676 = vsel %vm4001, %v5652, 0.0
        %5677 = vadd.xlane.f32.xlu0 %v5676
        %v5678 = vpop.xlane.xlu0 %5677
        %v5679 = vsel %vm4001, %v5653, 0.0
        %5680 = vadd.xlane.f32.xlu0 %v5679
        %v5681 = vpop.xlane.xlu0 %5680
        %v5682 = vsel %vm4001, %v5654, 0.0
        %5683 = vadd.xlane.f32.xlu0 %v5682
        %v5684 = vpop.xlane.xlu0 %5683
        %v5685 = vsel %vm4001, %v5655, 0.0
        %5686 = vadd.xlane.f32.xlu0 %v5685
        %v5687 = vpop.xlane.xlu0 %5686
        %v5688 = vsel %vm4001, %v5656, 0.0
        %5689 = vadd.xlane.f32.xlu0 %v5688
        %v5690 = vpop.xlane.xlu0 %5689
        %v5691 = vsel %vm4001, %v5657, 0.0
        %5692 = vadd.xlane.f32.xlu0 %v5691
        %v5693 = vpop.xlane.xlu0 %5692
        %v5694 = vsel %vm4001, %v5658, 0.0
        %5695 = vadd.xlane.f32.xlu0 %v5694
        %v5696 = vpop.xlane.xlu0 %5695
        %v5697 = vsel %vm4001, %v5659, 0.0
        %5698 = vadd.xlane.f32.xlu0 %v5697
        %v5699 = vpop.xlane.xlu0 %5698
        %v5700 = vsel %vm4001, %v5660, 0.0
        %5701 = vadd.xlane.f32.xlu0 %v5700
        %v5702 = vpop.xlane.xlu0 %5701
        %v5703 = vsel %vm4001, %v5661, 0.0
        %5704 = vadd.xlane.f32.xlu0 %v5703
        %v5705 = vpop.xlane.xlu0 %5704
        %v5706 = vsel %vm4001, %v5662, 0.0
        %5707 = vadd.xlane.f32.xlu0 %v5706
        %v5708 = vpop.xlane.xlu0 %5707
        %v5709 = vsel %vm4001, %v5663, 0.0
        %5710 = vadd.xlane.f32.xlu0 %v5709
        %v5711 = vpop.xlane.xlu0 %5710
        %v5712 = vadd.f32 %v5666, %v5669
        %v5713 = vadd.f32 %v5712, %v5672
        %v5714 = vadd.f32 %v5713, %v5675
        %v5715 = vadd.f32 %v5714, %v5678
        %v5716 = vadd.f32 %v5715, %v5681
        %v5717 = vadd.f32 %v5716, %v5684
        %v5718 = vadd.f32 %v5717, %v5687
        %v5719 = vadd.f32 %v5718, %v5690
        %v5720 = vadd.f32 %v5719, %v5693
        %v5721 = vadd.f32 %v5720, %v5696
        %v5722 = vadd.f32 %v5721, %v5699
        %v5723 = vadd.f32 %v5722, %v5702
        %v5724 = vadd.f32 %v5723, %v5705
        %v5725 = vadd.f32 %v5724, %v5708
        %v5726 = vadd.f32 %v5725, %v5711
        %v5727 = vrot.slane %v5726, 4
        %v5728 = vadd.f32 %v5726, %v5727
        %v5729 = vrot.slane %v5728, 2
        %v5730 = vadd.f32 %v5728, %v5729
        %v5731 = vrot.slane %v5730, 1
        %v5732 = vadd.f32 %v5730, %v5731
        %v5733 = vld [vmem:[%s10] sm:$0x1]
        %v5734 = vadd.f32 %v5732, %v5733
        %vm5735 = vcmask 16400
        %5736 = vst.msk [vmem:[%s378] sm:$0x1] %vm5735, %v5734
        %s5737 = sand.u32 %s269, 1
        %s5738 = scalar_lea.sflag [#allocation7], %s5737
        %s5739 = sand.u32 %s269, 1
        %s5740 = scalar_lea.vmem [#allocation6], %s5739
        // Predicated region
        $region65: #{encoder_forward.1} parent=63 // pred_check
          %p5741 = pneg %p279
        $region66: #{encoder_forward.1} parent=63 // pred_check_branch
          %5743 = sbr.rel (%p5741) target = $region68
        $region67: #{encoder_forward.1} parent=63 // pred_region
          %5745 = vsyncadd %s5738, 0
          %s5746 = scalar_lea.hbm %s11, %s25
          %s5748 = sshll.u32 %s5740, 4
          %s5749 = int_to_ptr.vmem [resolvable:$true] %s5748
          %s5750 = sshll.u32 %s5746, 4
          %s5751 = int_to_ptr.hbm [resolvable:$true] %s5750
          %5753 = dma.vmem_to_hbm [thread:$0]  %s5749, 16, %s5751, %s5738
        $region68: #{encoder_forward.1} parent=63 // pred_fallthru
          _
      $region64: #{encoder_forward.1} parent=5 // pred_fallthru
        _
      %p5754 = scmp.le.s32.totalorder 2, %s20
      // Predicated region
      $region69: #{encoder_forward.1} parent=5 // pred_check
        %p5755 = pneg %p5754
      $region70: #{encoder_forward.1} parent=5 // pred_check_branch
        %5757 = sbr.rel (%p5755) target = $region72
      $region71: #{encoder_forward.1} parent=5 // pred_region
        %s5758 = ssub.s32 %s20, 2
        // Predicated region
        $region73: #{encoder_forward.1} parent=71 // pred_check
          %p5759 = pneg %p285
        $region74: #{encoder_forward.1} parent=71 // pred_check_branch
          %5761 = sbr.rel (%p5759) target = $region76
        $region75: #{encoder_forward.1} parent=71 // pred_region
          %s5762 = sand.u32 %s270, 1
          %s5763 = scalar_lea.sflag [#allocation7], %s5762
          %s5764 = sand.u32 %s270, 1
          %s5765 = scalar_lea.vmem [#allocation6], %s5764
          %5767 = dma.done %s5763, 16
        $region76: #{encoder_forward.1} parent=71 // pred_fallthru
          _
      $region72: #{encoder_forward.1} parent=5 // pred_fallthru
        _
    $region6: #{encoder_forward.1} parent=1 // loop_footer
      %s24 = sadd.s32 1, %s20
    $region7: #{encoder_forward.1} parent=1 // loop_footer_branch
      %19 = sbr.rel target = $region3
    $region8: #{encoder_forward.1} parent=1 // loop_exit
      _
    %5768 = vsyncpa [#allocation7], 1
    %s5769 = scalar_lea.sflag [#allocation7], 1
    %5770 = vsyncpa %s5769, 1

</llo_original>
